<compile_context>
chip_gen: v5e
topology: v5e:2x2
jax: 0.10.0
libtpu: 0.0.40
codegen_flags: <defaults>
</compile_context>

<pallas_src>
import jax
import jax.numpy as jnp
from jax import lax
from jax.experimental import pallas as pl
from jax.experimental.pallas import tpu as pltpu

# Sentinel index for padded edges: never matches any iota column / row.
_SENTINEL = 1 << 30


# ---------------------------------------------------------------------------
# Kernel 1: edge representations + per-head attention scalars, tiled over E.
# ---------------------------------------------------------------------------
def _edge_kernel(src_ref, dst_ref, x_ref, ea_ref, wqk_ref, bqk_ref,
                 wewb_ref, bewb_ref, asel_ref, erep_ref, attn_ref, qk_scr):
    N = x_ref.shape[0]
    HD = erep_ref.shape[-1]
    TE = ea_ref.shape[0]

    # Node projections Q‖K computed once (first grid step); kept resident in
    # VMEM as a stacked [2N, HD] bf16 gather table (rows 0:N = Q, N:2N = K).
    @pl.when(pl.program_id(0) == 0)
    def _init():
        proj = jnp.dot(x_ref[...], wqk_ref[...],
                       preferred_element_type=jnp.float32) + bqk_ref[...]
        qk_scr[:N, :] = proj[:, :HD].astype(jnp.bfloat16)
        qk_scr[N:, :] = proj[:, HD:].astype(jnp.bfloat16)

    # Fused edge projections: E_w ‖ E_b  -> [TE, 2*HD] (lane-dense).
    ewb = jnp.dot(ea_ref[...], wewb_ref[...],
                  preferred_element_type=jnp.float32) + bewb_ref[...]
    ew = ewb[:, :HD]
    eb = ewb[:, HD:]

    # Q[src] + K[dst] in a single MXU contraction: "two-hot" [TE, 2N] selector
    # hits row src (Q part) and row N+dst (K part) of the stacked table.
    src = src_ref[...]                                        # [TE, 1] int32
    dst = dst_ref[...]                                        # [TE, 1] int32
    col = lax.broadcasted_iota(jnp.int32, (TE, 2 * N), 1)
    hit = jnp.logical_or(col == src, col == dst + N)
    two_hot = jnp.where(hit, 1.0, 0.0).astype(jnp.bfloat16)
    s = jnp.dot(two_hot, qk_scr[...], preferred_element_type=jnp.float32)

    s = s * ew
    s = jnp.sqrt(jnp.maximum(s, 0.0)) - jnp.sqrt(jnp.maximum(-s, 0.0))
    s = jnp.maximum(s + eb, 0.0)                              # ReLU -> edge repr
    erep_ref[...] = s
    # per-head attention scalar: block-diagonal contraction with A -> [TE, H]
    attn_ref[...] = jnp.dot(s, asel_ref[...],
                            preferred_element_type=jnp.float32)


# ---------------------------------------------------------------------------
# Kernel 2: softmax-weighted messages + fused destination scatter, tiled over E.
# ---------------------------------------------------------------------------
def _node_kernel(src_ref, dstc_ref, dstr_ref, erep_ref, attn_ref, x_ref,
                 wv_ref, bv_ref, ml_ref, expand_ref, ev_ref,
                 node_ref, v_scr, acc_scr):
    N = x_ref.shape[0]
    HD = erep_ref.shape[-1]
    TE = erep_ref.shape[0]
    H = attn_ref.shape[-1]

    @pl.when(pl.program_id(0) == 0)
    def _init():
        v = jnp.dot(x_ref[...], wv_ref[...],
                    preferred_element_type=jnp.float32) + bv_ref[...]
        v_scr[...] = v.astype(jnp.bfloat16)
        acc_scr[...] = jnp.zeros_like(acc_scr)

    src = src_ref[...]                                        # [TE, 1]
    dstc = dstc_ref[...]                                      # [TE, 1]
    dstr = dstr_ref[...]                                      # [1, TE]
    col_n = lax.broadcasted_iota(jnp.int32, (TE, N), 1)
    row_n = lax.broadcasted_iota(jnp.int32, (N, TE), 0)
    src_oh = jnp.where(col_n == src, 1.0, 0.0).astype(jnp.bfloat16)    # [TE,N]
    dst_oh = jnp.where(col_n == dstc, 1.0, 0.0)                        # [TE,N] f32
    dst_ohT = jnp.where(row_n == dstr, 1.0, 0.0).astype(jnp.bfloat16)  # [N,TE]

    s = erep_ref[...]                                         # [TE, HD] f32
    attn = attn_ref[...]                                      # [TE, H]  f32

    # Gather per-destination softmax constants (max ‖ sum) in one small matmul.
    mlg = jnp.dot(dst_oh, ml_ref[...], preferred_element_type=jnp.float32)
    m_g = mlg[:, :H]
    l_g = mlg[:, H:]
    ex = jnp.exp(attn - m_g)                                  # f32, <= 1
    alpha = jnp.where(l_g > 0.0, ex / (l_g + 1e-16), 0.0)     # [TE, H]
    alpha_b = jnp.dot(alpha, expand_ref[...],
                      preferred_element_type=jnp.float32)     # [TE, HD]

    v_i = jnp.dot(src_oh, v_scr[...], preferred_element_type=jnp.float32)
    # Fused messages: (alpha*V[src]) ‖ (alpha*edge_rep) -> one [TE, 2*HD] slab,
    # scattered into the resident node accumulator with a single contraction.
    msg = jnp.concatenate([alpha_b * v_i, alpha_b * s], axis=1)
    acc_scr[...] += jnp.dot(dst_ohT, msg.astype(jnp.bfloat16),
                            preferred_element_type=jnp.float32)

    @pl.when(pl.program_id(0) == pl.num_programs(0) - 1)
    def _finish():
        acc = acc_scr[...]
        w_eij = jnp.dot(acc[:, HD:].astype(jnp.bfloat16), ev_ref[...],
                        preferred_element_type=jnp.float32)
        node_ref[...] = acc[:, :HD] + w_eij


# ---------------------------------------------------------------------------
# Wrapper
# ---------------------------------------------------------------------------
def grit_layer(x, edge_attr, src, dst, params, num_heads, out_channels,
               *, block_e=128):
    """Forward of MultiHeadAttentionLayerGrit.

    Returns (node_representations [N, H, D], edge_representations [E, H*D]).
    """
    f32, bf16 = jnp.float32, jnp.bfloat16
    N, C = x.shape
    H, D = num_heads, out_channels
    HD = H * D
    E0 = src.shape[0]

    # -- pad E to a multiple of block_e with inert edges -----------------------
    E = ((E0 + block_e - 1) // block_e) * block_e
    pad = E - E0
    ea_p = jnp.pad(edge_attr, ((0, pad), (0, 0)))
    src_p = jnp.concatenate([src.astype(jnp.int32),
                             jnp.full((pad,), _SENTINEL, jnp.int32)])
    dst_p = jnp.concatenate([dst.astype(jnp.int32),
                             jnp.full((pad,), _SENTINEL, jnp.int32)])
    src_col = src_p[:, None]                     # [E, 1]
    dst_col = dst_p[:, None]                     # [E, 1]
    dst_row = dst_p[None, :]                     # [1, E]

    # -- packed / fused parameters ---------------------------------------------
    wqk = jnp.concatenate([params['wq'], params['wk']], axis=1).astype(bf16)
    bqk = jnp.concatenate([params['bq'], params['bk']], axis=1).astype(f32)
    wewb = jnp.concatenate([params['wew'], params['web']], axis=1).astype(bf16)
    bewb = jnp.concatenate([params['bew'], params['beb']], axis=1).astype(f32)
    wv = params['wv'].astype(bf16)
    bv = params['bv'].astype(f32)

    head_of = jnp.repeat(jnp.arange(H), D)                 # flat pos -> head id
    a_flat = params['A'][:, :, 0].T.reshape(HD)            # head-major flatten
    a_sel = jax.nn.one_hot(head_of, H, dtype=f32) * a_flat[:, None]   # [HD, H]
    expand = jax.nn.one_hot(head_of, H, dtype=f32).T                  # [H, HD]
    ev_perm = jnp.transpose(params['Ev'], (1, 0, 2))                  # [H, D, D]
    ev_blk = jax.scipy.linalg.block_diag(
        *[ev_perm[h] for h in range(H)]).astype(bf16)                 # [HD, HD]

    xb = x.astype(bf16)
    eab = ea_p.astype(bf16)
    nE = E // block_e
    const = lambda e: (0, 0)
    edge_blk = lambda e: (e, 0)

    cost1 = pl.CostEstimate(
        flops=2 * (N * C * 2 * HD + E * C * 2 * HD + E * 2 * N * HD + E * HD * H),
        transcendentals=2 * E * HD,
        bytes_accessed=2 * (N * C + E * C + 2 * C * 2 * HD)
        + 4 * (E * (HD + H) + 2 * E + 2 * HD))

    edge_rep, attn_sc = pl.pallas_call(
        _edge_kernel,
        out_shape=(jax.ShapeDtypeStruct((E, HD), f32),
                   jax.ShapeDtypeStruct((E, H), f32)),
        grid=(nE,),
        in_specs=[
            pl.BlockSpec((block_e, 1), edge_blk),        # src column
            pl.BlockSpec((block_e, 1), edge_blk),        # dst column
            pl.BlockSpec((N, C), const),                 # x (bf16, resident)
            pl.BlockSpec((block_e, C), edge_blk),        # edge_attr (bf16)
            pl.BlockSpec((C, 2 * HD), const),            # Wq ‖ Wk
            pl.BlockSpec((1, 2 * HD), const),            # bq ‖ bk
            pl.BlockSpec((C, 2 * HD), const),            # Wew ‖ Web
            pl.BlockSpec((1, 2 * HD), const),            # bew ‖ beb
            pl.BlockSpec((HD, H), const),                # A selector
        ],
        out_specs=(pl.BlockSpec((block_e, HD), edge_blk),
                   pl.BlockSpec((block_e, H), edge_blk)),
        scratch_shapes=[pltpu.VMEM((2 * N, HD), bf16)],  # stacked Q‖K table
        compiler_params=pltpu.CompilerParams(
            dimension_semantics=("arbitrary",)),
        cost_estimate=cost1,
    )(src_col, dst_col, xb, eab, wqk, bqk, wewb, bewb, a_sel)

    # Exact per-destination softmax normalisation constants.  These are tiny
    # O(E*H) / O(N*H) tensors; computed with XLA segment primitives between the
    # two Pallas calls and fed back as a resident [N, 2H] table.
    # TODO(synk): could be folded into the kernels with a second grid phase.
    attn_v = attn_sc[:E0]
    dst_i = dst.astype(jnp.int32)
    m = jax.ops.segment_max(attn_v, dst_i, num_segments=N)
    m = jnp.maximum(m, -1e30)                    # nodes without in-edges: no -inf
    l = jax.ops.segment_sum(jnp.exp(attn_v - m[dst_i]), dst_i, num_segments=N)
    ml = jnp.concatenate([m, l], axis=1).astype(f32)          # [N, 2H]

    cost2 = pl.CostEstimate(
        flops=2 * (N * C * HD + E * N * HD + E * N * 2 * H + E * H * HD
                   + E * N * 2 * HD + N * HD * HD),
        transcendentals=E * H,
        bytes_accessed=4 * (E * (HD + H) + N * (2 * H + 2 * HD)) + 2 * (N * C + HD * HD))

    node = pl.pallas_call(
        _node_kernel,
        out_shape=jax.ShapeDtypeStruct((N, HD), f32),
        grid=(nE,),
        in_specs=[
            pl.BlockSpec((block_e, 1), edge_blk),        # src column
            pl.BlockSpec((block_e, 1), edge_blk),        # dst column
            pl.BlockSpec((1, block_e), lambda e: (0, e)),  # dst row
            pl.BlockSpec((block_e, HD), edge_blk),       # edge representations
            pl.BlockSpec((block_e, H), edge_blk),        # attention scalars
            pl.BlockSpec((N, C), const),                 # x (bf16, resident)
            pl.BlockSpec((C, HD), const),                # Wv
            pl.BlockSpec((1, HD), const),                # bv
            pl.BlockSpec((N, 2 * H), const),             # softmax max ‖ sum
            pl.BlockSpec((H, HD), const),                # head -> channel expand
            pl.BlockSpec((HD, HD), const),               # block-diag E_v
        ],
        out_specs=pl.BlockSpec((N, HD), const),
        scratch_shapes=[pltpu.VMEM((N, HD), bf16),       # V table
                        pltpu.VMEM((N, 2 * HD), f32)],   # fused node accumulator
        compiler_params=pltpu.CompilerParams(
            dimension_semantics=("arbitrary",)),
        cost_estimate=cost2,
    )(src_col, dst_col, dst_row, edge_rep, attn_sc, xb, wv, bv, ml,
      expand, ev_blk)

    return node.reshape(N, H, D), edge_rep[:E0]


# ---------------------------------------------------------------------------
# Plain-JAX reference matching the PyTorch forward semantics.
# ---------------------------------------------------------------------------
def ref_forward(x, edge_attr, src, dst, p, H, D):
    N, E = x.shape[0], src.shape[0]
    q = (x @ p['wq'] + p['bq']).reshape(N, H, D)
    k = (x @ p['wk'] + p['bk']).reshape(N, H, D)
    v = (x @ p['wv'] + p['bv']).reshape(N, H, D)
    ew = (edge_attr @ p['wew'] + p['bew']).reshape(E, H, D)
    eb = (edge_attr @ p['web'] + p['beb']).reshape(E, H, D)
    s = q[src] + k[dst]
    s = s * ew
    s = jnp.sqrt(jnp.maximum(s, 0.0)) - jnp.sqrt(jnp.maximum(-s, 0.0))
    s = jnp.maximum(s + eb, 0.0)
    edge_rep = s.reshape(E, H * D)
    attn_sc = jnp.einsum('ehd,dhc->ehc', s, p['A'])           # [E, H, 1]
    seg_max = jax.ops.segment_max(attn_sc, dst, num_segments=N)
    ex = jnp.exp(attn_sc - seg_max[dst])
    seg_sum = jax.ops.segment_sum(ex, dst, num_segments=N)
    alpha = ex / (seg_sum[dst] + 1e-16)
    node = jax.ops.segment_sum(alpha * v[src], dst, num_segments=N)
    agg = jax.ops.segment_sum(s * alpha, dst, num_segments=N)
    node = node + jnp.einsum('nhd,dhc->nhc', agg, p['Ev'])
    return node, edge_rep


if __name__ == "__main__":
    f32 = jnp.float32
    N, E = 128, 512                # nodes, edges
    C_in, D, H = 32, 32, 4         # in_channels, out_channels, num_heads -> HD=128
    HD = H * D

    key = jax.random.PRNGKey(0)
    keys = jax.random.split(key, 20)

    def xavier(k, shape, fan_in, fan_out):
        std = (2.0 / (fan_in + fan_out)) ** 0.5
        return jax.random.normal(k, shape, dtype=f32) * std

    x = jax.random.normal(keys[0], (N, C_in), dtype=f32)
    edge_attr = jax.random.normal(keys[1], (E, C_in), dtype=f32)
    edge_index = jax.random.randint(keys[2], (2, E), 0, N)
    src, dst = edge_index[0], edge_index[1]

    params = {
        'wq': xavier(keys[3], (C_in, HD), C_in, HD),
        'bq': 0.1 * jax.random.normal(keys[4], (1, HD), dtype=f32),
        'wk': xavier(keys[5], (C_in, HD), C_in, HD),
        'bk': 0.1 * jax.random.normal(keys[6], (1, HD), dtype=f32),
        'wv': xavier(keys[7], (C_in, HD), C_in, HD),
        'bv': 0.1 * jax.random.normal(keys[8], (1, HD), dtype=f32),
        'wew': xavier(keys[9], (C_in, HD), C_in, HD),
        'bew': 0.1 * jax.random.normal(keys[10], (1, HD), dtype=f32),
        'web': xavier(keys[11], (C_in, HD), C_in, HD),
        'beb': 0.1 * jax.random.normal(keys[12], (1, HD), dtype=f32),
        'A': xavier(keys[13], (D, H, 1), D * H, 1),
        'Ev': xavier(keys[14], (D, H, D), H * D, D * D),
    }
    # TODO(synk): dropout (p=0.0) and the unused `clamp` attribute are no-ops in
    # this forward and are not represented in the kernels.

    run = jax.jit(grit_layer,
                  static_argnames=("num_heads", "out_channels", "block_e"))
    node_k, edge_k = run(x, edge_attr, src, dst, params,
                         num_heads=H, out_channels=D)
    jax.block_until_ready((node_k, edge_k))

    node_r, edge_r = ref_forward(x, edge_attr, src, dst, params, H, D)

    def rel_err(a, b):
        return float(jnp.max(jnp.abs(a - b)) / (jnp.max(jnp.abs(b)) + 1e-6))

    assert node_k.shape == (N, H, D) and edge_k.shape == (E, HD)
    # kernel uses bf16 MXU inputs with f32 accumulation -> compare vs f32 ref
    # with a normalized max-error bound.
    assert rel_err(node_k, node_r) < 5e-2, f"node mismatch {rel_err(node_k, node_r)}"
    assert rel_err(edge_k, edge_r) < 5e-2, f"edge mismatch {rel_err(edge_k, edge_r)}"
    print("KERNEL_OK")
</pallas_src>

<mosaic_0001>
module attributes {stable_mosaic.version = 11 : i64} {
  func.func @_edge_kernel(%arg0: i32, %arg1: memref<128x1xi32, #tpu.memory_space<vmem>>, %arg2: memref<128x1xi32, #tpu.memory_space<vmem>>, %arg3: memref<128x32xbf16, #tpu.memory_space<vmem>>, %arg4: memref<128x32xbf16, #tpu.memory_space<vmem>>, %arg5: memref<32x256xbf16, #tpu.memory_space<vmem>>, %arg6: memref<1x256xf32, #tpu.memory_space<vmem>>, %arg7: memref<32x256xbf16, #tpu.memory_space<vmem>>, %arg8: memref<1x256xf32, #tpu.memory_space<vmem>>, %arg9: memref<128x4xf32, #tpu.memory_space<vmem>>, %arg10: memref<128x128xf32, #tpu.memory_space<vmem>>, %arg11: memref<128x4xf32, #tpu.memory_space<vmem>>, %arg12: memref<256x128xbf16, #tpu.memory_space<vmem>>) attributes {dimension_semantics = [#tpu.dimension_semantics<arbitrary>], iteration_bounds = array<i64: 4>, scalar_prefetch = 0 : i64, scratch_operands = 1 : i64, tpu.core_type = #tpu.core_type<tc>, window_params = [{transform_indices = @transform_0, window_bounds = array<i64: 128, 1>}, {transform_indices = @transform_1, window_bounds = array<i64: 128, 1>}, {pipeline_mode = #tpu.pipeline_mode<synchronous>, transform_indices = @transform_2, window_bounds = array<i64: 128, 32>}, {transform_indices = @transform_3, window_bounds = array<i64: 128, 32>}, {pipeline_mode = #tpu.pipeline_mode<synchronous>, transform_indices = @transform_4, window_bounds = array<i64: 32, 256>}, {pipeline_mode = #tpu.pipeline_mode<synchronous>, transform_indices = @transform_5, window_bounds = array<i64: 1, 256>}, {pipeline_mode = #tpu.pipeline_mode<synchronous>, transform_indices = @transform_6, window_bounds = array<i64: 32, 256>}, {pipeline_mode = #tpu.pipeline_mode<synchronous>, transform_indices = @transform_7, window_bounds = array<i64: 1, 256>}, {pipeline_mode = #tpu.pipeline_mode<synchronous>, transform_indices = @transform_8, window_bounds = array<i64: 128, 4>}, {transform_indices = @transform_9, window_bounds = array<i64: 128, 128>}, {transform_indices = @transform_10, window_bounds = array<i64: 128, 4>}]} {
    %c0_i32 = arith.constant 0 : i32
    %0 = arith.cmpi eq, %arg0, %c0_i32 : i32
    %1 = arith.extui %0 : i1 to i32
    %c0_i32_0 = arith.constant 0 : i32
    %2 = arith.cmpi ne, %1, %c0_i32_0 : i32
    scf.if %2 {
      %c0_26 = arith.constant 0 : index
      %c0_27 = arith.constant 0 : index
      %44 = vector.load %arg3[%c0_26, %c0_27] : memref<128x32xbf16, #tpu.memory_space<vmem>>, vector<128x32xbf16>
      %c0_28 = arith.constant 0 : index
      %c0_29 = arith.constant 0 : index
      %45 = vector.load %arg5[%c0_28, %c0_29] : memref<32x256xbf16, #tpu.memory_space<vmem>>, vector<32x256xbf16>
      %cst_30 = arith.constant dense<0.000000e+00> : vector<128x256xf32>
      %46 = tpu.matmul %44, %45, %cst_30 {dimension_numbers = #tpu.dot_dimension_numbers<[1], [0], [0], [1], [0, 0, 1, 1], [], []>} : vector<128x32xbf16>, vector<32x256xbf16>, vector<128x256xf32> -> vector<128x256xf32>
      %c0_31 = arith.constant 0 : index
      %c0_32 = arith.constant 0 : index
      %47 = vector.load %arg6[%c0_31, %c0_32] : memref<1x256xf32, #tpu.memory_space<vmem>>, vector<1x256xf32>
      %48 = vector.broadcast %47 : vector<1x256xf32> to vector<128x256xf32>
      %49 = arith.addf %46, %48 : vector<128x256xf32>
      %50 = vector.extract_strided_slice %49 {offsets = [0, 0], sizes = [128, 128], strides = [1, 1]} : vector<128x256xf32> to vector<128x128xf32>
      %51 = arith.truncf %50 : vector<128x128xf32> to vector<128x128xbf16>
      %c0_33 = arith.constant 0 : index
      %c0_34 = arith.constant 0 : index
      %52 = vector.load %arg12[%c0_33, %c0_34] : memref<256x128xbf16, #tpu.memory_space<vmem>>, vector<128x128xbf16>
      tpu.vector_store %arg12[%c0_33, %c0_34], %51 {strides = array<i32>} : memref<256x128xbf16, #tpu.memory_space<vmem>>, vector<128x128xbf16>,
      %53 = vector.extract_strided_slice %49 {offsets = [0, 128], sizes = [128, 128], strides = [1, 1]} : vector<128x256xf32> to vector<128x128xf32>
      %54 = arith.truncf %53 : vector<128x128xf32> to vector<128x128xbf16>
      %c128 = arith.constant 128 : index
      %c0_35 = arith.constant 0 : index
      %55 = vector.load %arg12[%c128, %c0_35] : memref<256x128xbf16, #tpu.memory_space<vmem>>, vector<128x128xbf16>
      tpu.vector_store %arg12[%c128, %c0_35], %54 {strides = array<i32>} : memref<256x128xbf16, #tpu.memory_space<vmem>>, vector<128x128xbf16>,
    } else {
    }
    %c0 = arith.constant 0 : index
    %c0_1 = arith.constant 0 : index
    %3 = vector.load %arg4[%c0, %c0_1] : memref<128x32xbf16, #tpu.memory_space<vmem>>, vector<128x32xbf16>
    %c0_2 = arith.constant 0 : index
    %c0_3 = arith.constant 0 : index
    %4 = vector.load %arg7[%c0_2, %c0_3] : memref<32x256xbf16, #tpu.memory_space<vmem>>, vector<32x256xbf16>
    %cst = arith.constant dense<0.000000e+00> : vector<128x256xf32>
    %5 = tpu.matmul %3, %4, %cst {dimension_numbers = #tpu.dot_dimension_numbers<[1], [0], [0], [1], [0, 0, 1, 1], [], []>} : vector<128x32xbf16>, vector<32x256xbf16>, vector<128x256xf32> -> vector<128x256xf32>
    %c0_4 = arith.constant 0 : index
    %c0_5 = arith.constant 0 : index
    %6 = vector.load %arg8[%c0_4, %c0_5] : memref<1x256xf32, #tpu.memory_space<vmem>>, vector<1x256xf32>
    %7 = vector.broadcast %6 : vector<1x256xf32> to vector<128x256xf32>
    %8 = arith.addf %5, %7 : vector<128x256xf32>
    %9 = vector.extract_strided_slice %8 {offsets = [0, 0], sizes = [128, 128], strides = [1, 1]} : vector<128x256xf32> to vector<128x128xf32>
    %10 = vector.extract_strided_slice %8 {offsets = [0, 128], sizes = [128, 128], strides = [1, 1]} : vector<128x256xf32> to vector<128x128xf32>
    %c0_6 = arith.constant 0 : index
    %c0_7 = arith.constant 0 : index
    %11 = vector.load %arg1[%c0_6, %c0_7] : memref<128x1xi32, #tpu.memory_space<vmem>>, vector<128x1xi32>
    %c0_8 = arith.constant 0 : index
    %c0_9 = arith.constant 0 : index
    %12 = vector.load %arg2[%c0_8, %c0_9] : memref<128x1xi32, #tpu.memory_space<vmem>>, vector<128x1xi32>
    %13 = tpu.iota {dimensions = array<i32: 1>} : vector<128x256xi32>
    %14 = vector.broadcast %11 : vector<128x1xi32> to vector<128x256xi32>
    %15 = arith.cmpi eq, %13, %14 : vector<128x256xi32>
    %c128_i32 = arith.constant 128 : i32
    %16 = vector.broadcast %c128_i32 : i32 to vector<128x1xi32>
    %17 = arith.addi %12, %16 : vector<128x1xi32>
    %18 = vector.broadcast %17 : vector<128x1xi32> to vector<128x256xi32>
    %19 = arith.cmpi eq, %13, %18 : vector<128x256xi32>
    %20 = arith.ori %15, %19 : vector<128x256xi1>
    %cst_10 = arith.constant 1.000000e+00 : f32
    %cst_11 = arith.constant 0.000000e+00 : f32
    %21 = vector.broadcast %cst_10 : f32 to vector<128x256xf32>
    %22 = vector.broadcast %cst_11 : f32 to vector<128x256xf32>
    %23 = arith.select %20, %21, %22 : vector<128x256xi1>, vector<128x256xf32>
    %24 = arith.truncf %23 : vector<128x256xf32> to vector<128x256xbf16>
    %c0_12 = arith.constant 0 : index
    %c0_13 = arith.constant 0 : index
    %25 = vector.load %arg12[%c0_12, %c0_13] : memref<256x128xbf16, #tpu.memory_space<vmem>>, vector<256x128xbf16>
    %cst_14 = arith.constant dense<0.000000e+00> : vector<128x128xf32>
    %26 = tpu.matmul %24, %25, %cst_14 {dimension_numbers = #tpu.dot_dimension_numbers<[1], [0], [0], [1], [0, 0, 1, 1], [], []>} : vector<128x256xbf16>, vector<256x128xbf16>, vector<128x128xf32> -> vector<128x128xf32>
    %27 = arith.mulf %26, %9 : vector<128x128xf32>
    %cst_15 = arith.constant 0.000000e+00 : f32
    %28 = vector.broadcast %cst_15 : f32 to vector<128x128xf32>
    %29 = arith.maximumf %27, %28 : vector<128x128xf32>
    %30 = math.sqrt %29 : vector<128x128xf32>
    %cst_16 = arith.constant 0.000000e+00 : f32
    %31 = vector.broadcast %cst_16 : f32 to vector<128x128xf32>
    %32 = arith.subf %31, %27 : vector<128x128xf32>
    %cst_17 = arith.constant 0.000000e+00 : f32
    %33 = vector.broadcast %cst_17 : f32 to vector<128x128xf32>
    %34 = arith.maximumf %32, %33 : vector<128x128xf32>
    %35 = math.sqrt %34 : vector<128x128xf32>
    %36 = arith.subf %30, %35 : vector<128x128xf32>
    %37 = arith.addf %36, %10 : vector<128x128xf32>
    %cst_18 = arith.constant 0.000000e+00 : f32
    %38 = vector.broadcast %cst_18 : f32 to vector<128x128xf32>
    %39 = arith.maximumf %37, %38 : vector<128x128xf32>
    %c0_19 = arith.constant 0 : index
    %c0_20 = arith.constant 0 : index
    %40 = vector.load %arg10[%c0_19, %c0_20] : memref<128x128xf32, #tpu.memory_space<vmem>>, vector<128x128xf32>
    tpu.vector_store %arg10[%c0_19, %c0_20], %39 {strides = array<i32>} : memref<128x128xf32, #tpu.memory_space<vmem>>, vector<128x128xf32>,
    %c0_21 = arith.constant 0 : index
    %c0_22 = arith.constant 0 : index
    %41 = vector.load %arg9[%c0_21, %c0_22] : memref<128x4xf32, #tpu.memory_space<vmem>>, vector<128x4xf32>
    %cst_23 = arith.constant dense<0.000000e+00> : vector<128x4xf32>
    %42 = tpu.matmul %39, %41, %cst_23 {dimension_numbers = #tpu.dot_dimension_numbers<[1], [0], [0], [1], [0, 0, 1, 1], [], []>} : vector<128x128xf32>, vector<128x4xf32>, vector<128x4xf32> -> vector<128x4xf32>
    %c0_24 = arith.constant 0 : index
    %c0_25 = arith.constant 0 : index
    %43 = vector.load %arg11[%c0_24, %c0_25] : memref<128x4xf32, #tpu.memory_space<vmem>>, vector<128x4xf32>
    tpu.vector_store %arg11[%c0_24, %c0_25], %42 {strides = array<i32>} : memref<128x4xf32, #tpu.memory_space<vmem>>, vector<128x4xf32>,
    return
  }
  func.func @transform_0(%arg0: i32) -> (i32, i32) {
    %c0_i32 = arith.constant 0 : i32
    %c0_i32_0 = arith.constant 0 : i32
    return %arg0, %c0_i32 : i32, i32
  }
  func.func @transform_1(%arg0: i32) -> (i32, i32) {
    %c0_i32 = arith.constant 0 : i32
    %c0_i32_0 = arith.constant 0 : i32
    return %arg0, %c0_i32 : i32, i32
  }
  func.func @transform_2(%arg0: i32) -> (i32, i32) {
    %c0_i32 = arith.constant 0 : i32
    %c0_i32_0 = arith.constant 0 : i32
    %c0_i32_1 = arith.constant 0 : i32
    return %c0_i32, %c0_i32_0 : i32, i32
  }
  func.func @transform_3(%arg0: i32) -> (i32, i32) {
    %c0_i32 = arith.constant 0 : i32
    %c0_i32_0 = arith.constant 0 : i32
    return %arg0, %c0_i32 : i32, i32
  }
  func.func @transform_4(%arg0: i32) -> (i32, i32) {
    %c0_i32 = arith.constant 0 : i32
    %c0_i32_0 = arith.constant 0 : i32
    %c0_i32_1 = arith.constant 0 : i32
    return %c0_i32, %c0_i32_0 : i32, i32
  }
  func.func @transform_5(%arg0: i32) -> (i32, i32) {
    %c0_i32 = arith.constant 0 : i32
    %c0_i32_0 = arith.constant 0 : i32
    %c0_i32_1 = arith.constant 0 : i32
    return %c0_i32, %c0_i32_0 : i32, i32
  }
  func.func @transform_6(%arg0: i32) -> (i32, i32) {
    %c0_i32 = arith.constant 0 : i32
    %c0_i32_0 = arith.constant 0 : i32
    %c0_i32_1 = arith.constant 0 : i32
    return %c0_i32, %c0_i32_0 : i32, i32
  }
  func.func @transform_7(%arg0: i32) -> (i32, i32) {
    %c0_i32 = arith.constant 0 : i32
    %c0_i32_0 = arith.constant 0 : i32
    %c0_i32_1 = arith.constant 0 : i32
    return %c0_i32, %c0_i32_0 : i32, i32
  }
  func.func @transform_8(%arg0: i32) -> (i32, i32) {
    %c0_i32 = arith.constant 0 : i32
    %c0_i32_0 = arith.constant 0 : i32
    %c0_i32_1 = arith.constant 0 : i32
    return %c0_i32, %c0_i32_0 : i32, i32
  }
  func.func @transform_9(%arg0: i32) -> (i32, i32) {
    %c0_i32 = arith.constant 0 : i32
    %c0_i32_0 = arith.constant 0 : i32
    return %arg0, %c0_i32 : i32, i32
  }
  func.func @transform_10(%arg0: i32) -> (i32, i32) {
    %c0_i32 = arith.constant 0 : i32
    %c0_i32_0 = arith.constant 0 : i32
    return %arg0, %c0_i32 : i32, i32
  }
}

module attributes {stable_mosaic.version = 11 : i64} {
  func.func @_node_kernel(%arg0: i32, %arg1: memref<128x1xi32, #tpu.memory_space<vmem>>, %arg2: memref<128x1xi32, #tpu.memory_space<vmem>>, %arg3: memref<1x128xi32, #tpu.memory_space<vmem>>, %arg4: memref<128x128xf32, #tpu.memory_space<vmem>>, %arg5: memref<128x4xf32, #tpu.memory_space<vmem>>, %arg6: memref<128x32xbf16, #tpu.memory_space<vmem>>, %arg7: memref<32x128xbf16, #tpu.memory_space<vmem>>, %arg8: memref<1x128xf32, #tpu.memory_space<vmem>>, %arg9: memref<128x8xf32, #tpu.memory_space<vmem>>, %arg10: memref<4x128xf32, #tpu.memory_space<vmem>>, %arg11: memref<128x128xbf16, #tpu.memory_space<vmem>>, %arg12: memref<128x128xf32, #tpu.memory_space<vmem>>, %arg13: memref<128x128xbf16, #tpu.memory_space<vmem>>, %arg14: memref<128x256xf32, #tpu.memory_space<vmem>>) attributes {dimension_semantics = [#tpu.dimension_semantics<arbitrary>], iteration_bounds = array<i64: 4>, scalar_prefetch = 0 : i64, scratch_operands = 2 : i64, tpu.core_type = #tpu.core_type<tc>, window_params = [{transform_indices = @transform_0, window_bounds = array<i64: 128, 1>}, {transform_indices = @transform_1, window_bounds = array<i64: 128, 1>}, {transform_indices = @transform_2, window_bounds = array<i64: 1, 128>}, {transform_indices = @transform_3, window_bounds = array<i64: 128, 128>}, {transform_indices = @transform_4, window_bounds = array<i64: 128, 4>}, {pipeline_mode = #tpu.pipeline_mode<synchronous>, transform_indices = @transform_5, window_bounds = array<i64: 128, 32>}, {pipeline_mode = #tpu.pipeline_mode<synchronous>, transform_indices = @transform_6, window_bounds = array<i64: 32, 128>}, {pipeline_mode = #tpu.pipeline_mode<synchronous>, transform_indices = @transform_7, window_bounds = array<i64: 1, 128>}, {pipeline_mode = #tpu.pipeline_mode<synchronous>, transform_indices = @transform_8, window_bounds = array<i64: 128, 8>}, {pipeline_mode = #tpu.pipeline_mode<synchronous>, transform_indices = @transform_9, window_bounds = array<i64: 4, 128>}, {pipeline_mode = #tpu.pipeline_mode<synchronous>, transform_indices = @transform_10, window_bounds = array<i64: 128, 128>}, {pipeline_mode = #tpu.pipeline_mode<synchronous>, transform_indices = @transform_11, window_bounds = array<i64: 128, 128>}]} {
    %c0_i32 = arith.constant 0 : i32
    %0 = arith.cmpi eq, %arg0, %c0_i32 : i32
    %1 = arith.extui %0 : i1 to i32
    %c0_i32_0 = arith.constant 0 : i32
    %2 = arith.cmpi ne, %1, %c0_i32_0 : i32
    scf.if %2 {
      %c0_33 = arith.constant 0 : index
      %c0_34 = arith.constant 0 : index
      %55 = vector.load %arg6[%c0_33, %c0_34] : memref<128x32xbf16, #tpu.memory_space<vmem>>, vector<128x32xbf16>
      %c0_35 = arith.constant 0 : index
      %c0_36 = arith.constant 0 : index
      %56 = vector.load %arg7[%c0_35, %c0_36] : memref<32x128xbf16, #tpu.memory_space<vmem>>, vector<32x128xbf16>
      %cst_37 = arith.constant dense<0.000000e+00> : vector<128x128xf32>
      %57 = tpu.matmul %55, %56, %cst_37 {dimension_numbers = #tpu.dot_dimension_numbers<[1], [0], [0], [1], [0, 0, 1, 1], [], []>} : vector<128x32xbf16>, vector<32x128xbf16>, vector<128x128xf32> -> vector<128x128xf32>
      %c0_38 = arith.constant 0 : index
      %c0_39 = arith.constant 0 : index
      %58 = vector.load %arg8[%c0_38, %c0_39] : memref<1x128xf32, #tpu.memory_space<vmem>>, vector<1x128xf32>
      %59 = vector.broadcast %58 : vector<1x128xf32> to vector<128x128xf32>
      %60 = arith.addf %57, %59 : vector<128x128xf32>
      %61 = arith.truncf %60 : vector<128x128xf32> to vector<128x128xbf16>
      %c0_40 = arith.constant 0 : index
      %c0_41 = arith.constant 0 : index
      %62 = vector.load %arg13[%c0_40, %c0_41] : memref<128x128xbf16, #tpu.memory_space<vmem>>, vector<128x128xbf16>
      tpu.vector_store %arg13[%c0_40, %c0_41], %61 {strides = array<i32>} : memref<128x128xbf16, #tpu.memory_space<vmem>>, vector<128x128xbf16>,
      %cst_42 = arith.constant 0.000000e+00 : f32
      %63 = vector.broadcast %cst_42 : f32 to vector<128x256xf32>
      %c0_43 = arith.constant 0 : index
      %c0_44 = arith.constant 0 : index
      %64 = vector.load %arg14[%c0_43, %c0_44] : memref<128x256xf32, #tpu.memory_space<vmem>>, vector<128x256xf32>
      tpu.vector_store %arg14[%c0_43, %c0_44], %63 {strides = array<i32>} : memref<128x256xf32, #tpu.memory_space<vmem>>, vector<128x256xf32>,
    } else {
    }
    %c0 = arith.constant 0 : index
    %c0_1 = arith.constant 0 : index
    %3 = vector.load %arg1[%c0, %c0_1] : memref<128x1xi32, #tpu.memory_space<vmem>>, vector<128x1xi32>
    %c0_2 = arith.constant 0 : index
    %c0_3 = arith.constant 0 : index
    %4 = vector.load %arg2[%c0_2, %c0_3] : memref<128x1xi32, #tpu.memory_space<vmem>>, vector<128x1xi32>
    %c0_4 = arith.constant 0 : index
    %c0_5 = arith.constant 0 : index
    %5 = vector.load %arg3[%c0_4, %c0_5] : memref<1x128xi32, #tpu.memory_space<vmem>>, vector<1x128xi32>
    %6 = tpu.iota {dimensions = array<i32: 1>} : vector<128x128xi32>
    %7 = tpu.iota {dimensions = array<i32: 0>} : vector<128x128xi32>
    %8 = vector.broadcast %3 : vector<128x1xi32> to vector<128x128xi32>
    %9 = arith.cmpi eq, %6, %8 : vector<128x128xi32>
    %cst = arith.constant 1.000000e+00 : f32
    %cst_6 = arith.constant 0.000000e+00 : f32
    %10 = vector.broadcast %cst : f32 to vector<128x128xf32>
    %11 = vector.broadcast %cst_6 : f32 to vector<128x128xf32>
    %12 = arith.select %9, %10, %11 : vector<128x128xi1>, vector<128x128xf32>
    %13 = arith.truncf %12 : vector<128x128xf32> to vector<128x128xbf16>
    %14 = vector.broadcast %4 : vector<128x1xi32> to vector<128x128xi32>
    %15 = arith.cmpi eq, %6, %14 : vector<128x128xi32>
    %cst_7 = arith.constant 1.000000e+00 : f32
    %cst_8 = arith.constant 0.000000e+00 : f32
    %16 = vector.broadcast %cst_7 : f32 to vector<128x128xf32>
    %17 = vector.broadcast %cst_8 : f32 to vector<128x128xf32>
    %18 = arith.select %15, %16, %17 : vector<128x128xi1>, vector<128x128xf32>
    %19 = vector.broadcast %5 : vector<1x128xi32> to vector<128x128xi32>
    %20 = arith.cmpi eq, %7, %19 : vector<128x128xi32>
    %cst_9 = arith.constant 1.000000e+00 : f32
    %cst_10 = arith.constant 0.000000e+00 : f32
    %21 = vector.broadcast %cst_9 : f32 to vector<128x128xf32>
    %22 = vector.broadcast %cst_10 : f32 to vector<128x128xf32>
    %23 = arith.select %20, %21, %22 : vector<128x128xi1>, vector<128x128xf32>
    %24 = arith.truncf %23 : vector<128x128xf32> to vector<128x128xbf16>
    %c0_11 = arith.constant 0 : index
    %c0_12 = arith.constant 0 : index
    %25 = vector.load %arg4[%c0_11, %c0_12] : memref<128x128xf32, #tpu.memory_space<vmem>>, vector<128x128xf32>
    %c0_13 = arith.constant 0 : index
    %c0_14 = arith.constant 0 : index
    %26 = vector.load %arg5[%c0_13, %c0_14] : memref<128x4xf32, #tpu.memory_space<vmem>>, vector<128x4xf32>
    %c0_15 = arith.constant 0 : index
    %c0_16 = arith.constant 0 : index
    %27 = vector.load %arg9[%c0_15, %c0_16] : memref<128x8xf32, #tpu.memory_space<vmem>>, vector<128x8xf32>
    %cst_17 = arith.constant dense<0.000000e+00> : vector<128x8xf32>
    %28 = tpu.matmul %18, %27, %cst_17 {dimension_numbers = #tpu.dot_dimension_numbers<[1], [0], [0], [1], [0, 0, 1, 1], [], []>} : vector<128x128xf32>, vector<128x8xf32>, vector<128x8xf32> -> vector<128x8xf32>
    %29 = vector.extract_strided_slice %28 {offsets = [0, 0], sizes = [128, 4], strides = [1, 1]} : vector<128x8xf32> to vector<128x4xf32>
    %30 = vector.extract_strided_slice %28 {offsets = [0, 4], sizes = [128, 4], strides = [1, 1]} : vector<128x8xf32> to vector<128x4xf32>
    %31 = arith.subf %26, %29 : vector<128x4xf32>
    %32 = math.exp %31 : vector<128x4xf32>
    %cst_18 = arith.constant 0.000000e+00 : f32
    %33 = vector.broadcast %cst_18 : f32 to vector<128x4xf32>
    %34 = arith.cmpf ogt, %30, %33 : vector<128x4xf32>
    %cst_19 = arith.constant 1.000000e-16 : f32
    %35 = vector.broadcast %cst_19 : f32 to vector<128x4xf32>
    %36 = arith.addf %30, %35 : vector<128x4xf32>
    %37 = arith.divf %32, %36 : vector<128x4xf32>
    %cst_20 = arith.constant 0.000000e+00 : f32
    %38 = vector.broadcast %cst_20 : f32 to vector<128x4xf32>
    %39 = arith.select %34, %37, %38 : vector<128x4xi1>, vector<128x4xf32>
    %c0_21 = arith.constant 0 : index
    %c0_22 = arith.constant 0 : index
    %40 = vector.load %arg10[%c0_21, %c0_22] : memref<4x128xf32, #tpu.memory_space<vmem>>, vector<4x128xf32>
    %cst_23 = arith.constant dense<0.000000e+00> : vector<128x128xf32>
    %41 = tpu.matmul %39, %40, %cst_23 {dimension_numbers = #tpu.dot_dimension_numbers<[1], [0], [0], [1], [0, 0, 1, 1], [], []>} : vector<128x4xf32>, vector<4x128xf32>, vector<128x128xf32> -> vector<128x128xf32>
    %c0_24 = arith.constant 0 : index
    %c0_25 = arith.constant 0 : index
    %42 = vector.load %arg13[%c0_24, %c0_25] : memref<128x128xbf16, #tpu.memory_space<vmem>>, vector<128x128xbf16>
    %cst_26 = arith.constant dense<0.000000e+00> : vector<128x128xf32>
    %43 = tpu.matmul %13, %42, %cst_26 {dimension_numbers = #tpu.dot_dimension_numbers<[1], [0], [0], [1], [0, 0, 1, 1], [], []>} : vector<128x128xbf16>, vector<128x128xbf16>, vector<128x128xf32> -> vector<128x128xf32>
    %44 = arith.mulf %41, %43 : vector<128x128xf32>
    %45 = arith.mulf %41, %25 : vector<128x128xf32>
    %46 = tpu.concatenate %44, %45 in 1 : vector<128x128xf32>, vector<128x128xf32> -> vector<128x256xf32>
    %c0_27 = arith.constant 0 : index
    %c0_28 = arith.constant 0 : index
    %47 = vector.load %arg14[%c0_27, %c0_28] : memref<128x256xf32, #tpu.memory_space<vmem>>, vector<128x256xf32>
    %48 = arith.truncf %46 : vector<128x256xf32> to vector<128x256xbf16>
    %cst_29 = arith.constant dense<0.000000e+00> : vector<128x256xf32>
    %49 = tpu.matmul %24, %48, %cst_29 {dimension_numbers = #tpu.dot_dimension_numbers<[1], [0], [0], [1], [0, 0, 1, 1], [], []>} : vector<128x128xbf16>, vector<128x256xbf16>, vector<128x256xf32> -> vector<128x256xf32>
    %50 = arith.addf %47, %49 : vector<128x256xf32>
    %c0_30 = arith.constant 0 : index
    %c0_31 = arith.constant 0 : index
    %51 = vector.load %arg14[%c0_30, %c0_31] : memref<128x256xf32, #tpu.memory_space<vmem>>, vector<128x256xf32>
    tpu.vector_store %arg14[%c0_30, %c0_31], %50 {strides = array<i32>} : memref<128x256xf32, #tpu.memory_space<vmem>>, vector<128x256xf32>,
    %c3_i32 = arith.constant 3 : i32
    %52 = arith.cmpi eq, %arg0, %c3_i32 : i32
    %53 = arith.extui %52 : i1 to i32
    %c0_i32_32 = arith.constant 0 : i32
    %54 = arith.cmpi ne, %53, %c0_i32_32 : i32
    scf.if %54 {
      %c0_33 = arith.constant 0 : index
      %c0_34 = arith.constant 0 : index
      %55 = vector.load %arg14[%c0_33, %c0_34] : memref<128x256xf32, #tpu.memory_space<vmem>>, vector<128x256xf32>
      %56 = vector.extract_strided_slice %55 {offsets = [0, 128], sizes = [128, 128], strides = [1, 1]} : vector<128x256xf32> to vector<128x128xf32>
      %57 = arith.truncf %56 : vector<128x128xf32> to vector<128x128xbf16>
      %c0_35 = arith.constant 0 : index
      %c0_36 = arith.constant 0 : index
      %58 = vector.load %arg11[%c0_35, %c0_36] : memref<128x128xbf16, #tpu.memory_space<vmem>>, vector<128x128xbf16>
      %cst_37 = arith.constant dense<0.000000e+00> : vector<128x128xf32>
      %59 = tpu.matmul %57, %58, %cst_37 {dimension_numbers = #tpu.dot_dimension_numbers<[1], [0], [0], [1], [0, 0, 1, 1], [], []>} : vector<128x128xbf16>, vector<128x128xbf16>, vector<128x128xf32> -> vector<128x128xf32>
      %60 = vector.extract_strided_slice %55 {offsets = [0, 0], sizes = [128, 128], strides = [1, 1]} : vector<128x256xf32> to vector<128x128xf32>
      %61 = arith.addf %60, %59 : vector<128x128xf32>
      %c0_38 = arith.constant 0 : index
      %c0_39 = arith.constant 0 : index
      %62 = vector.load %arg12[%c0_38, %c0_39] : memref<128x128xf32, #tpu.memory_space<vmem>>, vector<128x128xf32>
      tpu.vector_store %arg12[%c0_38, %c0_39], %61 {strides = array<i32>} : memref<128x128xf32, #tpu.memory_space<vmem>>, vector<128x128xf32>,
    } else {
    }
    return
  }
  func.func @transform_0(%arg0: i32) -> (i32, i32) {
    %c0_i32 = arith.constant 0 : i32
    %c0_i32_0 = arith.constant 0 : i32
    return %arg0, %c0_i32 : i32, i32
  }
  func.func @transform_1(%arg0: i32) -> (i32, i32) {
    %c0_i32 = arith.constant 0 : i32
    %c0_i32_0 = arith.constant 0 : i32
    return %arg0, %c0_i32 : i32, i32
  }
  func.func @transform_2(%arg0: i32) -> (i32, i32) {
    %c0_i32 = arith.constant 0 : i32
    %c0_i32_0 = arith.constant 0 : i32
    return %c0_i32, %arg0 : i32, i32
  }
  func.func @transform_3(%arg0: i32) -> (i32, i32) {
    %c0_i32 = arith.constant 0 : i32
    %c0_i32_0 = arith.constant 0 : i32
    return %arg0, %c0_i32 : i32, i32
  }
  func.func @transform_4(%arg0: i32) -> (i32, i32) {
    %c0_i32 = arith.constant 0 : i32
    %c0_i32_0 = arith.constant 0 : i32
    return %arg0, %c0_i32 : i32, i32
  }
  func.func @transform_5(%arg0: i32) -> (i32, i32) {
    %c0_i32 = arith.constant 0 : i32
    %c0_i32_0 = arith.constant 0 : i32
    %c0_i32_1 = arith.constant 0 : i32
    return %c0_i32, %c0_i32_0 : i32, i32
  }
  func.func @transform_6(%arg0: i32) -> (i32, i32) {
    %c0_i32 = arith.constant 0 : i32
    %c0_i32_0 = arith.constant 0 : i32
    %c0_i32_1 = arith.constant 0 : i32
    return %c0_i32, %c0_i32_0 : i32, i32
  }
  func.func @transform_7(%arg0: i32) -> (i32, i32) {
    %c0_i32 = arith.constant 0 : i32
    %c0_i32_0 = arith.constant 0 : i32
    %c0_i32_1 = arith.constant 0 : i32
    return %c0_i32, %c0_i32_0 : i32, i32
  }
  func.func @transform_8(%arg0: i32) -> (i32, i32) {
    %c0_i32 = arith.constant 0 : i32
    %c0_i32_0 = arith.constant 0 : i32
    %c0_i32_1 = arith.constant 0 : i32
    return %c0_i32, %c0_i32_0 : i32, i32
  }
  func.func @transform_9(%arg0: i32) -> (i32, i32) {
    %c0_i32 = arith.constant 0 : i32
    %c0_i32_0 = arith.constant 0 : i32
    %c0_i32_1 = arith.constant 0 : i32
    return %c0_i32, %c0_i32_0 : i32, i32
  }
  func.func @transform_10(%arg0: i32) -> (i32, i32) {
    %c0_i32 = arith.constant 0 : i32
    %c0_i32_0 = arith.constant 0 : i32
    %c0_i32_1 = arith.constant 0 : i32
    return %c0_i32, %c0_i32_0 : i32, i32
  }
  func.func @transform_11(%arg0: i32) -> (i32, i32) {
    %c0_i32 = arith.constant 0 : i32
    %c0_i32_0 = arith.constant 0 : i32
    %c0_i32_1 = arith.constant 0 : i32
    return %c0_i32, %c0_i32_0 : i32, i32
  }
}

</mosaic_0001>

<llo_original>
// kernel: eq.1
$region0: #{eq.1}
  %s0 = inlined_call_operand.vmem [shape: s32[4,32], index: 0, kind: input, shape index: {}]
  %s1 = inlined_call_operand.vmem [shape: s32[128], index: 1, kind: output, shape index: {}]
  $region1: #{eq.1} parent=0
    #allocation0 [shape = 'u8[4096]{0}', space=vmem, size = 0x1000, scoped, tag = 'scoped mem for output reshape']
    #allocation1 [shape = 'u8[4096]{0}', space=vmem, size = 0x1000, scoped, tag = 'scoped mem for input reshape']
    %s3 = ssub.s32 16, 1
    %v4 = vld [vmem:[%s0] sm:%s3]
    %5 = vst [vmem:[#allocation1] sm:%s3] %v4
    %v6 = vld [vmem:[#allocation1] sm:$0x1]
    %vm7 = vcmask 261120
    %8 = vst.msk [vmem:[#allocation0] sm:$0x1] %vm7, %v6
    %s9 = scalar_lea.vmem [#allocation1], 3
    %v10 = vld [vmem:[%s9] sm:$0x1]
    %11 = vrot.lane.b32.xlu0 %v10, 96
    %v12 = vpop.permute.xlu0 %11
    %vm13 = vcmask 1048320
    %14 = vst.msk [vmem:[#allocation0] sm:$0x1] %vm13, %v12
    %s15 = scalar_lea.vmem [#allocation1], 2
    %v16 = vld [vmem:[%s15] sm:$0x1]
    %17 = vrot.lane.b32.xlu0 %v16, 64
    %v18 = vpop.permute.xlu0 %17
    %vm19 = vcmask 785920
    %20 = vst.msk [vmem:[#allocation0] sm:$0x1] %vm19, %v18
    %s21 = scalar_lea.vmem [#allocation1], 1
    %v22 = vld [vmem:[%s21] sm:$0x1]
    %23 = vrot.lane.b32.xlu0 %v22, 32
    %v24 = vpop.permute.xlu0 %23
    %vm25 = vcmask 523520
    %26 = vst.msk [vmem:[#allocation0] sm:$0x1] %vm25, %v24
    %s28 = ssub.s32 2, 1
    %v29 = vld [vmem:[#allocation0] sm:%s28]
    %s31 = ssub.s32 2, 1
    %32 = vst [vmem:[%s1] sm:%s31] %v29

// kernel: mul.5
$region0: #{mul.5}
  %s0 = inlined_call_operand.vmem [shape: f32[4,32], index: 0, kind: input, shape index: {}]
  %s1 = inlined_call_operand.vmem [shape: f32[128], index: 1, kind: output, shape index: {}]
  $region1: #{mul.5} parent=0
    #allocation0 [shape = 'u8[4096]{0}', space=vmem, size = 0x1000, scoped, tag = 'scoped mem for output reshape']
    #allocation1 [shape = 'u8[4096]{0}', space=vmem, size = 0x1000, scoped, tag = 'scoped mem for input reshape']
    %s3 = ssub.s32 16, 1
    %v4 = vld [vmem:[%s0] sm:%s3]
    %5 = vst [vmem:[#allocation1] sm:%s3] %v4
    %v6 = vld [vmem:[#allocation1] sm:$0x1]
    %vm7 = vcmask 261120
    %8 = vst.msk [vmem:[#allocation0] sm:$0x1] %vm7, %v6
    %s9 = scalar_lea.vmem [#allocation1], 3
    %v10 = vld [vmem:[%s9] sm:$0x1]
    %11 = vrot.lane.b32.xlu0 %v10, 96
    %v12 = vpop.permute.xlu0 %11
    %vm13 = vcmask 1048320
    %14 = vst.msk [vmem:[#allocation0] sm:$0x1] %vm13, %v12
    %s15 = scalar_lea.vmem [#allocation1], 2
    %v16 = vld [vmem:[%s15] sm:$0x1]
    %17 = vrot.lane.b32.xlu0 %v16, 64
    %v18 = vpop.permute.xlu0 %17
    %vm19 = vcmask 785920
    %20 = vst.msk [vmem:[#allocation0] sm:$0x1] %vm19, %v18
    %s21 = scalar_lea.vmem [#allocation1], 1
    %v22 = vld [vmem:[%s21] sm:$0x1]
    %23 = vrot.lane.b32.xlu0 %v22, 32
    %v24 = vpop.permute.xlu0 %23
    %vm25 = vcmask 523520
    %26 = vst.msk [vmem:[#allocation0] sm:$0x1] %vm25, %v24
    %s28 = ssub.s32 2, 1
    %v29 = vld [vmem:[#allocation0] sm:%s28]
    %s31 = ssub.s32 2, 1
    %32 = vst [vmem:[%s1] sm:%s31] %v29

// kernel: grit_layer.2
$region0: #{grit_layer.2}
  #allocation0 [shape = 'u32[]', space=smem, size = 0x4, offset = 0x4, fixed_abs, tag = 'smem constant byte address 0x4 - core index']
  #allocation1 [shape = 'u32[72,128]{1,0:T(1,128)}', space=vmem, size = 0x9000, scoped, tag = 'internal scratch']
  #allocation2 [shape = 'bf16[256,128]{1,0:T(8,128)(2,1)}', space=vmem, size = 0x10000, scoped, tag = 'scratch operand']
  %s0 = inlined_call_operand.vmem [shape: s32[512,1], index: 0, kind: input, shape index: {}]
  %s1 = inlined_call_operand.vmem [shape: s32[512,1], index: 1, kind: input, shape index: {}]
  %s2 = inlined_call_operand.vmem [shape: bf16[128,32], index: 2, kind: input, shape index: {}]
  %s3 = inlined_call_operand.vmem [shape: bf16[512,32], index: 3, kind: input, shape index: {}]
  %s4 = inlined_call_operand.vmem [shape: bf16[32,256], index: 4, kind: input, shape index: {}]
  %s5 = inlined_call_operand.vmem [shape: f32[1,256], index: 5, kind: input, shape index: {}]
  %s6 = inlined_call_operand.vmem [shape: bf16[32,256], index: 6, kind: input, shape index: {}]
  %s7 = inlined_call_operand.vmem [shape: f32[1,256], index: 7, kind: input, shape index: {}]
  %s8 = inlined_call_operand.vmem [shape: f32[128,4], index: 8, kind: input, shape index: {}]
  %s9 = inlined_call_operand.vmem [shape: f32[512,128], index: 9, kind: output, shape index: {0}]
  %s10 = inlined_call_operand.vmem [shape: f32[512,4], index: 10, kind: output, shape index: {1}]
  %11 = xla_tuple %s9, %s10
  %s12 = sld [smem:[#allocation0]]
  $region81: #{grit_layer.2} parent=0
    _
  %s14 = ssub.s32 1, %s12
  %s15 = scalar_select 0, %s14, %s12
  loop: start=0, step=1, limit=6
  $region2: #{grit_layer.2} parent=0 // loop_pre_header
    _
  $region3: #{grit_layer.2} parent=0 // loop_header
    %s17 = sphi 0, %s21
    %p18 = scmp.ge.s32.totalorder %s17, 6
    %s27 = sphi 0, %s29
    %s30 = sphi 0, %s27
    %s31 = sphi 0, %s30
    %s47 = sphi 0, %s31
    %s53 = sphi 0, %s55
    %s56 = sphi 0, %s53
    %s57 = sphi 0, %s56
    %s73 = sphi 0, %s57
    %s77 = sphi 0, %s77
    %s79 = sphi 0, %s77
    %s80 = sphi 0, %s79
    %s94 = sphi 0, %s80
    %s100 = sphi 0, %s102
    %s103 = sphi 0, %s100
    %s104 = sphi 0, %s103
    %s120 = sphi 0, %s104
    %s124 = sphi 0, %s124
    %s126 = sphi 0, %s124
    %s127 = sphi 0, %s126
    %s141 = sphi 0, %s127
    %s145 = sphi 0, %s145
    %s147 = sphi 0, %s145
    %s148 = sphi 0, %s147
    %s162 = sphi 0, %s148
    %s166 = sphi 0, %s166
    %s168 = sphi 0, %s166
    %s169 = sphi 0, %s168
    %s183 = sphi 0, %s169
    %s187 = sphi 0, %s187
    %s189 = sphi 0, %s187
    %s190 = sphi 0, %s189
    %s204 = sphi 0, %s190
    %s208 = sphi 0, %s208
    %s210 = sphi 0, %s208
    %s211 = sphi 0, %s210
    %s225 = sphi 0, %s211
    %s231 = sphi 0, %s233
    %s234 = sphi 0, %s231
    %s235 = sphi 0, %s234
    %s251 = sphi 0, %s235
    %s257 = sphi 0, %s259
    %s260 = sphi 0, %s257
    %s261 = sphi 0, %s260
    %s277 = sphi 0, %s261
  $region4: #{grit_layer.2} parent=0 // loop_header_branch
    %20 = sbr.rel (%p18) target = $region8
  $region5: #{grit_layer.2} parent=0 // loop_body
    %s22 = ssub.s32 %s17, 1
    %s23 = ssub.s32 %s17, 2
    %s24 = sadd.s32 %s17, 1
    %s25 = ssub.s32 %s17, %s24
    %p26 = scmp.eq.s32.totalorder %s25, 0
    %s28 = sadd.s32 %s27, 1
    %s29 = scalar_select %p26, %s27, %s28
    %p32 = pneg %p26
    %p33 = scmp.eq.s32.totalorder %s17, 3
    %p34 = por %p32, %p33
    %p35 = scmp.ne.s32.totalorder %s27, %s30
    %p36 = scmp.eq.s32.totalorder %s17, 0
    %p37 = por %p35, %p36
    %p38 = scmp.ne.s32.totalorder %s27, %s30
    %p39 = scmp.eq.s32.totalorder %s22, 3
    %p40 = por %p38, %p39
    %p41 = scmp.ne.s32.totalorder %s30, %s31
    %p42 = scmp.eq.s32.totalorder %s22, 0
    %p43 = por %p41, %p42
    %p44 = scmp.ne.s32.totalorder %s30, %s31
    %p45 = scmp.eq.s32.totalorder %s23, 3
    %p46 = por %p44, %p45
    %p48 = scmp.ne.s32.totalorder %s31, %s47
    %p49 = scmp.eq.s32.totalorder %s23, 0
    %p50 = por %p48, %p49
    %s51 = ssub.s32 %s17, %s24
    %p52 = scmp.eq.s32.totalorder %s51, 0
    %s54 = sadd.s32 %s53, 1
    %s55 = scalar_select %p52, %s53, %s54
    %p58 = pneg %p52
    %p59 = scmp.eq.s32.totalorder %s17, 3
    %p60 = por %p58, %p59
    %p61 = scmp.ne.s32.totalorder %s53, %s56
    %p62 = scmp.eq.s32.totalorder %s17, 0
    %p63 = por %p61, %p62
    %p64 = scmp.ne.s32.totalorder %s53, %s56
    %p65 = scmp.eq.s32.totalorder %s22, 3
    %p66 = por %p64, %p65
    %p67 = scmp.ne.s32.totalorder %s56, %s57
    %p68 = scmp.eq.s32.totalorder %s22, 0
    %p69 = por %p67, %p68
    %p70 = scmp.ne.s32.totalorder %s56, %s57
    %p71 = scmp.eq.s32.totalorder %s23, 3
    %p72 = por %p70, %p71
    %p74 = scmp.ne.s32.totalorder %s57, %s73
    %p75 = scmp.eq.s32.totalorder %s23, 0
    %p76 = por %p74, %p75
    %s78 = sadd.s32 %s77, 1
    %p81 = scmp.eq.s32.totalorder %s17, 3
    %p82 = scmp.ne.s32.totalorder %s77, %s79
    %p83 = scmp.eq.s32.totalorder %s17, 0
    %p84 = por %p82, %p83
    %p85 = scmp.ne.s32.totalorder %s77, %s79
    %p86 = scmp.eq.s32.totalorder %s22, 3
    %p87 = por %p85, %p86
    %p88 = scmp.ne.s32.totalorder %s79, %s80
    %p89 = scmp.eq.s32.totalorder %s22, 0
    %p90 = por %p88, %p89
    %p91 = scmp.ne.s32.totalorder %s79, %s80
    %p92 = scmp.eq.s32.totalorder %s23, 3
    %p93 = por %p91, %p92
    %p95 = scmp.ne.s32.totalorder %s80, %s94
    %p96 = scmp.eq.s32.totalorder %s23, 0
    %p97 = por %p95, %p96
    %s98 = ssub.s32 %s17, %s24
    %p99 = scmp.eq.s32.totalorder %s98, 0
    %s101 = sadd.s32 %s100, 1
    %s102 = scalar_select %p99, %s100, %s101
    %p105 = pneg %p99
    %p106 = scmp.eq.s32.totalorder %s17, 3
    %p107 = por %p105, %p106
    %p108 = scmp.ne.s32.totalorder %s100, %s103
    %p109 = scmp.eq.s32.totalorder %s17, 0
    %p110 = por %p108, %p109
    %p111 = scmp.ne.s32.totalorder %s100, %s103
    %p112 = scmp.eq.s32.totalorder %s22, 3
    %p113 = por %p111, %p112
    %p114 = scmp.ne.s32.totalorder %s103, %s104
    %p115 = scmp.eq.s32.totalorder %s22, 0
    %p116 = por %p114, %p115
    %p117 = scmp.ne.s32.totalorder %s103, %s104
    %p118 = scmp.eq.s32.totalorder %s23, 3
    %p119 = por %p117, %p118
    %p121 = scmp.ne.s32.totalorder %s104, %s120
    %p122 = scmp.eq.s32.totalorder %s23, 0
    %p123 = por %p121, %p122
    %s125 = sadd.s32 %s124, 1
    %p128 = scmp.eq.s32.totalorder %s17, 3
    %p129 = scmp.ne.s32.totalorder %s124, %s126
    %p130 = scmp.eq.s32.totalorder %s17, 0
    %p131 = por %p129, %p130
    %p132 = scmp.ne.s32.totalorder %s124, %s126
    %p133 = scmp.eq.s32.totalorder %s22, 3
    %p134 = por %p132, %p133
    %p135 = scmp.ne.s32.totalorder %s126, %s127
    %p136 = scmp.eq.s32.totalorder %s22, 0
    %p137 = por %p135, %p136
    %p138 = scmp.ne.s32.totalorder %s126, %s127
    %p139 = scmp.eq.s32.totalorder %s23, 3
    %p140 = por %p138, %p139
    %p142 = scmp.ne.s32.totalorder %s127, %s141
    %p143 = scmp.eq.s32.totalorder %s23, 0
    %p144 = por %p142, %p143
    %s146 = sadd.s32 %s145, 1
    %p149 = scmp.eq.s32.totalorder %s17, 3
    %p150 = scmp.ne.s32.totalorder %s145, %s147
    %p151 = scmp.eq.s32.totalorder %s17, 0
    %p152 = por %p150, %p151
    %p153 = scmp.ne.s32.totalorder %s145, %s147
    %p154 = scmp.eq.s32.totalorder %s22, 3
    %p155 = por %p153, %p154
    %p156 = scmp.ne.s32.totalorder %s147, %s148
    %p157 = scmp.eq.s32.totalorder %s22, 0
    %p158 = por %p156, %p157
    %p159 = scmp.ne.s32.totalorder %s147, %s148
    %p160 = scmp.eq.s32.totalorder %s23, 3
    %p161 = por %p159, %p160
    %p163 = scmp.ne.s32.totalorder %s148, %s162
    %p164 = scmp.eq.s32.totalorder %s23, 0
    %p165 = por %p163, %p164
    %s167 = sadd.s32 %s166, 1
    %p170 = scmp.eq.s32.totalorder %s17, 3
    %p171 = scmp.ne.s32.totalorder %s166, %s168
    %p172 = scmp.eq.s32.totalorder %s17, 0
    %p173 = por %p171, %p172
    %p174 = scmp.ne.s32.totalorder %s166, %s168
    %p175 = scmp.eq.s32.totalorder %s22, 3
    %p176 = por %p174, %p175
    %p177 = scmp.ne.s32.totalorder %s168, %s169
    %p178 = scmp.eq.s32.totalorder %s22, 0
    %p179 = por %p177, %p178
    %p180 = scmp.ne.s32.totalorder %s168, %s169
    %p181 = scmp.eq.s32.totalorder %s23, 3
    %p182 = por %p180, %p181
    %p184 = scmp.ne.s32.totalorder %s169, %s183
    %p185 = scmp.eq.s32.totalorder %s23, 0
    %p186 = por %p184, %p185
    %s188 = sadd.s32 %s187, 1
    %p191 = scmp.eq.s32.totalorder %s17, 3
    %p192 = scmp.ne.s32.totalorder %s187, %s189
    %p193 = scmp.eq.s32.totalorder %s17, 0
    %p194 = por %p192, %p193
    %p195 = scmp.ne.s32.totalorder %s187, %s189
    %p196 = scmp.eq.s32.totalorder %s22, 3
    %p197 = por %p195, %p196
    %p198 = scmp.ne.s32.totalorder %s189, %s190
    %p199 = scmp.eq.s32.totalorder %s22, 0
    %p200 = por %p198, %p199
    %p201 = scmp.ne.s32.totalorder %s189, %s190
    %p202 = scmp.eq.s32.totalorder %s23, 3
    %p203 = por %p201, %p202
    %p205 = scmp.ne.s32.totalorder %s190, %s204
    %p206 = scmp.eq.s32.totalorder %s23, 0
    %p207 = por %p205, %p206
    %s209 = sadd.s32 %s208, 1
    %p212 = scmp.eq.s32.totalorder %s17, 3
    %p213 = scmp.ne.s32.totalorder %s208, %s210
    %p214 = scmp.eq.s32.totalorder %s17, 0
    %p215 = por %p213, %p214
    %p216 = scmp.ne.s32.totalorder %s208, %s210
    %p217 = scmp.eq.s32.totalorder %s22, 3
    %p218 = por %p216, %p217
    %p219 = scmp.ne.s32.totalorder %s210, %s211
    %p220 = scmp.eq.s32.totalorder %s22, 0
    %p221 = por %p219, %p220
    %p222 = scmp.ne.s32.totalorder %s210, %s211
    %p223 = scmp.eq.s32.totalorder %s23, 3
    %p224 = por %p222, %p223
    %p226 = scmp.ne.s32.totalorder %s211, %s225
    %p227 = scmp.eq.s32.totalorder %s23, 0
    %p228 = por %p226, %p227
    %s229 = ssub.s32 %s17, %s24
    %p230 = scmp.eq.s32.totalorder %s229, 0
    %s232 = sadd.s32 %s231, 1
    %s233 = scalar_select %p230, %s231, %s232
    %p236 = pneg %p230
    %p237 = scmp.eq.s32.totalorder %s17, 3
    %p238 = por %p236, %p237
    %p239 = scmp.ne.s32.totalorder %s231, %s234
    %p240 = scmp.eq.s32.totalorder %s17, 0
    %p241 = por %p239, %p240
    %p242 = scmp.ne.s32.totalorder %s231, %s234
    %p243 = scmp.eq.s32.totalorder %s22, 3
    %p244 = por %p242, %p243
    %p245 = scmp.ne.s32.totalorder %s234, %s235
    %p246 = scmp.eq.s32.totalorder %s22, 0
    %p247 = por %p245, %p246
    %p248 = scmp.ne.s32.totalorder %s234, %s235
    %p249 = scmp.eq.s32.totalorder %s23, 3
    %p250 = por %p248, %p249
    %p252 = scmp.ne.s32.totalorder %s235, %s251
    %p253 = scmp.eq.s32.totalorder %s23, 0
    %p254 = por %p252, %p253
    %s255 = ssub.s32 %s17, %s24
    %p256 = scmp.eq.s32.totalorder %s255, 0
    %s258 = sadd.s32 %s257, 1
    %s259 = scalar_select %p256, %s257, %s258
    %p262 = pneg %p256
    %p263 = scmp.eq.s32.totalorder %s17, 3
    %p264 = por %p262, %p263
    %p265 = scmp.ne.s32.totalorder %s257, %s260
    %p266 = scmp.eq.s32.totalorder %s17, 0
    %p267 = por %p265, %p266
    %p268 = scmp.ne.s32.totalorder %s257, %s260
    %p269 = scmp.eq.s32.totalorder %s22, 3
    %p270 = por %p268, %p269
    %p271 = scmp.ne.s32.totalorder %s260, %s261
    %p272 = scmp.eq.s32.totalorder %s22, 0
    %p273 = por %p271, %p272
    %p274 = scmp.ne.s32.totalorder %s260, %s261
    %p275 = scmp.eq.s32.totalorder %s23, 3
    %p276 = por %p274, %p275
    %p278 = scmp.ne.s32.totalorder %s261, %s277
    %p279 = scmp.eq.s32.totalorder %s23, 0
    %p280 = por %p278, %p279
    %p281 = scmp.le.s32.totalorder 1, %s17
    %p282 = scmp.lt.s32.totalorder %s17, 5
    %p283 = pnand %p281, %p282
    %p284 = pneg %p283
    // Predicated region
    $region9: #{grit_layer.2} parent=5 // pred_check
      _
    $region10: #{grit_layer.2} parent=5 // pred_check_branch
      %286 = sbr.rel (%p283) target = $region12
    $region11: #{grit_layer.2} parent=5 // pred_region
      %s287 = ssub.s32 %s17, 1
      // Predicated region
      $region13: #{grit_layer.2} parent=11 // pred_check
        %p288 = pneg %p90
      $region14: #{grit_layer.2} parent=11 // pred_check_branch
        %290 = sbr.rel (%p288) target = $region16
      $region15: #{grit_layer.2} parent=11 // pred_region
        _
      $region16: #{grit_layer.2} parent=11 // pred_fallthru
        _
      // Predicated region
      $region17: #{grit_layer.2} parent=11 // pred_check
        %p291 = pneg %p137
      $region18: #{grit_layer.2} parent=11 // pred_check_branch
        %293 = sbr.rel (%p291) target = $region20
      $region19: #{grit_layer.2} parent=11 // pred_region
        _
      $region20: #{grit_layer.2} parent=11 // pred_fallthru
        _
      // Predicated region
      $region21: #{grit_layer.2} parent=11 // pred_check
        %p294 = pneg %p158
      $region22: #{grit_layer.2} parent=11 // pred_check_branch
        %296 = sbr.rel (%p294) target = $region24
      $region23: #{grit_layer.2} parent=11 // pred_region
        _
      $region24: #{grit_layer.2} parent=11 // pred_fallthru
        _
      // Predicated region
      $region25: #{grit_layer.2} parent=11 // pred_check
        %p297 = pneg %p179
      $region26: #{grit_layer.2} parent=11 // pred_check_branch
        %299 = sbr.rel (%p297) target = $region28
      $region27: #{grit_layer.2} parent=11 // pred_region
        _
      $region28: #{grit_layer.2} parent=11 // pred_fallthru
        _
      // Predicated region
      $region29: #{grit_layer.2} parent=11 // pred_check
        %p300 = pneg %p200
      $region30: #{grit_layer.2} parent=11 // pred_check_branch
        %302 = sbr.rel (%p300) target = $region32
      $region31: #{grit_layer.2} parent=11 // pred_region
        _
      $region32: #{grit_layer.2} parent=11 // pred_fallthru
        _
      // Predicated region
      $region33: #{grit_layer.2} parent=11 // pred_check
        %p303 = pneg %p221
      $region34: #{grit_layer.2} parent=11 // pred_check_branch
        %305 = sbr.rel (%p303) target = $region36
      $region35: #{grit_layer.2} parent=11 // pred_region
        _
      $region36: #{grit_layer.2} parent=11 // pred_fallthru
        _
    $region12: #{grit_layer.2} parent=5 // pred_fallthru
      _
    %p306 = scmp.lt.s32.totalorder %s17, 4
    // Predicated region
    $region37: #{grit_layer.2} parent=5 // pred_check
      %p307 = pneg %p306
    $region38: #{grit_layer.2} parent=5 // pred_check_branch
      %309 = sbr.rel (%p307) target = $region40
    $region39: #{grit_layer.2} parent=5 // pred_region
      // Predicated region
      $region41: #{grit_layer.2} parent=39 // pred_check
        %p310 = pneg %p37
      $region42: #{grit_layer.2} parent=39 // pred_check_branch
        %312 = sbr.rel (%p310) target = $region44
      $region43: #{grit_layer.2} parent=39 // pred_region
        %s313 = smul.u32 16, %s17
        %p314 = scmp.lt.s32.totalorder %s313, 63
        %s315 = scalar_select %p314, %s313, 63
        %s316 = smul.addr %s315, 8
        %s317 = scalar_lea.vmem %s0, %s316
        %s318 = smul.u32 16, %s17
      $region44: #{grit_layer.2} parent=39 // pred_fallthru
        _
      // Predicated region
      $region45: #{grit_layer.2} parent=39 // pred_check
        %p319 = pneg %p63
      $region46: #{grit_layer.2} parent=39 // pred_check_branch
        %321 = sbr.rel (%p319) target = $region48
      $region47: #{grit_layer.2} parent=39 // pred_region
        %s322 = smul.u32 16, %s17
        %p323 = scmp.lt.s32.totalorder %s322, 63
        %s324 = scalar_select %p323, %s322, 63
        %s325 = smul.addr %s324, 8
        %s326 = scalar_lea.vmem %s1, %s325
        %s327 = smul.u32 16, %s17
      $region48: #{grit_layer.2} parent=39 // pred_fallthru
        _
      // Predicated region
      $region49: #{grit_layer.2} parent=39 // pred_check
        %p328 = pneg %p110
      $region50: #{grit_layer.2} parent=39 // pred_check_branch
        %330 = sbr.rel (%p328) target = $region52
      $region51: #{grit_layer.2} parent=39 // pred_region
        %s331 = smul.u32 16, %s17
        %p332 = scmp.lt.s32.totalorder %s331, 63
        %s333 = scalar_select %p332, %s331, 63
        %s334 = smul.addr %s333, 4
        %s335 = scalar_lea.vmem %s3, %s334
        %s336 = smul.u32 16, %s17
      $region52: #{grit_layer.2} parent=39 // pred_fallthru
        _
    $region40: #{grit_layer.2} parent=5 // pred_fallthru
      _
    %p337 = scmp.le.s32.totalorder 1, %s17
    %p338 = scmp.lt.s32.totalorder %s17, 5
    %p339 = pnand %p337, %p338
    %p340 = pneg %p339
    // Predicated region
    $region53: #{grit_layer.2} parent=5 // pred_check
      _
    $region54: #{grit_layer.2} parent=5 // pred_check_branch
      %342 = sbr.rel (%p339) target = $region56
    $region55: #{grit_layer.2} parent=5 // pred_region
      %s343 = ssub.s32 %s17, 1
      %s344 = smul.u32 16, %s22
      %p345 = scmp.lt.s32.totalorder %s344, 63
      %s346 = scalar_select %p345, %s344, 63
      %s347 = smul.addr %s346, 8
      %s348 = scalar_lea.vmem %s0, %s347
      %p349 = pneg %p43
      %p350 = pneg %p40
      %s351 = smul.u32 16, %s22
      %p352 = scmp.lt.s32.totalorder %s351, 63
      %s353 = scalar_select %p352, %s351, 63
      %s354 = smul.addr %s353, 8
      %s355 = scalar_lea.vmem %s1, %s354
      %p356 = pneg %p69
      %p357 = pneg %p66
      %p358 = pneg %p90
      %p359 = pneg %p87
      %s360 = smul.u32 16, %s22
      %p361 = scmp.lt.s32.totalorder %s360, 63
      %s362 = scalar_select %p361, %s360, 63
      %s363 = smul.addr %s362, 4
      %s364 = scalar_lea.vmem %s3, %s363
      %p365 = pneg %p116
      %p366 = pneg %p113
      %p367 = pneg %p137
      %p368 = pneg %p134
      %p369 = pneg %p158
      %p370 = pneg %p155
      %p371 = pneg %p179
      %p372 = pneg %p176
      %p373 = pneg %p200
      %p374 = pneg %p197
      %p375 = pneg %p221
      %p376 = pneg %p218
      %p377 = pneg %p247
      %p378 = pneg %p244
      %s379 = smul.u32 16, %s22
      %p380 = scmp.lt.s32.totalorder %s379, 63
      %s381 = scalar_select %p380, %s379, 63
      %s382 = smul.addr %s381, 8
      %s383 = scalar_lea.vmem %s9, %s382
      %p384 = pneg %p273
      %p385 = pneg %p270
      %s386 = smul.u32 16, %s22
      %p387 = scmp.lt.s32.totalorder %s386, 63
      %s388 = scalar_select %p387, %s386, 63
      %s389 = smul.addr %s388, 8
      %s390 = scalar_lea.vmem %s10, %s389
      %s391 = smul.u32 16, %s22
      %p392 = scmp.lt.s32.totalorder %s391, 63
      %s393 = scalar_select %p392, %s391, 63
      %s394 = smul.addr %s393, 8
      %s395 = scalar_lea.vmem %s0, %s394
      %s396 = smul.u32 16, %s22
      %s397 = smul.u32 16, %s22
      %p398 = scmp.lt.s32.totalorder %s397, 63
      %s399 = scalar_select %p398, %s397, 63
      %s400 = smul.addr %s399, 8
      %s401 = scalar_lea.vmem %s1, %s400
      %s402 = smul.u32 16, %s22
      %s403 = smul.u32 16, %s22
      %p404 = scmp.lt.s32.totalorder %s403, 63
      %s405 = scalar_select %p404, %s403, 63
      %s406 = smul.addr %s405, 4
      %s407 = scalar_lea.vmem %s3, %s406
      %s408 = smul.u32 16, %s22
      %s409 = smul.u32 16, %s22
      %p410 = scmp.lt.s32.totalorder %s409, 63
      %s411 = scalar_select %p410, %s409, 63
      %s412 = smul.addr %s411, 8
      %s413 = scalar_lea.vmem %s9, %s412
      %s414 = smul.u32 16, %s22
      %s415 = smul.u32 16, %s22
      %p416 = scmp.lt.s32.totalorder %s415, 63
      %s417 = scalar_select %p416, %s415, 63
      %s418 = smul.addr %s417, 8
      %s419 = scalar_lea.vmem %s10, %s418
      %s420 = smul.u32 16, %s22
      %p422 = scmp.eq.s32.totalorder %s22, 0
      // Predicated region
      $region57: #{grit_layer.2} parent=55 // pred_check
        %p423 = pneg %p422
      $region58: #{grit_layer.2} parent=55 // pred_check_branch
        %425 = sbr.rel (%p423) target = $region60
      $region59: #{grit_layer.2} parent=55 // pred_region
        %v426 = vld [vmem:[%s2] sm:$0xf]
        %v427 = vld [vmem:[%s2 + $0x4] sm:$0xf]
        %v428 = vld [vmem:[%s2 + $0x8] sm:$0xf]
        %v429 = vld [vmem:[%s2 + $0xc] sm:$0xf]
        %v430 = vld [vmem:[%s2 + $0x10] sm:$0xf]
        %v431 = vld [vmem:[%s2 + $0x14] sm:$0xf]
        %v432 = vld [vmem:[%s2 + $0x18] sm:$0xf]
        %v433 = vld [vmem:[%s2 + $0x1c] sm:$0xf]
        %v434 = vld [vmem:[%s2 + $0x20] sm:$0xf]
        %v435 = vld [vmem:[%s2 + $0x24] sm:$0xf]
        %v436 = vld [vmem:[%s2 + $0x28] sm:$0xf]
        %v437 = vld [vmem:[%s2 + $0x2c] sm:$0xf]
        %v438 = vld [vmem:[%s2 + $0x30] sm:$0xf]
        %v439 = vld [vmem:[%s2 + $0x34] sm:$0xf]
        %v440 = vld [vmem:[%s2 + $0x38] sm:$0xf]
        %v441 = vld [vmem:[%s2 + $0x3c] sm:$0xf]
        %v442 = vld [vmem:[%s4] sm:$0xff]
        %v443 = vld [vmem:[%s4 + $0x8] sm:$0xff]
        %v444 = vld [vmem:[%s4 + $0x10] sm:$0xff]
        %v445 = vld [vmem:[%s4 + $0x18] sm:$0xff]
        %v446 = vld [vmem:[%s5] sm:$0x3]
        %v448 = vperm.slane %v446, 0
        %v449 = vperm.slane %v446, 1
        %v468 = vunpack.c.l.b16 %v426
        %v469 = vunpack.c.l.b16 %v427
        %v470 = vunpack.c.l.b16 %v428
        %v471 = vunpack.c.l.b16 %v429
        %v472 = vunpack.c.l.b16 %v430
        %v473 = vunpack.c.l.b16 %v431
        %v474 = vunpack.c.l.b16 %v432
        %v475 = vunpack.c.l.b16 %v433
        %v476 = vunpack.c.l.b16 %v434
        %v477 = vunpack.c.l.b16 %v435
        %v478 = vunpack.c.l.b16 %v436
        %v479 = vunpack.c.l.b16 %v437
        %v480 = vunpack.c.l.b16 %v438
        %v481 = vunpack.c.l.b16 %v439
        %v482 = vunpack.c.l.b16 %v440
        %v483 = vunpack.c.l.b16 %v441
        %v484 = vpack.c.b16 %v469, %v468
        %v485 = vpack.c.b16 %v471, %v470
        %v486 = vpack.c.b16 %v473, %v472
        %v487 = vpack.c.b16 %v475, %v474
        %v488 = vpack.c.b16 %v477, %v476
        %v489 = vpack.c.b16 %v479, %v478
        %v490 = vpack.c.b16 %v481, %v480
        %v491 = vpack.c.b16 %v483, %v482
        %v496 = vunpack.c.l.b16 %v442
        %v497 = vunpack.c.h.b16 %v442
        %v498 = vunpack.c.l.b16 %v443
        %v499 = vunpack.c.h.b16 %v443
        %v500 = vunpack.c.l.b16 %v444
        %v501 = vunpack.c.h.b16 %v444
        %v502 = vunpack.c.l.b16 %v445
        %v503 = vunpack.c.h.b16 %v445
        %v504 = vpack.c.b16 %v498, %v496
        %v505 = vpack.c.b16 %v499, %v497
        %v506 = vpack.c.b16 %v502, %v500
        %v507 = vpack.c.b16 %v503, %v501
        %vm512 = vcmask 261120
        %v514 = vsel %vm512, %v484, 0
        %v517 = vsel %vm512, %v485, 0
        %v520 = vsel %vm512, %v486, 0
        %v523 = vsel %vm512, %v487, 0
        %v526 = vsel %vm512, %v488, 0
        %v529 = vsel %vm512, %v489, 0
        %v532 = vsel %vm512, %v490, 0
        %v535 = vsel %vm512, %v491, 0
        %537 = vmatpush.bf16.msra.mxu0 0
        %538 = vmatpush.bf16.msra.mxu0 0
        %539 = vmatpush.bf16.msra.mxu0 0
        %540 = vmatpush.bf16.msra.mxu0 0
        %541 = vmatpush.bf16.msra.mxu0 0
        %542 = vmatpush.bf16.msra.mxu0 0
        %543 = vmatpush.bf16.msra.mxu0 %v506
        %544 = vmatpush.bf16.msra.mxu0 %v504
        %545 = vmatmul.bf16.gmra.mxu0 %v514
        %v546 = vpop.f32.mrf.mxu0
        %v547 = vadd.f32 %v448, %v546
        %v548 = vpop.f32.mrf.mxu0
        %v549 = vadd.f32 %v448, %v548
        %550 = vmatmul.bf16.gmra.mxu0 %v517
        %v551 = vpop.f32.mrf.mxu0
        %v552 = vadd.f32 %v448, %v551
        %v553 = vpop.f32.mrf.mxu0
        %v554 = vadd.f32 %v448, %v553
        %555 = vmatmul.bf16.gmra.mxu0 %v520
        %v556 = vpop.f32.mrf.mxu0
        %v557 = vadd.f32 %v448, %v556
        %v558 = vpop.f32.mrf.mxu0
        %v559 = vadd.f32 %v448, %v558
        %560 = vmatmul.bf16.gmra.mxu0 %v523
        %v561 = vpop.f32.mrf.mxu0
        %v562 = vadd.f32 %v448, %v561
        %v563 = vpop.f32.mrf.mxu0
        %v564 = vadd.f32 %v448, %v563
        %565 = vmatmul.bf16.gmra.mxu0 %v526
        %v566 = vpop.f32.mrf.mxu0
        %v567 = vadd.f32 %v448, %v566
        %v568 = vpop.f32.mrf.mxu0
        %v569 = vadd.f32 %v448, %v568
        %570 = vmatmul.bf16.gmra.mxu0 %v529
        %v571 = vpop.f32.mrf.mxu0
        %v572 = vadd.f32 %v448, %v571
        %v573 = vpop.f32.mrf.mxu0
        %v574 = vadd.f32 %v448, %v573
        %575 = vmatmul.bf16.gmra.mxu0 %v532
        %v576 = vpop.f32.mrf.mxu0
        %v577 = vadd.f32 %v448, %v576
        %v578 = vpop.f32.mrf.mxu0
        %v579 = vadd.f32 %v448, %v578
        %580 = vmatmul.bf16.gmra.mxu0 %v535
        %v581 = vpop.f32.mrf.mxu0
        %v582 = vadd.f32 %v448, %v581
        %v583 = vpop.f32.mrf.mxu0
        %v584 = vadd.f32 %v448, %v583
        %585 = vdwg.mxu0
        %586 = vmatpush.bf16.msra.mxu0 0
        %587 = vmatpush.bf16.msra.mxu0 0
        %588 = vmatpush.bf16.msra.mxu0 0
        %589 = vmatpush.bf16.msra.mxu0 0
        %590 = vmatpush.bf16.msra.mxu0 0
        %591 = vmatpush.bf16.msra.mxu0 0
        %592 = vmatpush.bf16.msra.mxu0 %v507
        %593 = vmatpush.bf16.msra.mxu0 %v505
        %594 = vmatmul.bf16.gmra.mxu0 %v514
        %v595 = vpop.f32.mrf.mxu0
        %v596 = vadd.f32 %v449, %v595
        %v597 = vpop.f32.mrf.mxu0
        %v598 = vadd.f32 %v449, %v597
        %599 = vmatmul.bf16.gmra.mxu0 %v517
        %v600 = vpop.f32.mrf.mxu0
        %v601 = vadd.f32 %v449, %v600
        %v602 = vpop.f32.mrf.mxu0
        %v603 = vadd.f32 %v449, %v602
        %604 = vmatmul.bf16.gmra.mxu0 %v520
        %v605 = vpop.f32.mrf.mxu0
        %v606 = vadd.f32 %v449, %v605
        %v607 = vpop.f32.mrf.mxu0
        %v608 = vadd.f32 %v449, %v607
        %609 = vmatmul.bf16.gmra.mxu0 %v523
        %v610 = vpop.f32.mrf.mxu0
        %v611 = vadd.f32 %v449, %v610
        %v612 = vpop.f32.mrf.mxu0
        %v613 = vadd.f32 %v449, %v612
        %614 = vmatmul.bf16.gmra.mxu0 %v526
        %v615 = vpop.f32.mrf.mxu0
        %v616 = vadd.f32 %v449, %v615
        %v617 = vpop.f32.mrf.mxu0
        %v618 = vadd.f32 %v449, %v617
        %619 = vmatmul.bf16.gmra.mxu0 %v529
        %v620 = vpop.f32.mrf.mxu0
        %v621 = vadd.f32 %v449, %v620
        %v622 = vpop.f32.mrf.mxu0
        %v623 = vadd.f32 %v449, %v622
        %624 = vmatmul.bf16.gmra.mxu0 %v532
        %v625 = vpop.f32.mrf.mxu0
        %v626 = vadd.f32 %v449, %v625
        %v627 = vpop.f32.mrf.mxu0
        %v628 = vadd.f32 %v449, %v627
        %629 = vmatmul.bf16.gmra.mxu0 %v535
        %v630 = vpop.f32.mrf.mxu0
        %v631 = vadd.f32 %v449, %v630
        %v632 = vpop.f32.mrf.mxu0
        %v633 = vadd.f32 %v449, %v632
        %634 = vdwg.mxu0
        %v635 = vpack.c.bf16 %v547, %v547
        %v636 = vpack.c.bf16 %v549, %v549
        %v637 = vpack.c.bf16 %v552, %v552
        %v638 = vpack.c.bf16 %v554, %v554
        %v639 = vpack.c.bf16 %v557, %v557
        %v640 = vpack.c.bf16 %v559, %v559
        %v641 = vpack.c.bf16 %v562, %v562
        %v642 = vpack.c.bf16 %v564, %v564
        %v643 = vpack.c.bf16 %v567, %v567
        %v644 = vpack.c.bf16 %v569, %v569
        %v645 = vpack.c.bf16 %v572, %v572
        %v646 = vpack.c.bf16 %v574, %v574
        %v647 = vpack.c.bf16 %v577, %v577
        %v648 = vpack.c.bf16 %v579, %v579
        %v649 = vpack.c.bf16 %v582, %v582
        %v650 = vpack.c.bf16 %v584, %v584
        %651 = vst [vmem:[#allocation2] sm:$0xf] %v635
        %652 = vst [vmem:[#allocation2 + $0x4] sm:$0xf] %v636
        %653 = vst [vmem:[#allocation2 + $0x8] sm:$0xf] %v637
        %654 = vst [vmem:[#allocation2 + $0xc] sm:$0xf] %v638
        %655 = vst [vmem:[#allocation2 + $0x10] sm:$0xf] %v639
        %656 = vst [vmem:[#allocation2 + $0x14] sm:$0xf] %v640
        %657 = vst [vmem:[#allocation2 + $0x18] sm:$0xf] %v641
        %658 = vst [vmem:[#allocation2 + $0x1c] sm:$0xf] %v642
        %659 = vst [vmem:[#allocation2 + $0x20] sm:$0xf] %v643
        %660 = vst [vmem:[#allocation2 + $0x24] sm:$0xf] %v644
        %661 = vst [vmem:[#allocation2 + $0x28] sm:$0xf] %v645
        %662 = vst [vmem:[#allocation2 + $0x2c] sm:$0xf] %v646
        %663 = vst [vmem:[#allocation2 + $0x30] sm:$0xf] %v647
        %664 = vst [vmem:[#allocation2 + $0x34] sm:$0xf] %v648
        %665 = vst [vmem:[#allocation2 + $0x38] sm:$0xf] %v649
        %666 = vst [vmem:[#allocation2 + $0x3c] sm:$0xf] %v650
        %v667 = vpack.c.bf16 %v596, %v596
        %v668 = vpack.c.bf16 %v598, %v598
        %v669 = vpack.c.bf16 %v601, %v601
        %v670 = vpack.c.bf16 %v603, %v603
        %v671 = vpack.c.bf16 %v606, %v606
        %v672 = vpack.c.bf16 %v608, %v608
        %v673 = vpack.c.bf16 %v611, %v611
        %v674 = vpack.c.bf16 %v613, %v613
        %v675 = vpack.c.bf16 %v616, %v616
        %v676 = vpack.c.bf16 %v618, %v618
        %v677 = vpack.c.bf16 %v621, %v621
        %v678 = vpack.c.bf16 %v623, %v623
        %v679 = vpack.c.bf16 %v626, %v626
        %v680 = vpack.c.bf16 %v628, %v628
        %v681 = vpack.c.bf16 %v631, %v631
        %v682 = vpack.c.bf16 %v633, %v633
        %683 = vst [vmem:[#allocation2 + $0x40] sm:$0xf] %v667
        %684 = vst [vmem:[#allocation2 + $0x44] sm:$0xf] %v668
        %685 = vst [vmem:[#allocation2 + $0x48] sm:$0xf] %v669
        %686 = vst [vmem:[#allocation2 + $0x4c] sm:$0xf] %v670
        %687 = vst [vmem:[#allocation2 + $0x50] sm:$0xf] %v671
        %688 = vst [vmem:[#allocation2 + $0x54] sm:$0xf] %v672
        %689 = vst [vmem:[#allocation2 + $0x58] sm:$0xf] %v673
        %690 = vst [vmem:[#allocation2 + $0x5c] sm:$0xf] %v674
        %691 = vst [vmem:[#allocation2 + $0x60] sm:$0xf] %v675
        %692 = vst [vmem:[#allocation2 + $0x64] sm:$0xf] %v676
        %693 = vst [vmem:[#allocation2 + $0x68] sm:$0xf] %v677
        %694 = vst [vmem:[#allocation2 + $0x6c] sm:$0xf] %v678
        %695 = vst [vmem:[#allocation2 + $0x70] sm:$0xf] %v679
        %696 = vst [vmem:[#allocation2 + $0x74] sm:$0xf] %v680
        %697 = vst [vmem:[#allocation2 + $0x78] sm:$0xf] %v681
        %698 = vst [vmem:[#allocation2 + $0x7c] sm:$0xf] %v682
      $region60: #{grit_layer.2} parent=55 // pred_fallthru
        _
      %v699 = vld [vmem:[%s407] sm:$0xf]
      %v700 = vld [vmem:[%s407 + $0x4] sm:$0xf]
      %v701 = vld [vmem:[%s407 + $0x8] sm:$0xf]
      %v702 = vld [vmem:[%s407 + $0xc] sm:$0xf]
      %v703 = vld [vmem:[%s407 + $0x10] sm:$0xf]
      %v704 = vld [vmem:[%s407 + $0x14] sm:$0xf]
      %v705 = vld [vmem:[%s407 + $0x18] sm:$0xf]
      %v706 = vld [vmem:[%s407 + $0x1c] sm:$0xf]
      %v707 = vld [vmem:[%s407 + $0x20] sm:$0xf]
      %v708 = vld [vmem:[%s407 + $0x24] sm:$0xf]
      %v709 = vld [vmem:[%s407 + $0x28] sm:$0xf]
      %v710 = vld [vmem:[%s407 + $0x2c] sm:$0xf]
      %v711 = vld [vmem:[%s407 + $0x30] sm:$0xf]
      %v712 = vld [vmem:[%s407 + $0x34] sm:$0xf]
      %v713 = vld [vmem:[%s407 + $0x38] sm:$0xf]
      %v714 = vld [vmem:[%s407 + $0x3c] sm:$0xf]
      %v715 = vld [vmem:[%s6] sm:$0xff]
      %v716 = vld [vmem:[%s6 + $0x8] sm:$0xff]
      %v717 = vld [vmem:[%s6 + $0x10] sm:$0xff]
      %v718 = vld [vmem:[%s6 + $0x18] sm:$0xff]
      %v719 = vld [vmem:[%s7] sm:$0x3]
      %v721 = vperm.slane %v719, 0
      %v722 = vperm.slane %v719, 1
      %v741 = vunpack.c.l.b16 %v699
      %v742 = vunpack.c.l.b16 %v700
      %v743 = vunpack.c.l.b16 %v701
      %v744 = vunpack.c.l.b16 %v702
      %v745 = vunpack.c.l.b16 %v703
      %v746 = vunpack.c.l.b16 %v704
      %v747 = vunpack.c.l.b16 %v705
      %v748 = vunpack.c.l.b16 %v706
      %v749 = vunpack.c.l.b16 %v707
      %v750 = vunpack.c.l.b16 %v708
      %v751 = vunpack.c.l.b16 %v709
      %v752 = vunpack.c.l.b16 %v710
      %v753 = vunpack.c.l.b16 %v711
      %v754 = vunpack.c.l.b16 %v712
      %v755 = vunpack.c.l.b16 %v713
      %v756 = vunpack.c.l.b16 %v714
      %v757 = vpack.c.b16 %v742, %v741
      %v758 = vpack.c.b16 %v744, %v743
      %v759 = vpack.c.b16 %v746, %v745
      %v760 = vpack.c.b16 %v748, %v747
      %v761 = vpack.c.b16 %v750, %v749
      %v762 = vpack.c.b16 %v752, %v751
      %v763 = vpack.c.b16 %v754, %v753
      %v764 = vpack.c.b16 %v756, %v755
      %v769 = vunpack.c.l.b16 %v715
      %v770 = vunpack.c.h.b16 %v715
      %v771 = vunpack.c.l.b16 %v716
      %v772 = vunpack.c.h.b16 %v716
      %v773 = vunpack.c.l.b16 %v717
      %v774 = vunpack.c.h.b16 %v717
      %v775 = vunpack.c.l.b16 %v718
      %v776 = vunpack.c.h.b16 %v718
      %v777 = vpack.c.b16 %v771, %v769
      %v778 = vpack.c.b16 %v772, %v770
      %v779 = vpack.c.b16 %v775, %v773
      %v780 = vpack.c.b16 %v776, %v774
      %vm785 = vcmask 261120
      %v787 = vsel %vm785, %v757, 0
      %v790 = vsel %vm785, %v758, 0
      %v793 = vsel %vm785, %v759, 0
      %v796 = vsel %vm785, %v760, 0
      %v799 = vsel %vm785, %v761, 0
      %v802 = vsel %vm785, %v762, 0
      %v805 = vsel %vm785, %v763, 0
      %v808 = vsel %vm785, %v764, 0
      %810 = vmatpush.bf16.msra.mxu0 0
      %811 = vmatpush.bf16.msra.mxu0 0
      %812 = vmatpush.bf16.msra.mxu0 0
      %813 = vmatpush.bf16.msra.mxu0 0
      %814 = vmatpush.bf16.msra.mxu0 0
      %815 = vmatpush.bf16.msra.mxu0 0
      %816 = vmatpush.bf16.msra.mxu0 %v779
      %817 = vmatpush.bf16.msra.mxu0 %v777
      %818 = vmatmul.bf16.gmra.mxu0 %v787
      %v819 = vpop.f32.mrf.mxu0
      %v820 = vadd.f32 %v721, %v819
      %v821 = vpop.f32.mrf.mxu0
      %v822 = vadd.f32 %v721, %v821
      %823 = vmatmul.bf16.gmra.mxu0 %v790
      %v824 = vpop.f32.mrf.mxu0
      %v825 = vadd.f32 %v721, %v824
      %v826 = vpop.f32.mrf.mxu0
      %v827 = vadd.f32 %v721, %v826
      %828 = vmatmul.bf16.gmra.mxu0 %v793
      %v829 = vpop.f32.mrf.mxu0
      %v830 = vadd.f32 %v721, %v829
      %v831 = vpop.f32.mrf.mxu0
      %v832 = vadd.f32 %v721, %v831
      %833 = vmatmul.bf16.gmra.mxu0 %v796
      %v834 = vpop.f32.mrf.mxu0
      %v835 = vadd.f32 %v721, %v834
      %v836 = vpop.f32.mrf.mxu0
      %v837 = vadd.f32 %v721, %v836
      %838 = vmatmul.bf16.gmra.mxu0 %v799
      %v839 = vpop.f32.mrf.mxu0
      %v840 = vadd.f32 %v721, %v839
      %v841 = vpop.f32.mrf.mxu0
      %v842 = vadd.f32 %v721, %v841
      %843 = vmatmul.bf16.gmra.mxu0 %v802
      %v844 = vpop.f32.mrf.mxu0
      %v845 = vadd.f32 %v721, %v844
      %v846 = vpop.f32.mrf.mxu0
      %v847 = vadd.f32 %v721, %v846
      %848 = vmatmul.bf16.gmra.mxu0 %v805
      %v849 = vpop.f32.mrf.mxu0
      %v850 = vadd.f32 %v721, %v849
      %v851 = vpop.f32.mrf.mxu0
      %v852 = vadd.f32 %v721, %v851
      %853 = vmatmul.bf16.gmra.mxu0 %v808
      %v854 = vpop.f32.mrf.mxu0
      %v855 = vadd.f32 %v721, %v854
      %v856 = vpop.f32.mrf.mxu0
      %v857 = vadd.f32 %v721, %v856
      %858 = vdwg.mxu0
      %859 = vmatpush.bf16.msra.mxu0 0
      %860 = vmatpush.bf16.msra.mxu0 0
      %861 = vmatpush.bf16.msra.mxu0 0
      %862 = vmatpush.bf16.msra.mxu0 0
      %863 = vmatpush.bf16.msra.mxu0 0
      %864 = vmatpush.bf16.msra.mxu0 0
      %865 = vmatpush.bf16.msra.mxu0 %v780
      %866 = vmatpush.bf16.msra.mxu0 %v778
      %867 = vmatmul.bf16.gmra.mxu0 %v787
      %v868 = vpop.f32.mrf.mxu0
      %v869 = vadd.f32 %v722, %v868
      %v870 = vpop.f32.mrf.mxu0
      %v871 = vadd.f32 %v722, %v870
      %872 = vmatmul.bf16.gmra.mxu0 %v790
      %v873 = vpop.f32.mrf.mxu0
      %v874 = vadd.f32 %v722, %v873
      %v875 = vpop.f32.mrf.mxu0
      %v876 = vadd.f32 %v722, %v875
      %877 = vmatmul.bf16.gmra.mxu0 %v793
      %v878 = vpop.f32.mrf.mxu0
      %v879 = vadd.f32 %v722, %v878
      %v880 = vpop.f32.mrf.mxu0
      %v881 = vadd.f32 %v722, %v880
      %882 = vmatmul.bf16.gmra.mxu0 %v796
      %v883 = vpop.f32.mrf.mxu0
      %v884 = vadd.f32 %v722, %v883
      %v885 = vpop.f32.mrf.mxu0
      %v886 = vadd.f32 %v722, %v885
      %887 = vmatmul.bf16.gmra.mxu0 %v799
      %v888 = vpop.f32.mrf.mxu0
      %v889 = vadd.f32 %v722, %v888
      %v890 = vpop.f32.mrf.mxu0
      %v891 = vadd.f32 %v722, %v890
      %892 = vmatmul.bf16.gmra.mxu0 %v802
      %v893 = vpop.f32.mrf.mxu0
      %v894 = vadd.f32 %v722, %v893
      %v895 = vpop.f32.mrf.mxu0
      %v896 = vadd.f32 %v722, %v895
      %897 = vmatmul.bf16.gmra.mxu0 %v805
      %v898 = vpop.f32.mrf.mxu0
      %v899 = vadd.f32 %v722, %v898
      %v900 = vpop.f32.mrf.mxu0
      %v901 = vadd.f32 %v722, %v900
      %902 = vmatmul.bf16.gmra.mxu0 %v808
      %v903 = vpop.f32.mrf.mxu0
      %v904 = vadd.f32 %v722, %v903
      %v905 = vpop.f32.mrf.mxu0
      %v906 = vadd.f32 %v722, %v905
      %907 = vdwg.mxu0
      %v908 = vld [vmem:[%s395] sm:$0xff]
      %v909 = vld [vmem:[%s395 + $0x8] sm:$0xff]
      %v910 = vld [vmem:[%s395 + $0x10] sm:$0xff]
      %v911 = vld [vmem:[%s395 + $0x18] sm:$0xff]
      %v912 = vld [vmem:[%s395 + $0x20] sm:$0xff]
      %v913 = vld [vmem:[%s395 + $0x28] sm:$0xff]
      %v914 = vld [vmem:[%s395 + $0x30] sm:$0xff]
      %v915 = vld [vmem:[%s395 + $0x38] sm:$0xff]
      %v916 = vld [vmem:[%s395 + $0x40] sm:$0xff]
      %v917 = vld [vmem:[%s395 + $0x48] sm:$0xff]
      %v918 = vld [vmem:[%s395 + $0x50] sm:$0xff]
      %v919 = vld [vmem:[%s395 + $0x58] sm:$0xff]
      %v920 = vld [vmem:[%s395 + $0x60] sm:$0xff]
      %v921 = vld [vmem:[%s395 + $0x68] sm:$0xff]
      %v922 = vld [vmem:[%s395 + $0x70] sm:$0xff]
      %v923 = vld [vmem:[%s395 + $0x78] sm:$0xff]
      %v924 = vld [vmem:[%s401] sm:$0xff]
      %v925 = vld [vmem:[%s401 + $0x8] sm:$0xff]
      %v926 = vld [vmem:[%s401 + $0x10] sm:$0xff]
      %v927 = vld [vmem:[%s401 + $0x18] sm:$0xff]
      %v928 = vld [vmem:[%s401 + $0x20] sm:$0xff]
      %v929 = vld [vmem:[%s401 + $0x28] sm:$0xff]
      %v930 = vld [vmem:[%s401 + $0x30] sm:$0xff]
      %v931 = vld [vmem:[%s401 + $0x38] sm:$0xff]
      %v932 = vld [vmem:[%s401 + $0x40] sm:$0xff]
      %v933 = vld [vmem:[%s401 + $0x48] sm:$0xff]
      %v934 = vld [vmem:[%s401 + $0x50] sm:$0xff]
      %v935 = vld [vmem:[%s401 + $0x58] sm:$0xff]
      %v936 = vld [vmem:[%s401 + $0x60] sm:$0xff]
      %v937 = vld [vmem:[%s401 + $0x68] sm:$0xff]
      %v938 = vld [vmem:[%s401 + $0x70] sm:$0xff]
      %v939 = vld [vmem:[%s401 + $0x78] sm:$0xff]
      %v940 = vlaneseq
      %v941 = vand.u32 %v940, 127
      %v942 = vadd.s32 %v941, 128
      %943 = vset.pattern.permute.xlu0 0
      %944 = vperm.xlu0 %943, %v908
      %v945 = vpop.permute.xlu0 %944
      %946 = vset.pattern.permute.xlu0 0
      %947 = vperm.xlu0 %946, %v909
      %v948 = vpop.permute.xlu0 %947
      %949 = vset.pattern.permute.xlu0 0
      %950 = vperm.xlu0 %949, %v910
      %v951 = vpop.permute.xlu0 %950
      %952 = vset.pattern.permute.xlu0 0
      %953 = vperm.xlu0 %952, %v911
      %v954 = vpop.permute.xlu0 %953
      %955 = vset.pattern.permute.xlu0 0
      %956 = vperm.xlu0 %955, %v912
      %v957 = vpop.permute.xlu0 %956
      %958 = vset.pattern.permute.xlu0 0
      %959 = vperm.xlu0 %958, %v913
      %v960 = vpop.permute.xlu0 %959
      %961 = vset.pattern.permute.xlu0 0
      %962 = vperm.xlu0 %961, %v914
      %v963 = vpop.permute.xlu0 %962
      %964 = vset.pattern.permute.xlu0 0
      %965 = vperm.xlu0 %964, %v915
      %v966 = vpop.permute.xlu0 %965
      %967 = vset.pattern.permute.xlu0 0
      %968 = vperm.xlu0 %967, %v916
      %v969 = vpop.permute.xlu0 %968
      %970 = vset.pattern.permute.xlu0 0
      %971 = vperm.xlu0 %970, %v917
      %v972 = vpop.permute.xlu0 %971
      %973 = vset.pattern.permute.xlu0 0
      %974 = vperm.xlu0 %973, %v918
      %v975 = vpop.permute.xlu0 %974
      %976 = vset.pattern.permute.xlu0 0
      %977 = vperm.xlu0 %976, %v919
      %v978 = vpop.permute.xlu0 %977
      %979 = vset.pattern.permute.xlu0 0
      %980 = vperm.xlu0 %979, %v920
      %v981 = vpop.permute.xlu0 %980
      %982 = vset.pattern.permute.xlu0 0
      %983 = vperm.xlu0 %982, %v921
      %v984 = vpop.permute.xlu0 %983
      %985 = vset.pattern.permute.xlu0 0
      %986 = vperm.xlu0 %985, %v922
      %v987 = vpop.permute.xlu0 %986
      %988 = vset.pattern.permute.xlu0 0
      %989 = vperm.xlu0 %988, %v923
      %v990 = vpop.permute.xlu0 %989
      %vm991 = vcmp.eq.s32.totalorder %v941, %v945
      %vm992 = vcmp.eq.s32.totalorder %v942, %v945
      %vm993 = vcmp.eq.s32.totalorder %v941, %v948
      %vm994 = vcmp.eq.s32.totalorder %v942, %v948
      %vm995 = vcmp.eq.s32.totalorder %v941, %v951
      %vm996 = vcmp.eq.s32.totalorder %v942, %v951
      %vm997 = vcmp.eq.s32.totalorder %v941, %v954
      %vm998 = vcmp.eq.s32.totalorder %v942, %v954
      %vm999 = vcmp.eq.s32.totalorder %v941, %v957
      %vm1000 = vcmp.eq.s32.totalorder %v942, %v957
      %vm1001 = vcmp.eq.s32.totalorder %v941, %v960
      %vm1002 = vcmp.eq.s32.totalorder %v942, %v960
      %vm1003 = vcmp.eq.s32.totalorder %v941, %v963
      %vm1004 = vcmp.eq.s32.totalorder %v942, %v963
      %vm1005 = vcmp.eq.s32.totalorder %v941, %v966
      %vm1006 = vcmp.eq.s32.totalorder %v942, %v966
      %vm1007 = vcmp.eq.s32.totalorder %v941, %v969
      %vm1008 = vcmp.eq.s32.totalorder %v942, %v969
      %vm1009 = vcmp.eq.s32.totalorder %v941, %v972
      %vm1010 = vcmp.eq.s32.totalorder %v942, %v972
      %vm1011 = vcmp.eq.s32.totalorder %v941, %v975
      %vm1012 = vcmp.eq.s32.totalorder %v942, %v975
      %vm1013 = vcmp.eq.s32.totalorder %v941, %v978
      %vm1014 = vcmp.eq.s32.totalorder %v942, %v978
      %vm1015 = vcmp.eq.s32.totalorder %v941, %v981
      %vm1016 = vcmp.eq.s32.totalorder %v942, %v981
      %vm1017 = vcmp.eq.s32.totalorder %v941, %v984
      %vm1018 = vcmp.eq.s32.totalorder %v942, %v984
      %vm1019 = vcmp.eq.s32.totalorder %v941, %v987
      %vm1020 = vcmp.eq.s32.totalorder %v942, %v987
      %vm1021 = vcmp.eq.s32.totalorder %v941, %v990
      %vm1022 = vcmp.eq.s32.totalorder %v942, %v990
      %v1023 = vadd.s32 %v924, 128
      %v1024 = vadd.s32 %v925, 128
      %v1025 = vadd.s32 %v926, 128
      %v1026 = vadd.s32 %v927, 128
      %v1027 = vadd.s32 %v928, 128
      %v1028 = vadd.s32 %v929, 128
      %v1029 = vadd.s32 %v930, 128
      %v1030 = vadd.s32 %v931, 128
      %v1031 = vadd.s32 %v932, 128
      %v1032 = vadd.s32 %v933, 128
      %v1033 = vadd.s32 %v934, 128
      %v1034 = vadd.s32 %v935, 128
      %v1035 = vadd.s32 %v936, 128
      %v1036 = vadd.s32 %v937, 128
      %v1037 = vadd.s32 %v938, 128
      %v1038 = vadd.s32 %v939, 128
      %1039 = vset.pattern.permute.xlu0 0
      %1040 = vperm.xlu0 %1039, %v1023
      %v1041 = vpop.permute.xlu0 %1040
      %1042 = vset.pattern.permute.xlu0 0
      %1043 = vperm.xlu0 %1042, %v1024
      %v1044 = vpop.permute.xlu0 %1043
      %1045 = vset.pattern.permute.xlu0 0
      %1046 = vperm.xlu0 %1045, %v1025
      %v1047 = vpop.permute.xlu0 %1046
      %1048 = vset.pattern.permute.xlu0 0
      %1049 = vperm.xlu0 %1048, %v1026
      %v1050 = vpop.permute.xlu0 %1049
      %1051 = vset.pattern.permute.xlu0 0
      %1052 = vperm.xlu0 %1051, %v1027
      %v1053 = vpop.permute.xlu0 %1052
      %1054 = vset.pattern.permute.xlu0 0
      %1055 = vperm.xlu0 %1054, %v1028
      %v1056 = vpop.permute.xlu0 %1055
      %1057 = vset.pattern.permute.xlu0 0
      %1058 = vperm.xlu0 %1057, %v1029
      %v1059 = vpop.permute.xlu0 %1058
      %1060 = vset.pattern.permute.xlu0 0
      %1061 = vperm.xlu0 %1060, %v1030
      %v1062 = vpop.permute.xlu0 %1061
      %1063 = vset.pattern.permute.xlu0 0
      %1064 = vperm.xlu0 %1063, %v1031
      %v1065 = vpop.permute.xlu0 %1064
      %1066 = vset.pattern.permute.xlu0 0
      %1067 = vperm.xlu0 %1066, %v1032
      %v1068 = vpop.permute.xlu0 %1067
      %1069 = vset.pattern.permute.xlu0 0
      %1070 = vperm.xlu0 %1069, %v1033
      %v1071 = vpop.permute.xlu0 %1070
      %1072 = vset.pattern.permute.xlu0 0
      %1073 = vperm.xlu0 %1072, %v1034
      %v1074 = vpop.permute.xlu0 %1073
      %1075 = vset.pattern.permute.xlu0 0
      %1076 = vperm.xlu0 %1075, %v1035
      %v1077 = vpop.permute.xlu0 %1076
      %1078 = vset.pattern.permute.xlu0 0
      %1079 = vperm.xlu0 %1078, %v1036
      %v1080 = vpop.permute.xlu0 %1079
      %1081 = vset.pattern.permute.xlu0 0
      %1082 = vperm.xlu0 %1081, %v1037
      %v1083 = vpop.permute.xlu0 %1082
      %1084 = vset.pattern.permute.xlu0 0
      %1085 = vperm.xlu0 %1084, %v1038
      %v1086 = vpop.permute.xlu0 %1085
      %vm1087 = vcmp.eq.s32.totalorder %v941, %v1041
      %vm1088 = vcmp.eq.s32.totalorder %v942, %v1041
      %vm1089 = vcmp.eq.s32.totalorder %v941, %v1044
      %vm1090 = vcmp.eq.s32.totalorder %v942, %v1044
      %vm1091 = vcmp.eq.s32.totalorder %v941, %v1047
      %vm1092 = vcmp.eq.s32.totalorder %v942, %v1047
      %vm1093 = vcmp.eq.s32.totalorder %v941, %v1050
      %vm1094 = vcmp.eq.s32.totalorder %v942, %v1050
      %vm1095 = vcmp.eq.s32.totalorder %v941, %v1053
      %vm1096 = vcmp.eq.s32.totalorder %v942, %v1053
      %vm1097 = vcmp.eq.s32.totalorder %v941, %v1056
      %vm1098 = vcmp.eq.s32.totalorder %v942, %v1056
      %vm1099 = vcmp.eq.s32.totalorder %v941, %v1059
      %vm1100 = vcmp.eq.s32.totalorder %v942, %v1059
      %vm1101 = vcmp.eq.s32.totalorder %v941, %v1062
      %vm1102 = vcmp.eq.s32.totalorder %v942, %v1062
      %vm1103 = vcmp.eq.s32.totalorder %v941, %v1065
      %vm1104 = vcmp.eq.s32.totalorder %v942, %v1065
      %vm1105 = vcmp.eq.s32.totalorder %v941, %v1068
      %vm1106 = vcmp.eq.s32.totalorder %v942, %v1068
      %vm1107 = vcmp.eq.s32.totalorder %v941, %v1071
      %vm1108 = vcmp.eq.s32.totalorder %v942, %v1071
      %vm1109 = vcmp.eq.s32.totalorder %v941, %v1074
      %vm1110 = vcmp.eq.s32.totalorder %v942, %v1074
      %vm1111 = vcmp.eq.s32.totalorder %v941, %v1077
      %vm1112 = vcmp.eq.s32.totalorder %v942, %v1077
      %vm1113 = vcmp.eq.s32.totalorder %v941, %v1080
      %vm1114 = vcmp.eq.s32.totalorder %v942, %v1080
      %vm1115 = vcmp.eq.s32.totalorder %v941, %v1083
      %vm1116 = vcmp.eq.s32.totalorder %v942, %v1083
      %vm1117 = vcmp.eq.s32.totalorder %v941, %v1086
      %vm1118 = vcmp.eq.s32.totalorder %v942, %v1086
      %vm1119 = vmor %vm991, %vm1087
      %vm1120 = vmor %vm992, %vm1088
      %vm1121 = vmor %vm993, %vm1089
      %vm1122 = vmor %vm994, %vm1090
      %vm1123 = vmor %vm995, %vm1091
      %vm1124 = vmor %vm996, %vm1092
      %vm1125 = vmor %vm997, %vm1093
      %vm1126 = vmor %vm998, %vm1094
      %vm1127 = vmor %vm999, %vm1095
      %vm1128 = vmor %vm1000, %vm1096
      %vm1129 = vmor %vm1001, %vm1097
      %vm1130 = vmor %vm1002, %vm1098
      %vm1131 = vmor %vm1003, %vm1099
      %vm1132 = vmor %vm1004, %vm1100
      %vm1133 = vmor %vm1005, %vm1101
      %vm1134 = vmor %vm1006, %vm1102
      %vm1135 = vmor %vm1007, %vm1103
      %vm1136 = vmor %vm1008, %vm1104
      %vm1137 = vmor %vm1009, %vm1105
      %vm1138 = vmor %vm1010, %vm1106
      %vm1139 = vmor %vm1011, %vm1107
      %vm1140 = vmor %vm1012, %vm1108
      %vm1141 = vmor %vm1013, %vm1109
      %vm1142 = vmor %vm1014, %vm1110
      %vm1143 = vmor %vm1015, %vm1111
      %vm1144 = vmor %vm1016, %vm1112
      %vm1145 = vmor %vm1017, %vm1113
      %vm1146 = vmor %vm1018, %vm1114
      %vm1147 = vmor %vm1019, %vm1115
      %vm1148 = vmor %vm1020, %vm1116
      %vm1149 = vmor %vm1021, %vm1117
      %vm1150 = vmor %vm1022, %vm1118
      %v1151 = vsel %vm1119, 1.0, 0.0
      %v1152 = vsel %vm1120, 1.0, 0.0
      %v1153 = vsel %vm1121, 1.0, 0.0
      %v1154 = vsel %vm1122, 1.0, 0.0
      %v1155 = vsel %vm1123, 1.0, 0.0
      %v1156 = vsel %vm1124, 1.0, 0.0
      %v1157 = vsel %vm1125, 1.0, 0.0
      %v1158 = vsel %vm1126, 1.0, 0.0
      %v1159 = vsel %vm1127, 1.0, 0.0
      %v1160 = vsel %vm1128, 1.0, 0.0
      %v1161 = vsel %vm1129, 1.0, 0.0
      %v1162 = vsel %vm1130, 1.0, 0.0
      %v1163 = vsel %vm1131, 1.0, 0.0
      %v1164 = vsel %vm1132, 1.0, 0.0
      %v1165 = vsel %vm1133, 1.0, 0.0
      %v1166 = vsel %vm1134, 1.0, 0.0
      %v1167 = vsel %vm1135, 1.0, 0.0
      %v1168 = vsel %vm1136, 1.0, 0.0
      %v1169 = vsel %vm1137, 1.0, 0.0
      %v1170 = vsel %vm1138, 1.0, 0.0
      %v1171 = vsel %vm1139, 1.0, 0.0
      %v1172 = vsel %vm1140, 1.0, 0.0
      %v1173 = vsel %vm1141, 1.0, 0.0
      %v1174 = vsel %vm1142, 1.0, 0.0
      %v1175 = vsel %vm1143, 1.0, 0.0
      %v1176 = vsel %vm1144, 1.0, 0.0
      %v1177 = vsel %vm1145, 1.0, 0.0
      %v1178 = vsel %vm1146, 1.0, 0.0
      %v1179 = vsel %vm1147, 1.0, 0.0
      %v1180 = vsel %vm1148, 1.0, 0.0
      %v1181 = vsel %vm1149, 1.0, 0.0
      %v1182 = vsel %vm1150, 1.0, 0.0
      %v1183 = vpack.c.bf16 %v1153, %v1151
      %v1184 = vpack.c.bf16 %v1154, %v1152
      %v1185 = vpack.c.bf16 %v1157, %v1155
      %v1186 = vpack.c.bf16 %v1158, %v1156
      %v1187 = vpack.c.bf16 %v1161, %v1159
      %v1188 = vpack.c.bf16 %v1162, %v1160
      %v1189 = vpack.c.bf16 %v1165, %v1163
      %v1190 = vpack.c.bf16 %v1166, %v1164
      %v1191 = vpack.c.bf16 %v1169, %v1167
      %v1192 = vpack.c.bf16 %v1170, %v1168
      %v1193 = vpack.c.bf16 %v1173, %v1171
      %v1194 = vpack.c.bf16 %v1174, %v1172
      %v1195 = vpack.c.bf16 %v1177, %v1175
      %v1196 = vpack.c.bf16 %v1178, %v1176
      %v1197 = vpack.c.bf16 %v1181, %v1179
      %v1198 = vpack.c.bf16 %v1182, %v1180
      %v1199 = vld [vmem:[#allocation2] sm:$0xf]
      %v1200 = vld [vmem:[#allocation2 + $0x4] sm:$0xf]
      %v1201 = vld [vmem:[#allocation2 + $0x8] sm:$0xf]
      %v1202 = vld [vmem:[#allocation2 + $0xc] sm:$0xf]
      %v1203 = vld [vmem:[#allocation2 + $0x10] sm:$0xf]
      %v1204 = vld [vmem:[#allocation2 + $0x14] sm:$0xf]
      %v1205 = vld [vmem:[#allocation2 + $0x18] sm:$0xf]
      %v1206 = vld [vmem:[#allocation2 + $0x1c] sm:$0xf]
      %v1207 = vld [vmem:[#allocation2 + $0x20] sm:$0xf]
      %v1208 = vld [vmem:[#allocation2 + $0x24] sm:$0xf]
      %v1209 = vld [vmem:[#allocation2 + $0x28] sm:$0xf]
      %v1210 = vld [vmem:[#allocation2 + $0x2c] sm:$0xf]
      %v1211 = vld [vmem:[#allocation2 + $0x30] sm:$0xf]
      %v1212 = vld [vmem:[#allocation2 + $0x34] sm:$0xf]
      %v1213 = vld [vmem:[#allocation2 + $0x38] sm:$0xf]
      %v1214 = vld [vmem:[#allocation2 + $0x3c] sm:$0xf]
      %v1215 = vld [vmem:[#allocation2 + $0x40] sm:$0xf]
      %v1216 = vld [vmem:[#allocation2 + $0x44] sm:$0xf]
      %v1217 = vld [vmem:[#allocation2 + $0x48] sm:$0xf]
      %v1218 = vld [vmem:[#allocation2 + $0x4c] sm:$0xf]
      %v1219 = vld [vmem:[#allocation2 + $0x50] sm:$0xf]
      %v1220 = vld [vmem:[#allocation2 + $0x54] sm:$0xf]
      %v1221 = vld [vmem:[#allocation2 + $0x58] sm:$0xf]
      %v1222 = vld [vmem:[#allocation2 + $0x5c] sm:$0xf]
      %v1223 = vld [vmem:[#allocation2 + $0x60] sm:$0xf]
      %v1224 = vld [vmem:[#allocation2 + $0x64] sm:$0xf]
      %v1225 = vld [vmem:[#allocation2 + $0x68] sm:$0xf]
      %v1226 = vld [vmem:[#allocation2 + $0x6c] sm:$0xf]
      %v1227 = vld [vmem:[#allocation2 + $0x70] sm:$0xf]
      %v1228 = vld [vmem:[#allocation2 + $0x74] sm:$0xf]
      %v1229 = vld [vmem:[#allocation2 + $0x78] sm:$0xf]
      %v1230 = vld [vmem:[#allocation2 + $0x7c] sm:$0xf]
      %v1263 = vunpack.c.l.b16 %v1199
      %v1264 = vunpack.c.l.b16 %v1200
      %v1265 = vunpack.c.l.b16 %v1201
      %v1266 = vunpack.c.l.b16 %v1202
      %v1267 = vunpack.c.l.b16 %v1203
      %v1268 = vunpack.c.l.b16 %v1204
      %v1269 = vunpack.c.l.b16 %v1205
      %v1270 = vunpack.c.l.b16 %v1206
      %v1271 = vunpack.c.l.b16 %v1207
      %v1272 = vunpack.c.l.b16 %v1208
      %v1273 = vunpack.c.l.b16 %v1209
      %v1274 = vunpack.c.l.b16 %v1210
      %v1275 = vunpack.c.l.b16 %v1211
      %v1276 = vunpack.c.l.b16 %v1212
      %v1277 = vunpack.c.l.b16 %v1213
      %v1278 = vunpack.c.l.b16 %v1214
      %v1279 = vunpack.c.l.b16 %v1215
      %v1280 = vunpack.c.l.b16 %v1216
      %v1281 = vunpack.c.l.b16 %v1217
      %v1282 = vunpack.c.l.b16 %v1218
      %v1283 = vunpack.c.l.b16 %v1219
      %v1284 = vunpack.c.l.b16 %v1220
      %v1285 = vunpack.c.l.b16 %v1221
      %v1286 = vunpack.c.l.b16 %v1222
      %v1287 = vunpack.c.l.b16 %v1223
      %v1288 = vunpack.c.l.b16 %v1224
      %v1289 = vunpack.c.l.b16 %v1225
      %v1290 = vunpack.c.l.b16 %v1226
      %v1291 = vunpack.c.l.b16 %v1227
      %v1292 = vunpack.c.l.b16 %v1228
      %v1293 = vunpack.c.l.b16 %v1229
      %v1294 = vunpack.c.l.b16 %v1230
      %v1295 = vpack.c.b16 %v1264, %v1263
      %v1296 = vpack.c.b16 %v1266, %v1265
      %v1297 = vpack.c.b16 %v1268, %v1267
      %v1298 = vpack.c.b16 %v1270, %v1269
      %v1299 = vpack.c.b16 %v1272, %v1271
      %v1300 = vpack.c.b16 %v1274, %v1273
      %v1301 = vpack.c.b16 %v1276, %v1275
      %v1302 = vpack.c.b16 %v1278, %v1277
      %v1303 = vpack.c.b16 %v1280, %v1279
      %v1304 = vpack.c.b16 %v1282, %v1281
      %v1305 = vpack.c.b16 %v1284, %v1283
      %v1306 = vpack.c.b16 %v1286, %v1285
      %v1307 = vpack.c.b16 %v1288, %v1287
      %v1308 = vpack.c.b16 %v1290, %v1289
      %v1309 = vpack.c.b16 %v1292, %v1291
      %v1310 = vpack.c.b16 %v1294, %v1293
      %1327 = vmatpush.bf16.msra.mxu0 %v1302
      %1328 = vmatpush.bf16.msra.mxu0 %v1301
      %1329 = vmatpush.bf16.msra.mxu0 %v1300
      %1330 = vmatpush.bf16.msra.mxu0 %v1299
      %1331 = vmatpush.bf16.msra.mxu0 %v1298
      %1332 = vmatpush.bf16.msra.mxu0 %v1297
      %1333 = vmatpush.bf16.msra.mxu0 %v1296
      %1334 = vmatpush.bf16.msra.mxu0 %v1295
      %1335 = vmatmul.bf16.gmra.mxu0 %v1183
      %v1336 = vpop.f32.mrf.mxu0
      %v1337 = vadd.f32 0.0, %v1336
      %v1338 = vpop.f32.mrf.mxu0
      %v1339 = vadd.f32 0.0, %v1338
      %1340 = vmatmul.bf16.gmra.mxu0 %v1185
      %v1341 = vpop.f32.mrf.mxu0
      %v1342 = vadd.f32 0.0, %v1341
      %v1343 = vpop.f32.mrf.mxu0
      %v1344 = vadd.f32 0.0, %v1343
      %1345 = vmatmul.bf16.gmra.mxu0 %v1187
      %v1346 = vpop.f32.mrf.mxu0
      %v1347 = vadd.f32 0.0, %v1346
      %v1348 = vpop.f32.mrf.mxu0
      %v1349 = vadd.f32 0.0, %v1348
      %1350 = vmatmul.bf16.gmra.mxu0 %v1189
      %v1351 = vpop.f32.mrf.mxu0
      %v1352 = vadd.f32 0.0, %v1351
      %v1353 = vpop.f32.mrf.mxu0
      %v1354 = vadd.f32 0.0, %v1353
      %1355 = vmatmul.bf16.gmra.mxu0 %v1191
      %v1356 = vpop.f32.mrf.mxu0
      %v1357 = vadd.f32 0.0, %v1356
      %v1358 = vpop.f32.mrf.mxu0
      %v1359 = vadd.f32 0.0, %v1358
      %1360 = vmatmul.bf16.gmra.mxu0 %v1193
      %v1361 = vpop.f32.mrf.mxu0
      %v1362 = vadd.f32 0.0, %v1361
      %v1363 = vpop.f32.mrf.mxu0
      %v1364 = vadd.f32 0.0, %v1363
      %1365 = vmatmul.bf16.gmra.mxu0 %v1195
      %v1366 = vpop.f32.mrf.mxu0
      %v1367 = vadd.f32 0.0, %v1366
      %v1368 = vpop.f32.mrf.mxu0
      %v1369 = vadd.f32 0.0, %v1368
      %1370 = vmatmul.bf16.gmra.mxu0 %v1197
      %v1371 = vpop.f32.mrf.mxu0
      %v1372 = vadd.f32 0.0, %v1371
      %v1373 = vpop.f32.mrf.mxu0
      %v1374 = vadd.f32 0.0, %v1373
      %1375 = vdwg.mxu0
      %1376 = vmatpush.bf16.msra.mxu0 %v1310
      %1377 = vmatpush.bf16.msra.mxu0 %v1309
      %1378 = vmatpush.bf16.msra.mxu0 %v1308
      %1379 = vmatpush.bf16.msra.mxu0 %v1307
      %1380 = vmatpush.bf16.msra.mxu0 %v1306
      %1381 = vmatpush.bf16.msra.mxu0 %v1305
      %1382 = vmatpush.bf16.msra.mxu0 %v1304
      %1383 = vmatpush.bf16.msra.mxu0 %v1303
      %1384 = vmatmul.bf16.gmra.mxu0 %v1184
      %v1385 = vpop.f32.mrf.mxu0
      %v1386 = vadd.f32 %v1337, %v1385
      %v1387 = vpop.f32.mrf.mxu0
      %v1388 = vadd.f32 %v1339, %v1387
      %1389 = vmatmul.bf16.gmra.mxu0 %v1186
      %v1390 = vpop.f32.mrf.mxu0
      %v1391 = vadd.f32 %v1342, %v1390
      %v1392 = vpop.f32.mrf.mxu0
      %v1393 = vadd.f32 %v1344, %v1392
      %1394 = vmatmul.bf16.gmra.mxu0 %v1188
      %v1395 = vpop.f32.mrf.mxu0
      %v1396 = vadd.f32 %v1347, %v1395
      %v1397 = vpop.f32.mrf.mxu0
      %v1398 = vadd.f32 %v1349, %v1397
      %1399 = vmatmul.bf16.gmra.mxu0 %v1190
      %v1400 = vpop.f32.mrf.mxu0
      %v1401 = vadd.f32 %v1352, %v1400
      %v1402 = vpop.f32.mrf.mxu0
      %v1403 = vadd.f32 %v1354, %v1402
      %1404 = vmatmul.bf16.gmra.mxu0 %v1192
      %v1405 = vpop.f32.mrf.mxu0
      %v1406 = vadd.f32 %v1357, %v1405
      %v1407 = vpop.f32.mrf.mxu0
      %v1408 = vadd.f32 %v1359, %v1407
      %1409 = vmatmul.bf16.gmra.mxu0 %v1194
      %v1410 = vpop.f32.mrf.mxu0
      %v1411 = vadd.f32 %v1362, %v1410
      %v1412 = vpop.f32.mrf.mxu0
      %v1413 = vadd.f32 %v1364, %v1412
      %1414 = vmatmul.bf16.gmra.mxu0 %v1196
      %v1415 = vpop.f32.mrf.mxu0
      %v1416 = vadd.f32 %v1367, %v1415
      %v1417 = vpop.f32.mrf.mxu0
      %v1418 = vadd.f32 %v1369, %v1417
      %1419 = vmatmul.bf16.gmra.mxu0 %v1198
      %v1420 = vpop.f32.mrf.mxu0
      %v1421 = vadd.f32 %v1372, %v1420
      %v1422 = vpop.f32.mrf.mxu0
      %v1423 = vadd.f32 %v1374, %v1422
      %1424 = vdwg.mxu0
      %v1425 = vmul.f32 %v1386, %v820
      %v1426 = vmul.f32 %v1388, %v822
      %v1427 = vmul.f32 %v1391, %v825
      %v1428 = vmul.f32 %v1393, %v827
      %v1429 = vmul.f32 %v1396, %v830
      %v1430 = vmul.f32 %v1398, %v832
      %v1431 = vmul.f32 %v1401, %v835
      %v1432 = vmul.f32 %v1403, %v837
      %v1433 = vmul.f32 %v1406, %v840
      %v1434 = vmul.f32 %v1408, %v842
      %v1435 = vmul.f32 %v1411, %v845
      %v1436 = vmul.f32 %v1413, %v847
      %v1437 = vmul.f32 %v1416, %v850
      %v1438 = vmul.f32 %v1418, %v852
      %v1439 = vmul.f32 %v1421, %v855
      %v1440 = vmul.f32 %v1423, %v857
      %v1441 = vmax.f32 %v1425, 0.0
      %v1442 = vmax.f32 %v1426, 0.0
      %v1443 = vmax.f32 %v1427, 0.0
      %v1444 = vmax.f32 %v1428, 0.0
      %v1445 = vmax.f32 %v1429, 0.0
      %v1446 = vmax.f32 %v1430, 0.0
      %v1447 = vmax.f32 %v1431, 0.0
      %v1448 = vmax.f32 %v1432, 0.0
      %v1449 = vmax.f32 %v1433, 0.0
      %v1450 = vmax.f32 %v1434, 0.0
      %v1451 = vmax.f32 %v1435, 0.0
      %v1452 = vmax.f32 %v1436, 0.0
      %v1453 = vmax.f32 %v1437, 0.0
      %v1454 = vmax.f32 %v1438, 0.0
      %v1455 = vmax.f32 %v1439, 0.0
      %v1456 = vmax.f32 %v1440, 0.0
      %v1457 = vrsqrt.pop %v1441
      %v1458 = vmul.f32 %v1457, %v1441
      %v1459 = vmul.f32 %v1458, %v1457
      %v1460 = vmul.f32 0.5, %v1459
      %v1461 = vsub.f32 1.5, %v1460
      %v1462 = vmul.f32 %v1457, %v1461
      %v1463 = vmul.f32 %v1441, %v1462
      %vm1464 = vcmp.eq.f32.partialorder %v1441, inf
      %v1465 = vsel %vm1464, %v1441, %v1463
      %vm1466 = vcmp.eq.f32.partialorder %v1441, 0.0
      %v1467 = vand.u32 %v1441, 2147483648
      %v1468 = vsel %vm1466, %v1467, %v1465
      %v1469 = vrsqrt.pop %v1442
      %v1470 = vmul.f32 %v1469, %v1442
      %v1471 = vmul.f32 %v1470, %v1469
      %v1472 = vmul.f32 0.5, %v1471
      %v1473 = vsub.f32 1.5, %v1472
      %v1474 = vmul.f32 %v1469, %v1473
      %v1475 = vmul.f32 %v1442, %v1474
      %vm1476 = vcmp.eq.f32.partialorder %v1442, inf
      %v1477 = vsel %vm1476, %v1442, %v1475
      %vm1478 = vcmp.eq.f32.partialorder %v1442, 0.0
      %v1479 = vand.u32 %v1442, 2147483648
      %v1480 = vsel %vm1478, %v1479, %v1477
      %v1481 = vrsqrt.pop %v1443
      %v1482 = vmul.f32 %v1481, %v1443
      %v1483 = vmul.f32 %v1482, %v1481
      %v1484 = vmul.f32 0.5, %v1483
      %v1485 = vsub.f32 1.5, %v1484
      %v1486 = vmul.f32 %v1481, %v1485
      %v1487 = vmul.f32 %v1443, %v1486
      %vm1488 = vcmp.eq.f32.partialorder %v1443, inf
      %v1489 = vsel %vm1488, %v1443, %v1487
      %vm1490 = vcmp.eq.f32.partialorder %v1443, 0.0
      %v1491 = vand.u32 %v1443, 2147483648
      %v1492 = vsel %vm1490, %v1491, %v1489
      %v1493 = vrsqrt.pop %v1444
      %v1494 = vmul.f32 %v1493, %v1444
      %v1495 = vmul.f32 %v1494, %v1493
      %v1496 = vmul.f32 0.5, %v1495
      %v1497 = vsub.f32 1.5, %v1496
      %v1498 = vmul.f32 %v1493, %v1497
      %v1499 = vmul.f32 %v1444, %v1498
      %vm1500 = vcmp.eq.f32.partialorder %v1444, inf
      %v1501 = vsel %vm1500, %v1444, %v1499
      %vm1502 = vcmp.eq.f32.partialorder %v1444, 0.0
      %v1503 = vand.u32 %v1444, 2147483648
      %v1504 = vsel %vm1502, %v1503, %v1501
      %v1505 = vrsqrt.pop %v1445
      %v1506 = vmul.f32 %v1505, %v1445
      %v1507 = vmul.f32 %v1506, %v1505
      %v1508 = vmul.f32 0.5, %v1507
      %v1509 = vsub.f32 1.5, %v1508
      %v1510 = vmul.f32 %v1505, %v1509
      %v1511 = vmul.f32 %v1445, %v1510
      %vm1512 = vcmp.eq.f32.partialorder %v1445, inf
      %v1513 = vsel %vm1512, %v1445, %v1511
      %vm1514 = vcmp.eq.f32.partialorder %v1445, 0.0
      %v1515 = vand.u32 %v1445, 2147483648
      %v1516 = vsel %vm1514, %v1515, %v1513
      %v1517 = vrsqrt.pop %v1446
      %v1518 = vmul.f32 %v1517, %v1446
      %v1519 = vmul.f32 %v1518, %v1517
      %v1520 = vmul.f32 0.5, %v1519
      %v1521 = vsub.f32 1.5, %v1520
      %v1522 = vmul.f32 %v1517, %v1521
      %v1523 = vmul.f32 %v1446, %v1522
      %vm1524 = vcmp.eq.f32.partialorder %v1446, inf
      %v1525 = vsel %vm1524, %v1446, %v1523
      %vm1526 = vcmp.eq.f32.partialorder %v1446, 0.0
      %v1527 = vand.u32 %v1446, 2147483648
      %v1528 = vsel %vm1526, %v1527, %v1525
      %v1529 = vrsqrt.pop %v1447
      %v1530 = vmul.f32 %v1529, %v1447
      %v1531 = vmul.f32 %v1530, %v1529
      %v1532 = vmul.f32 0.5, %v1531
      %v1533 = vsub.f32 1.5, %v1532
      %v1534 = vmul.f32 %v1529, %v1533
      %v1535 = vmul.f32 %v1447, %v1534
      %vm1536 = vcmp.eq.f32.partialorder %v1447, inf
      %v1537 = vsel %vm1536, %v1447, %v1535
      %vm1538 = vcmp.eq.f32.partialorder %v1447, 0.0
      %v1539 = vand.u32 %v1447, 2147483648
      %v1540 = vsel %vm1538, %v1539, %v1537
      %v1541 = vrsqrt.pop %v1448
      %v1542 = vmul.f32 %v1541, %v1448
      %v1543 = vmul.f32 %v1542, %v1541
      %v1544 = vmul.f32 0.5, %v1543
      %v1545 = vsub.f32 1.5, %v1544
      %v1546 = vmul.f32 %v1541, %v1545
      %v1547 = vmul.f32 %v1448, %v1546
      %vm1548 = vcmp.eq.f32.partialorder %v1448, inf
      %v1549 = vsel %vm1548, %v1448, %v1547
      %vm1550 = vcmp.eq.f32.partialorder %v1448, 0.0
      %v1551 = vand.u32 %v1448, 2147483648
      %v1552 = vsel %vm1550, %v1551, %v1549
      %v1553 = vrsqrt.pop %v1449
      %v1554 = vmul.f32 %v1553, %v1449
      %v1555 = vmul.f32 %v1554, %v1553
      %v1556 = vmul.f32 0.5, %v1555
      %v1557 = vsub.f32 1.5, %v1556
      %v1558 = vmul.f32 %v1553, %v1557
      %v1559 = vmul.f32 %v1449, %v1558
      %vm1560 = vcmp.eq.f32.partialorder %v1449, inf
      %v1561 = vsel %vm1560, %v1449, %v1559
      %vm1562 = vcmp.eq.f32.partialorder %v1449, 0.0
      %v1563 = vand.u32 %v1449, 2147483648
      %v1564 = vsel %vm1562, %v1563, %v1561
      %v1565 = vrsqrt.pop %v1450
      %v1566 = vmul.f32 %v1565, %v1450
      %v1567 = vmul.f32 %v1566, %v1565
      %v1568 = vmul.f32 0.5, %v1567
      %v1569 = vsub.f32 1.5, %v1568
      %v1570 = vmul.f32 %v1565, %v1569
      %v1571 = vmul.f32 %v1450, %v1570
      %vm1572 = vcmp.eq.f32.partialorder %v1450, inf
      %v1573 = vsel %vm1572, %v1450, %v1571
      %vm1574 = vcmp.eq.f32.partialorder %v1450, 0.0
      %v1575 = vand.u32 %v1450, 2147483648
      %v1576 = vsel %vm1574, %v1575, %v1573
      %v1577 = vrsqrt.pop %v1451
      %v1578 = vmul.f32 %v1577, %v1451
      %v1579 = vmul.f32 %v1578, %v1577
      %v1580 = vmul.f32 0.5, %v1579
      %v1581 = vsub.f32 1.5, %v1580
      %v1582 = vmul.f32 %v1577, %v1581
      %v1583 = vmul.f32 %v1451, %v1582
      %vm1584 = vcmp.eq.f32.partialorder %v1451, inf
      %v1585 = vsel %vm1584, %v1451, %v1583
      %vm1586 = vcmp.eq.f32.partialorder %v1451, 0.0
      %v1587 = vand.u32 %v1451, 2147483648
      %v1588 = vsel %vm1586, %v1587, %v1585
      %v1589 = vrsqrt.pop %v1452
      %v1590 = vmul.f32 %v1589, %v1452
      %v1591 = vmul.f32 %v1590, %v1589
      %v1592 = vmul.f32 0.5, %v1591
      %v1593 = vsub.f32 1.5, %v1592
      %v1594 = vmul.f32 %v1589, %v1593
      %v1595 = vmul.f32 %v1452, %v1594
      %vm1596 = vcmp.eq.f32.partialorder %v1452, inf
      %v1597 = vsel %vm1596, %v1452, %v1595
      %vm1598 = vcmp.eq.f32.partialorder %v1452, 0.0
      %v1599 = vand.u32 %v1452, 2147483648
      %v1600 = vsel %vm1598, %v1599, %v1597
      %v1601 = vrsqrt.pop %v1453
      %v1602 = vmul.f32 %v1601, %v1453
      %v1603 = vmul.f32 %v1602, %v1601
      %v1604 = vmul.f32 0.5, %v1603
      %v1605 = vsub.f32 1.5, %v1604
      %v1606 = vmul.f32 %v1601, %v1605
      %v1607 = vmul.f32 %v1453, %v1606
      %vm1608 = vcmp.eq.f32.partialorder %v1453, inf
      %v1609 = vsel %vm1608, %v1453, %v1607
      %vm1610 = vcmp.eq.f32.partialorder %v1453, 0.0
      %v1611 = vand.u32 %v1453, 2147483648
      %v1612 = vsel %vm1610, %v1611, %v1609
      %v1613 = vrsqrt.pop %v1454
      %v1614 = vmul.f32 %v1613, %v1454
      %v1615 = vmul.f32 %v1614, %v1613
      %v1616 = vmul.f32 0.5, %v1615
      %v1617 = vsub.f32 1.5, %v1616
      %v1618 = vmul.f32 %v1613, %v1617
      %v1619 = vmul.f32 %v1454, %v1618
      %vm1620 = vcmp.eq.f32.partialorder %v1454, inf
      %v1621 = vsel %vm1620, %v1454, %v1619
      %vm1622 = vcmp.eq.f32.partialorder %v1454, 0.0
      %v1623 = vand.u32 %v1454, 2147483648
      %v1624 = vsel %vm1622, %v1623, %v1621
      %v1625 = vrsqrt.pop %v1455
      %v1626 = vmul.f32 %v1625, %v1455
      %v1627 = vmul.f32 %v1626, %v1625
      %v1628 = vmul.f32 0.5, %v1627
      %v1629 = vsub.f32 1.5, %v1628
      %v1630 = vmul.f32 %v1625, %v1629
      %v1631 = vmul.f32 %v1455, %v1630
      %vm1632 = vcmp.eq.f32.partialorder %v1455, inf
      %v1633 = vsel %vm1632, %v1455, %v1631
      %vm1634 = vcmp.eq.f32.partialorder %v1455, 0.0
      %v1635 = vand.u32 %v1455, 2147483648
      %v1636 = vsel %vm1634, %v1635, %v1633
      %v1637 = vrsqrt.pop %v1456
      %v1638 = vmul.f32 %v1637, %v1456
      %v1639 = vmul.f32 %v1638, %v1637
      %v1640 = vmul.f32 0.5, %v1639
      %v1641 = vsub.f32 1.5, %v1640
      %v1642 = vmul.f32 %v1637, %v1641
      %v1643 = vmul.f32 %v1456, %v1642
      %vm1644 = vcmp.eq.f32.partialorder %v1456, inf
      %v1645 = vsel %vm1644, %v1456, %v1643
      %vm1646 = vcmp.eq.f32.partialorder %v1456, 0.0
      %v1647 = vand.u32 %v1456, 2147483648
      %v1648 = vsel %vm1646, %v1647, %v1645
      %v1649 = vsub.f32 0.0, %v1425
      %v1650 = vsub.f32 0.0, %v1426
      %v1651 = vsub.f32 0.0, %v1427
      %v1652 = vsub.f32 0.0, %v1428
      %v1653 = vsub.f32 0.0, %v1429
      %v1654 = vsub.f32 0.0, %v1430
      %v1655 = vsub.f32 0.0, %v1431
      %v1656 = vsub.f32 0.0, %v1432
      %v1657 = vsub.f32 0.0, %v1433
      %v1658 = vsub.f32 0.0, %v1434
      %v1659 = vsub.f32 0.0, %v1435
      %v1660 = vsub.f32 0.0, %v1436
      %v1661 = vsub.f32 0.0, %v1437
      %v1662 = vsub.f32 0.0, %v1438
      %v1663 = vsub.f32 0.0, %v1439
      %v1664 = vsub.f32 0.0, %v1440
      %v1665 = vmax.f32 %v1649, 0.0
      %v1666 = vmax.f32 %v1650, 0.0
      %v1667 = vmax.f32 %v1651, 0.0
      %v1668 = vmax.f32 %v1652, 0.0
      %v1669 = vmax.f32 %v1653, 0.0
      %v1670 = vmax.f32 %v1654, 0.0
      %v1671 = vmax.f32 %v1655, 0.0
      %v1672 = vmax.f32 %v1656, 0.0
      %v1673 = vmax.f32 %v1657, 0.0
      %v1674 = vmax.f32 %v1658, 0.0
      %v1675 = vmax.f32 %v1659, 0.0
      %v1676 = vmax.f32 %v1660, 0.0
      %v1677 = vmax.f32 %v1661, 0.0
      %v1678 = vmax.f32 %v1662, 0.0
      %v1679 = vmax.f32 %v1663, 0.0
      %v1680 = vmax.f32 %v1664, 0.0
      %v1681 = vrsqrt.pop %v1665
      %v1682 = vmul.f32 %v1681, %v1665
      %v1683 = vmul.f32 %v1682, %v1681
      %v1684 = vmul.f32 0.5, %v1683
      %v1685 = vsub.f32 1.5, %v1684
      %v1686 = vmul.f32 %v1681, %v1685
      %v1687 = vmul.f32 %v1665, %v1686
      %vm1688 = vcmp.eq.f32.partialorder %v1665, inf
      %v1689 = vsel %vm1688, %v1665, %v1687
      %vm1690 = vcmp.eq.f32.partialorder %v1665, 0.0
      %v1691 = vand.u32 %v1665, 2147483648
      %v1692 = vsel %vm1690, %v1691, %v1689
      %v1693 = vrsqrt.pop %v1666
      %v1694 = vmul.f32 %v1693, %v1666
      %v1695 = vmul.f32 %v1694, %v1693
      %v1696 = vmul.f32 0.5, %v1695
      %v1697 = vsub.f32 1.5, %v1696
      %v1698 = vmul.f32 %v1693, %v1697
      %v1699 = vmul.f32 %v1666, %v1698
      %vm1700 = vcmp.eq.f32.partialorder %v1666, inf
      %v1701 = vsel %vm1700, %v1666, %v1699
      %vm1702 = vcmp.eq.f32.partialorder %v1666, 0.0
      %v1703 = vand.u32 %v1666, 2147483648
      %v1704 = vsel %vm1702, %v1703, %v1701
      %v1705 = vrsqrt.pop %v1667
      %v1706 = vmul.f32 %v1705, %v1667
      %v1707 = vmul.f32 %v1706, %v1705
      %v1708 = vmul.f32 0.5, %v1707
      %v1709 = vsub.f32 1.5, %v1708
      %v1710 = vmul.f32 %v1705, %v1709
      %v1711 = vmul.f32 %v1667, %v1710
      %vm1712 = vcmp.eq.f32.partialorder %v1667, inf
      %v1713 = vsel %vm1712, %v1667, %v1711
      %vm1714 = vcmp.eq.f32.partialorder %v1667, 0.0
      %v1715 = vand.u32 %v1667, 2147483648
      %v1716 = vsel %vm1714, %v1715, %v1713
      %v1717 = vrsqrt.pop %v1668
      %v1718 = vmul.f32 %v1717, %v1668
      %v1719 = vmul.f32 %v1718, %v1717
      %v1720 = vmul.f32 0.5, %v1719
      %v1721 = vsub.f32 1.5, %v1720
      %v1722 = vmul.f32 %v1717, %v1721
      %v1723 = vmul.f32 %v1668, %v1722
      %vm1724 = vcmp.eq.f32.partialorder %v1668, inf
      %v1725 = vsel %vm1724, %v1668, %v1723
      %vm1726 = vcmp.eq.f32.partialorder %v1668, 0.0
      %v1727 = vand.u32 %v1668, 2147483648
      %v1728 = vsel %vm1726, %v1727, %v1725
      %v1729 = vrsqrt.pop %v1669
      %v1730 = vmul.f32 %v1729, %v1669
      %v1731 = vmul.f32 %v1730, %v1729
      %v1732 = vmul.f32 0.5, %v1731
      %v1733 = vsub.f32 1.5, %v1732
      %v1734 = vmul.f32 %v1729, %v1733
      %v1735 = vmul.f32 %v1669, %v1734
      %vm1736 = vcmp.eq.f32.partialorder %v1669, inf
      %v1737 = vsel %vm1736, %v1669, %v1735
      %vm1738 = vcmp.eq.f32.partialorder %v1669, 0.0
      %v1739 = vand.u32 %v1669, 2147483648
      %v1740 = vsel %vm1738, %v1739, %v1737
      %v1741 = vrsqrt.pop %v1670
      %v1742 = vmul.f32 %v1741, %v1670
      %v1743 = vmul.f32 %v1742, %v1741
      %v1744 = vmul.f32 0.5, %v1743
      %v1745 = vsub.f32 1.5, %v1744
      %v1746 = vmul.f32 %v1741, %v1745
      %v1747 = vmul.f32 %v1670, %v1746
      %vm1748 = vcmp.eq.f32.partialorder %v1670, inf
      %v1749 = vsel %vm1748, %v1670, %v1747
      %vm1750 = vcmp.eq.f32.partialorder %v1670, 0.0
      %v1751 = vand.u32 %v1670, 2147483648
      %v1752 = vsel %vm1750, %v1751, %v1749
      %v1753 = vrsqrt.pop %v1671
      %v1754 = vmul.f32 %v1753, %v1671
      %v1755 = vmul.f32 %v1754, %v1753
      %v1756 = vmul.f32 0.5, %v1755
      %v1757 = vsub.f32 1.5, %v1756
      %v1758 = vmul.f32 %v1753, %v1757
      %v1759 = vmul.f32 %v1671, %v1758
      %vm1760 = vcmp.eq.f32.partialorder %v1671, inf
      %v1761 = vsel %vm1760, %v1671, %v1759
      %vm1762 = vcmp.eq.f32.partialorder %v1671, 0.0
      %v1763 = vand.u32 %v1671, 2147483648
      %v1764 = vsel %vm1762, %v1763, %v1761
      %v1765 = vrsqrt.pop %v1672
      %v1766 = vmul.f32 %v1765, %v1672
      %v1767 = vmul.f32 %v1766, %v1765
      %v1768 = vmul.f32 0.5, %v1767
      %v1769 = vsub.f32 1.5, %v1768
      %v1770 = vmul.f32 %v1765, %v1769
      %v1771 = vmul.f32 %v1672, %v1770
      %vm1772 = vcmp.eq.f32.partialorder %v1672, inf
      %v1773 = vsel %vm1772, %v1672, %v1771
      %vm1774 = vcmp.eq.f32.partialorder %v1672, 0.0
      %v1775 = vand.u32 %v1672, 2147483648
      %v1776 = vsel %vm1774, %v1775, %v1773
      %v1777 = vrsqrt.pop %v1673
      %v1778 = vmul.f32 %v1777, %v1673
      %v1779 = vmul.f32 %v1778, %v1777
      %v1780 = vmul.f32 0.5, %v1779
      %v1781 = vsub.f32 1.5, %v1780
      %v1782 = vmul.f32 %v1777, %v1781
      %v1783 = vmul.f32 %v1673, %v1782
      %vm1784 = vcmp.eq.f32.partialorder %v1673, inf
      %v1785 = vsel %vm1784, %v1673, %v1783
      %vm1786 = vcmp.eq.f32.partialorder %v1673, 0.0
      %v1787 = vand.u32 %v1673, 2147483648
      %v1788 = vsel %vm1786, %v1787, %v1785
      %v1789 = vrsqrt.pop %v1674
      %v1790 = vmul.f32 %v1789, %v1674
      %v1791 = vmul.f32 %v1790, %v1789
      %v1792 = vmul.f32 0.5, %v1791
      %v1793 = vsub.f32 1.5, %v1792
      %v1794 = vmul.f32 %v1789, %v1793
      %v1795 = vmul.f32 %v1674, %v1794
      %vm1796 = vcmp.eq.f32.partialorder %v1674, inf
      %v1797 = vsel %vm1796, %v1674, %v1795
      %vm1798 = vcmp.eq.f32.partialorder %v1674, 0.0
      %v1799 = vand.u32 %v1674, 2147483648
      %v1800 = vsel %vm1798, %v1799, %v1797
      %v1801 = vrsqrt.pop %v1675
      %v1802 = vmul.f32 %v1801, %v1675
      %v1803 = vmul.f32 %v1802, %v1801
      %v1804 = vmul.f32 0.5, %v1803
      %v1805 = vsub.f32 1.5, %v1804
      %v1806 = vmul.f32 %v1801, %v1805
      %v1807 = vmul.f32 %v1675, %v1806
      %vm1808 = vcmp.eq.f32.partialorder %v1675, inf
      %v1809 = vsel %vm1808, %v1675, %v1807
      %vm1810 = vcmp.eq.f32.partialorder %v1675, 0.0
      %v1811 = vand.u32 %v1675, 2147483648
      %v1812 = vsel %vm1810, %v1811, %v1809
      %v1813 = vrsqrt.pop %v1676
      %v1814 = vmul.f32 %v1813, %v1676
      %v1815 = vmul.f32 %v1814, %v1813
      %v1816 = vmul.f32 0.5, %v1815
      %v1817 = vsub.f32 1.5, %v1816
      %v1818 = vmul.f32 %v1813, %v1817
      %v1819 = vmul.f32 %v1676, %v1818
      %vm1820 = vcmp.eq.f32.partialorder %v1676, inf
      %v1821 = vsel %vm1820, %v1676, %v1819
      %vm1822 = vcmp.eq.f32.partialorder %v1676, 0.0
      %v1823 = vand.u32 %v1676, 2147483648
      %v1824 = vsel %vm1822, %v1823, %v1821
      %v1825 = vrsqrt.pop %v1677
      %v1826 = vmul.f32 %v1825, %v1677
      %v1827 = vmul.f32 %v1826, %v1825
      %v1828 = vmul.f32 0.5, %v1827
      %v1829 = vsub.f32 1.5, %v1828
      %v1830 = vmul.f32 %v1825, %v1829
      %v1831 = vmul.f32 %v1677, %v1830
      %vm1832 = vcmp.eq.f32.partialorder %v1677, inf
      %v1833 = vsel %vm1832, %v1677, %v1831
      %vm1834 = vcmp.eq.f32.partialorder %v1677, 0.0
      %v1835 = vand.u32 %v1677, 2147483648
      %v1836 = vsel %vm1834, %v1835, %v1833
      %v1837 = vrsqrt.pop %v1678
      %v1838 = vmul.f32 %v1837, %v1678
      %v1839 = vmul.f32 %v1838, %v1837
      %v1840 = vmul.f32 0.5, %v1839
      %v1841 = vsub.f32 1.5, %v1840
      %v1842 = vmul.f32 %v1837, %v1841
      %v1843 = vmul.f32 %v1678, %v1842
      %vm1844 = vcmp.eq.f32.partialorder %v1678, inf
      %v1845 = vsel %vm1844, %v1678, %v1843
      %vm1846 = vcmp.eq.f32.partialorder %v1678, 0.0
      %v1847 = vand.u32 %v1678, 2147483648
      %v1848 = vsel %vm1846, %v1847, %v1845
      %v1849 = vrsqrt.pop %v1679
      %v1850 = vmul.f32 %v1849, %v1679
      %v1851 = vmul.f32 %v1850, %v1849
      %v1852 = vmul.f32 0.5, %v1851
      %v1853 = vsub.f32 1.5, %v1852
      %v1854 = vmul.f32 %v1849, %v1853
      %v1855 = vmul.f32 %v1679, %v1854
      %vm1856 = vcmp.eq.f32.partialorder %v1679, inf
      %v1857 = vsel %vm1856, %v1679, %v1855
      %vm1858 = vcmp.eq.f32.partialorder %v1679, 0.0
      %v1859 = vand.u32 %v1679, 2147483648
      %v1860 = vsel %vm1858, %v1859, %v1857
      %v1861 = vrsqrt.pop %v1680
      %v1862 = vmul.f32 %v1861, %v1680
      %v1863 = vmul.f32 %v1862, %v1861
      %v1864 = vmul.f32 0.5, %v1863
      %v1865 = vsub.f32 1.5, %v1864
      %v1866 = vmul.f32 %v1861, %v1865
      %v1867 = vmul.f32 %v1680, %v1866
      %vm1868 = vcmp.eq.f32.partialorder %v1680, inf
      %v1869 = vsel %vm1868, %v1680, %v1867
      %vm1870 = vcmp.eq.f32.partialorder %v1680, 0.0
      %v1871 = vand.u32 %v1680, 2147483648
      %v1872 = vsel %vm1870, %v1871, %v1869
      %v1873 = vsub.f32 %v1468, %v1692
      %v1874 = vsub.f32 %v1480, %v1704
      %v1875 = vsub.f32 %v1492, %v1716
      %v1876 = vsub.f32 %v1504, %v1728
      %v1877 = vsub.f32 %v1516, %v1740
      %v1878 = vsub.f32 %v1528, %v1752
      %v1879 = vsub.f32 %v1540, %v1764
      %v1880 = vsub.f32 %v1552, %v1776
      %v1881 = vsub.f32 %v1564, %v1788
      %v1882 = vsub.f32 %v1576, %v1800
      %v1883 = vsub.f32 %v1588, %v1812
      %v1884 = vsub.f32 %v1600, %v1824
      %v1885 = vsub.f32 %v1612, %v1836
      %v1886 = vsub.f32 %v1624, %v1848
      %v1887 = vsub.f32 %v1636, %v1860
      %v1888 = vsub.f32 %v1648, %v1872
      %v1889 = vadd.f32 %v1873, %v869
      %v1890 = vadd.f32 %v1874, %v871
      %v1891 = vadd.f32 %v1875, %v874
      %v1892 = vadd.f32 %v1876, %v876
      %v1893 = vadd.f32 %v1877, %v879
      %v1894 = vadd.f32 %v1878, %v881
      %v1895 = vadd.f32 %v1879, %v884
      %v1896 = vadd.f32 %v1880, %v886
      %v1897 = vadd.f32 %v1881, %v889
      %v1898 = vadd.f32 %v1882, %v891
      %v1899 = vadd.f32 %v1883, %v894
      %v1900 = vadd.f32 %v1884, %v896
      %v1901 = vadd.f32 %v1885, %v899
      %v1902 = vadd.f32 %v1886, %v901
      %v1903 = vadd.f32 %v1887, %v904
      %v1904 = vadd.f32 %v1888, %v906
      %v1905 = vmax.f32 %v1889, 0.0
      %v1906 = vmax.f32 %v1890, 0.0
      %v1907 = vmax.f32 %v1891, 0.0
      %v1908 = vmax.f32 %v1892, 0.0
      %v1909 = vmax.f32 %v1893, 0.0
      %v1910 = vmax.f32 %v1894, 0.0
      %v1911 = vmax.f32 %v1895, 0.0
      %v1912 = vmax.f32 %v1896, 0.0
      %v1913 = vmax.f32 %v1897, 0.0
      %v1914 = vmax.f32 %v1898, 0.0
      %v1915 = vmax.f32 %v1899, 0.0
      %v1916 = vmax.f32 %v1900, 0.0
      %v1917 = vmax.f32 %v1901, 0.0
      %v1918 = vmax.f32 %v1902, 0.0
      %v1919 = vmax.f32 %v1903, 0.0
      %v1920 = vmax.f32 %v1904, 0.0
      %1921 = vst [vmem:[%s413] sm:$0xff] %v1905
      %1922 = vst [vmem:[%s413 + $0x8] sm:$0xff] %v1906
      %1923 = vst [vmem:[%s413 + $0x10] sm:$0xff] %v1907
      %1924 = vst [vmem:[%s413 + $0x18] sm:$0xff] %v1908
      %1925 = vst [vmem:[%s413 + $0x20] sm:$0xff] %v1909
      %1926 = vst [vmem:[%s413 + $0x28] sm:$0xff] %v1910
      %1927 = vst [vmem:[%s413 + $0x30] sm:$0xff] %v1911
      %1928 = vst [vmem:[%s413 + $0x38] sm:$0xff] %v1912
      %1929 = vst [vmem:[%s413 + $0x40] sm:$0xff] %v1913
      %1930 = vst [vmem:[%s413 + $0x48] sm:$0xff] %v1914
      %1931 = vst [vmem:[%s413 + $0x50] sm:$0xff] %v1915
      %1932 = vst [vmem:[%s413 + $0x58] sm:$0xff] %v1916
      %1933 = vst [vmem:[%s413 + $0x60] sm:$0xff] %v1917
      %1934 = vst [vmem:[%s413 + $0x68] sm:$0xff] %v1918
      %1935 = vst [vmem:[%s413 + $0x70] sm:$0xff] %v1919
      %1936 = vst [vmem:[%s413 + $0x78] sm:$0xff] %v1920
      %v1937 = vld [vmem:[%s8] sm:$0xff]
      %v1938 = vld [vmem:[%s8 + $0x8] sm:$0xff]
      %v1939 = vld [vmem:[%s8 + $0x10] sm:$0xff]
      %v1940 = vld [vmem:[%s8 + $0x18] sm:$0xff]
      %v1941 = vld [vmem:[%s8 + $0x20] sm:$0xff]
      %v1942 = vld [vmem:[%s8 + $0x28] sm:$0xff]
      %v1943 = vld [vmem:[%s8 + $0x30] sm:$0xff]
      %v1944 = vld [vmem:[%s8 + $0x38] sm:$0xff]
      %v1945 = vld [vmem:[%s8 + $0x40] sm:$0xff]
      %v1946 = vld [vmem:[%s8 + $0x48] sm:$0xff]
      %v1947 = vld [vmem:[%s8 + $0x50] sm:$0xff]
      %v1948 = vld [vmem:[%s8 + $0x58] sm:$0xff]
      %v1949 = vld [vmem:[%s8 + $0x60] sm:$0xff]
      %v1950 = vld [vmem:[%s8 + $0x68] sm:$0xff]
      %v1951 = vld [vmem:[%s8 + $0x70] sm:$0xff]
      %v1952 = vld [vmem:[%s8 + $0x78] sm:$0xff]
      %1953 = vmatpush.msra.mxu0 %v1952
      %1954 = vmatpush.msra.mxu0 %v1951
      %1955 = vmatpush.msra.mxu0 %v1950
      %1956 = vmatpush.msra.mxu0 %v1949
      %1957 = vmatpush.msra.mxu0 %v1948
      %1958 = vmatpush.msra.mxu0 %v1947
      %1959 = vmatpush.msra.mxu0 %v1946
      %1960 = vmatpush.msra.mxu0 %v1945
      %1961 = vmatpush.msra.mxu0 %v1944
      %1962 = vmatpush.msra.mxu0 %v1943
      %1963 = vmatpush.msra.mxu0 %v1942
      %1964 = vmatpush.msra.mxu0 %v1941
      %1965 = vmatpush.msra.mxu0 %v1940
      %1966 = vmatpush.msra.mxu0 %v1939
      %1967 = vmatpush.msra.mxu0 %v1938
      %1968 = vmatpush.msra.mxu0 %v1937
      %1969 = vmatmul.f32.gmra.mxu0 %v1905
      %v1970 = vpop.f32.mrf.mxu0
      %v1971 = vadd.f32 0.0, %v1970
      %1972 = vmatmul.f32.gmra.mxu0 %v1906
      %v1973 = vpop.f32.mrf.mxu0
      %v1974 = vadd.f32 0.0, %v1973
      %1975 = vmatmul.f32.gmra.mxu0 %v1907
      %v1976 = vpop.f32.mrf.mxu0
      %v1977 = vadd.f32 0.0, %v1976
      %1978 = vmatmul.f32.gmra.mxu0 %v1908
      %v1979 = vpop.f32.mrf.mxu0
      %v1980 = vadd.f32 0.0, %v1979
      %1981 = vmatmul.f32.gmra.mxu0 %v1909
      %v1982 = vpop.f32.mrf.mxu0
      %v1983 = vadd.f32 0.0, %v1982
      %1984 = vmatmul.f32.gmra.mxu0 %v1910
      %v1985 = vpop.f32.mrf.mxu0
      %v1986 = vadd.f32 0.0, %v1985
      %1987 = vmatmul.f32.gmra.mxu0 %v1911
      %v1988 = vpop.f32.mrf.mxu0
      %v1989 = vadd.f32 0.0, %v1988
      %1990 = vmatmul.f32.gmra.mxu0 %v1912
      %v1991 = vpop.f32.mrf.mxu0
      %v1992 = vadd.f32 0.0, %v1991
      %1993 = vmatmul.f32.gmra.mxu0 %v1913
      %v1994 = vpop.f32.mrf.mxu0
      %v1995 = vadd.f32 0.0, %v1994
      %1996 = vmatmul.f32.gmra.mxu0 %v1914
      %v1997 = vpop.f32.mrf.mxu0
      %v1998 = vadd.f32 0.0, %v1997
      %1999 = vmatmul.f32.gmra.mxu0 %v1915
      %v2000 = vpop.f32.mrf.mxu0
      %v2001 = vadd.f32 0.0, %v2000
      %2002 = vmatmul.f32.gmra.mxu0 %v1916
      %v2003 = vpop.f32.mrf.mxu0
      %v2004 = vadd.f32 0.0, %v2003
      %2005 = vmatmul.f32.gmra.mxu0 %v1917
      %v2006 = vpop.f32.mrf.mxu0
      %v2007 = vadd.f32 0.0, %v2006
      %2008 = vmatmul.f32.gmra.mxu0 %v1918
      %v2009 = vpop.f32.mrf.mxu0
      %v2010 = vadd.f32 0.0, %v2009
      %2011 = vmatmul.f32.gmra.mxu0 %v1919
      %v2012 = vpop.f32.mrf.mxu0
      %v2013 = vadd.f32 0.0, %v2012
      %2014 = vmatmul.f32.gmra.mxu0 %v1920
      %v2015 = vpop.f32.mrf.mxu0
      %v2016 = vadd.f32 0.0, %v2015
      %2017 = vdwg.mxu0
      %vm2018 = vcmask 31744
      %2019 = vst.msk [vmem:[%s419] sm:$0xff] %vm2018, %v1971
      %2020 = vst.msk [vmem:[%s419 + $0x8] sm:$0xff] %vm2018, %v1974
      %2021 = vst.msk [vmem:[%s419 + $0x10] sm:$0xff] %vm2018, %v1977
      %2022 = vst.msk [vmem:[%s419 + $0x18] sm:$0xff] %vm2018, %v1980
      %2023 = vst.msk [vmem:[%s419 + $0x20] sm:$0xff] %vm2018, %v1983
      %2024 = vst.msk [vmem:[%s419 + $0x28] sm:$0xff] %vm2018, %v1986
      %2025 = vst.msk [vmem:[%s419 + $0x30] sm:$0xff] %vm2018, %v1989
      %2026 = vst.msk [vmem:[%s419 + $0x38] sm:$0xff] %vm2018, %v1992
      %2027 = vst.msk [vmem:[%s419 + $0x40] sm:$0xff] %vm2018, %v1995
      %2028 = vst.msk [vmem:[%s419 + $0x48] sm:$0xff] %vm2018, %v1998
      %2029 = vst.msk [vmem:[%s419 + $0x50] sm:$0xff] %vm2018, %v2001
      %2030 = vst.msk [vmem:[%s419 + $0x58] sm:$0xff] %vm2018, %v2004
      %2031 = vst.msk [vmem:[%s419 + $0x60] sm:$0xff] %vm2018, %v2007
      %2032 = vst.msk [vmem:[%s419 + $0x68] sm:$0xff] %vm2018, %v2010
      %2033 = vst.msk [vmem:[%s419 + $0x70] sm:$0xff] %vm2018, %v2013
      %2034 = vst.msk [vmem:[%s419 + $0x78] sm:$0xff] %vm2018, %v2016
      %s2035 = smul.u32 16, %s22
      %p2036 = scmp.lt.s32.totalorder %s2035, 63
      %s2037 = scalar_select %p2036, %s2035, 63
      %s2038 = smul.addr %s2037, 8
      %s2039 = scalar_lea.vmem %s9, %s2038
      %s2040 = smul.u32 16, %s22
      %p2041 = scmp.lt.s32.totalorder %s2040, 63
      %s2042 = scalar_select %p2041, %s2040, 63
      %s2043 = smul.addr %s2042, 8
      %s2044 = scalar_lea.vmem %s10, %s2043
      // Predicated region
      $region61: #{grit_layer.2} parent=55 // pred_check
        %p2045 = pneg %p244
      $region62: #{grit_layer.2} parent=55 // pred_check_branch
        %2047 = sbr.rel (%p2045) target = $region64
      $region63: #{grit_layer.2} parent=55 // pred_region
        %s2048 = smul.u32 16, %s22
      $region64: #{grit_layer.2} parent=55 // pred_fallthru
        _
      // Predicated region
      $region65: #{grit_layer.2} parent=55 // pred_check
        %p2049 = pneg %p270
      $region66: #{grit_layer.2} parent=55 // pred_check_branch
        %2051 = sbr.rel (%p2049) target = $region68
      $region67: #{grit_layer.2} parent=55 // pred_region
        %s2052 = smul.u32 16, %s22
      $region68: #{grit_layer.2} parent=55 // pred_fallthru
        _
    $region56: #{grit_layer.2} parent=5 // pred_fallthru
      _
    %p2053 = scmp.le.s32.totalorder 2, %s17
    // Predicated region
    $region69: #{grit_layer.2} parent=5 // pred_check
      %p2054 = pneg %p2053
    $region70: #{grit_layer.2} parent=5 // pred_check_branch
      %2056 = sbr.rel (%p2054) target = $region72
    $region71: #{grit_layer.2} parent=5 // pred_region
      %s2057 = ssub.s32 %s17, 2
      // Predicated region
      $region73: #{grit_layer.2} parent=71 // pred_check
        %p2058 = pneg %p250
      $region74: #{grit_layer.2} parent=71 // pred_check_branch
        %2060 = sbr.rel (%p2058) target = $region76
      $region75: #{grit_layer.2} parent=71 // pred_region
        %s2061 = smul.u32 16, %s23
        %p2062 = scmp.lt.s32.totalorder %s2061, 63
        %s2063 = scalar_select %p2062, %s2061, 63
        %s2064 = smul.addr %s2063, 8
        %s2065 = scalar_lea.vmem %s9, %s2064
      $region76: #{grit_layer.2} parent=71 // pred_fallthru
        _
      // Predicated region
      $region77: #{grit_layer.2} parent=71 // pred_check
        %p2066 = pneg %p276
      $region78: #{grit_layer.2} parent=71 // pred_check_branch
        %2068 = sbr.rel (%p2066) target = $region80
      $region79: #{grit_layer.2} parent=71 // pred_region
        %s2069 = smul.u32 16, %s23
        %p2070 = scmp.lt.s32.totalorder %s2069, 63
        %s2071 = scalar_select %p2070, %s2069, 63
        %s2072 = smul.addr %s2071, 8
        %s2073 = scalar_lea.vmem %s10, %s2072
      $region80: #{grit_layer.2} parent=71 // pred_fallthru
        _
    $region72: #{grit_layer.2} parent=5 // pred_fallthru
      _
  $region6: #{grit_layer.2} parent=0 // loop_footer
    %s21 = sadd.s32 1, %s17
  $region7: #{grit_layer.2} parent=0 // loop_footer_branch
    %16 = sbr.rel target = $region3
  $region8: #{grit_layer.2} parent=0 // loop_exit
    _

// kernel: grit_layer.3
$region0: #{grit_layer.3}
  #allocation0 [shape = 'u32[]', space=smem, size = 0x4, offset = 0x4, fixed_abs, tag = 'smem constant byte address 0x4 - core index']
  #allocation1 [shape = 'u32[72,128]{1,0:T(1,128)}', space=vmem, size = 0x9000, scoped, tag = 'internal scratch']
  #allocation2 [shape = 'bf16[128,128]{1,0:T(8,128)(2,1)}', space=vmem, size = 0x8000, scoped, tag = 'scratch operand']
  #allocation3 [shape = 'f32[128,256]{1,0:T(8,128)}', space=vmem, size = 0x20000, scoped, tag = 'scratch operand']
  %s0 = inlined_call_operand.vmem [shape: s32[512,1], index: 0, kind: input, shape index: {}]
  %s1 = inlined_call_operand.vmem [shape: s32[512,1], index: 1, kind: input, shape index: {}]
  %s2 = inlined_call_operand.vmem [shape: s32[1,512], index: 2, kind: input, shape index: {}]
  %s3 = inlined_call_operand.vmem [shape: f32[512,128], index: 3, kind: input, shape index: {}]
  %s4 = inlined_call_operand.vmem [shape: f32[512,4], index: 4, kind: input, shape index: {}]
  %s5 = inlined_call_operand.vmem [shape: bf16[128,32], index: 5, kind: input, shape index: {}]
  %s6 = inlined_call_operand.vmem [shape: bf16[32,128], index: 6, kind: input, shape index: {}]
  %s7 = inlined_call_operand.vmem [shape: f32[1,128], index: 7, kind: input, shape index: {}]
  %s8 = inlined_call_operand.vmem [shape: f32[128,8], index: 8, kind: input, shape index: {}]
  %s9 = inlined_call_operand.vmem [shape: f32[4,128], index: 9, kind: input, shape index: {}]
  %s10 = inlined_call_operand.vmem [shape: bf16[128,128], index: 10, kind: input, shape index: {}]
  %s11 = inlined_call_operand.vmem [shape: f32[128,128], index: 11, kind: output, shape index: {}]
  %s12 = sld [smem:[#allocation0]]
  $region85: #{grit_layer.3} parent=0
    _
  %s14 = ssub.s32 1, %s12
  %s15 = scalar_select 0, %s14, %s12
  loop: start=0, step=1, limit=6
  $region2: #{grit_layer.3} parent=0 // loop_pre_header
    _
  $region3: #{grit_layer.3} parent=0 // loop_header
    %s17 = sphi 0, %s21
    %p18 = scmp.ge.s32.totalorder %s17, 6
    %s27 = sphi 0, %s29
    %s30 = sphi 0, %s27
    %s31 = sphi 0, %s30
    %s47 = sphi 0, %s31
    %s53 = sphi 0, %s55
    %s56 = sphi 0, %s53
    %s57 = sphi 0, %s56
    %s73 = sphi 0, %s57
    %s79 = sphi 0, %s81
    %s82 = sphi 0, %s79
    %s83 = sphi 0, %s82
    %s99 = sphi 0, %s83
    %s105 = sphi 0, %s107
    %s108 = sphi 0, %s105
    %s109 = sphi 0, %s108
    %s125 = sphi 0, %s109
    %s131 = sphi 0, %s133
    %s134 = sphi 0, %s131
    %s135 = sphi 0, %s134
    %s151 = sphi 0, %s135
    %s155 = sphi 0, %s155
    %s157 = sphi 0, %s155
    %s158 = sphi 0, %s157
    %s172 = sphi 0, %s158
    %s176 = sphi 0, %s176
    %s178 = sphi 0, %s176
    %s179 = sphi 0, %s178
    %s193 = sphi 0, %s179
    %s197 = sphi 0, %s197
    %s199 = sphi 0, %s197
    %s200 = sphi 0, %s199
    %s214 = sphi 0, %s200
    %s218 = sphi 0, %s218
    %s220 = sphi 0, %s218
    %s221 = sphi 0, %s220
    %s235 = sphi 0, %s221
    %s239 = sphi 0, %s239
    %s241 = sphi 0, %s239
    %s242 = sphi 0, %s241
    %s256 = sphi 0, %s242
    %s260 = sphi 0, %s260
    %s262 = sphi 0, %s260
    %s263 = sphi 0, %s262
    %s277 = sphi 0, %s263
    %s281 = sphi 0, %s281
    %s283 = sphi 0, %s281
    %s284 = sphi 0, %s283
    %s298 = sphi 0, %s284
  $region4: #{grit_layer.3} parent=0 // loop_header_branch
    %20 = sbr.rel (%p18) target = $region8
  $region5: #{grit_layer.3} parent=0 // loop_body
    %s22 = ssub.s32 %s17, 1
    %s23 = ssub.s32 %s17, 2
    %s24 = sadd.s32 %s17, 1
    %s25 = ssub.s32 %s17, %s24
    %p26 = scmp.eq.s32.totalorder %s25, 0
    %s28 = sadd.s32 %s27, 1
    %s29 = scalar_select %p26, %s27, %s28
    %p32 = pneg %p26
    %p33 = scmp.eq.s32.totalorder %s17, 3
    %p34 = por %p32, %p33
    %p35 = scmp.ne.s32.totalorder %s27, %s30
    %p36 = scmp.eq.s32.totalorder %s17, 0
    %p37 = por %p35, %p36
    %p38 = scmp.ne.s32.totalorder %s27, %s30
    %p39 = scmp.eq.s32.totalorder %s22, 3
    %p40 = por %p38, %p39
    %p41 = scmp.ne.s32.totalorder %s30, %s31
    %p42 = scmp.eq.s32.totalorder %s22, 0
    %p43 = por %p41, %p42
    %p44 = scmp.ne.s32.totalorder %s30, %s31
    %p45 = scmp.eq.s32.totalorder %s23, 3
    %p46 = por %p44, %p45
    %p48 = scmp.ne.s32.totalorder %s31, %s47
    %p49 = scmp.eq.s32.totalorder %s23, 0
    %p50 = por %p48, %p49
    %s51 = ssub.s32 %s17, %s24
    %p52 = scmp.eq.s32.totalorder %s51, 0
    %s54 = sadd.s32 %s53, 1
    %s55 = scalar_select %p52, %s53, %s54
    %p58 = pneg %p52
    %p59 = scmp.eq.s32.totalorder %s17, 3
    %p60 = por %p58, %p59
    %p61 = scmp.ne.s32.totalorder %s53, %s56
    %p62 = scmp.eq.s32.totalorder %s17, 0
    %p63 = por %p61, %p62
    %p64 = scmp.ne.s32.totalorder %s53, %s56
    %p65 = scmp.eq.s32.totalorder %s22, 3
    %p66 = por %p64, %p65
    %p67 = scmp.ne.s32.totalorder %s56, %s57
    %p68 = scmp.eq.s32.totalorder %s22, 0
    %p69 = por %p67, %p68
    %p70 = scmp.ne.s32.totalorder %s56, %s57
    %p71 = scmp.eq.s32.totalorder %s23, 3
    %p72 = por %p70, %p71
    %p74 = scmp.ne.s32.totalorder %s57, %s73
    %p75 = scmp.eq.s32.totalorder %s23, 0
    %p76 = por %p74, %p75
    %s77 = ssub.s32 %s17, %s24
    %p78 = scmp.eq.s32.totalorder %s77, 0
    %s80 = sadd.s32 %s79, 1
    %s81 = scalar_select %p78, %s79, %s80
    %p84 = pneg %p78
    %p85 = scmp.eq.s32.totalorder %s17, 3
    %p86 = por %p84, %p85
    %p87 = scmp.ne.s32.totalorder %s79, %s82
    %p88 = scmp.eq.s32.totalorder %s17, 0
    %p89 = por %p87, %p88
    %p90 = scmp.ne.s32.totalorder %s79, %s82
    %p91 = scmp.eq.s32.totalorder %s22, 3
    %p92 = por %p90, %p91
    %p93 = scmp.ne.s32.totalorder %s82, %s83
    %p94 = scmp.eq.s32.totalorder %s22, 0
    %p95 = por %p93, %p94
    %p96 = scmp.ne.s32.totalorder %s82, %s83
    %p97 = scmp.eq.s32.totalorder %s23, 3
    %p98 = por %p96, %p97
    %p100 = scmp.ne.s32.totalorder %s83, %s99
    %p101 = scmp.eq.s32.totalorder %s23, 0
    %p102 = por %p100, %p101
    %s103 = ssub.s32 %s17, %s24
    %p104 = scmp.eq.s32.totalorder %s103, 0
    %s106 = sadd.s32 %s105, 1
    %s107 = scalar_select %p104, %s105, %s106
    %p110 = pneg %p104
    %p111 = scmp.eq.s32.totalorder %s17, 3
    %p112 = por %p110, %p111
    %p113 = scmp.ne.s32.totalorder %s105, %s108
    %p114 = scmp.eq.s32.totalorder %s17, 0
    %p115 = por %p113, %p114
    %p116 = scmp.ne.s32.totalorder %s105, %s108
    %p117 = scmp.eq.s32.totalorder %s22, 3
    %p118 = por %p116, %p117
    %p119 = scmp.ne.s32.totalorder %s108, %s109
    %p120 = scmp.eq.s32.totalorder %s22, 0
    %p121 = por %p119, %p120
    %p122 = scmp.ne.s32.totalorder %s108, %s109
    %p123 = scmp.eq.s32.totalorder %s23, 3
    %p124 = por %p122, %p123
    %p126 = scmp.ne.s32.totalorder %s109, %s125
    %p127 = scmp.eq.s32.totalorder %s23, 0
    %p128 = por %p126, %p127
    %s129 = ssub.s32 %s17, %s24
    %p130 = scmp.eq.s32.totalorder %s129, 0
    %s132 = sadd.s32 %s131, 1
    %s133 = scalar_select %p130, %s131, %s132
    %p136 = pneg %p130
    %p137 = scmp.eq.s32.totalorder %s17, 3
    %p138 = por %p136, %p137
    %p139 = scmp.ne.s32.totalorder %s131, %s134
    %p140 = scmp.eq.s32.totalorder %s17, 0
    %p141 = por %p139, %p140
    %p142 = scmp.ne.s32.totalorder %s131, %s134
    %p143 = scmp.eq.s32.totalorder %s22, 3
    %p144 = por %p142, %p143
    %p145 = scmp.ne.s32.totalorder %s134, %s135
    %p146 = scmp.eq.s32.totalorder %s22, 0
    %p147 = por %p145, %p146
    %p148 = scmp.ne.s32.totalorder %s134, %s135
    %p149 = scmp.eq.s32.totalorder %s23, 3
    %p150 = por %p148, %p149
    %p152 = scmp.ne.s32.totalorder %s135, %s151
    %p153 = scmp.eq.s32.totalorder %s23, 0
    %p154 = por %p152, %p153
    %s156 = sadd.s32 %s155, 1
    %p159 = scmp.eq.s32.totalorder %s17, 3
    %p160 = scmp.ne.s32.totalorder %s155, %s157
    %p161 = scmp.eq.s32.totalorder %s17, 0
    %p162 = por %p160, %p161
    %p163 = scmp.ne.s32.totalorder %s155, %s157
    %p164 = scmp.eq.s32.totalorder %s22, 3
    %p165 = por %p163, %p164
    %p166 = scmp.ne.s32.totalorder %s157, %s158
    %p167 = scmp.eq.s32.totalorder %s22, 0
    %p168 = por %p166, %p167
    %p169 = scmp.ne.s32.totalorder %s157, %s158
    %p170 = scmp.eq.s32.totalorder %s23, 3
    %p171 = por %p169, %p170
    %p173 = scmp.ne.s32.totalorder %s158, %s172
    %p174 = scmp.eq.s32.totalorder %s23, 0
    %p175 = por %p173, %p174
    %s177 = sadd.s32 %s176, 1
    %p180 = scmp.eq.s32.totalorder %s17, 3
    %p181 = scmp.ne.s32.totalorder %s176, %s178
    %p182 = scmp.eq.s32.totalorder %s17, 0
    %p183 = por %p181, %p182
    %p184 = scmp.ne.s32.totalorder %s176, %s178
    %p185 = scmp.eq.s32.totalorder %s22, 3
    %p186 = por %p184, %p185
    %p187 = scmp.ne.s32.totalorder %s178, %s179
    %p188 = scmp.eq.s32.totalorder %s22, 0
    %p189 = por %p187, %p188
    %p190 = scmp.ne.s32.totalorder %s178, %s179
    %p191 = scmp.eq.s32.totalorder %s23, 3
    %p192 = por %p190, %p191
    %p194 = scmp.ne.s32.totalorder %s179, %s193
    %p195 = scmp.eq.s32.totalorder %s23, 0
    %p196 = por %p194, %p195
    %s198 = sadd.s32 %s197, 1
    %p201 = scmp.eq.s32.totalorder %s17, 3
    %p202 = scmp.ne.s32.totalorder %s197, %s199
    %p203 = scmp.eq.s32.totalorder %s17, 0
    %p204 = por %p202, %p203
    %p205 = scmp.ne.s32.totalorder %s197, %s199
    %p206 = scmp.eq.s32.totalorder %s22, 3
    %p207 = por %p205, %p206
    %p208 = scmp.ne.s32.totalorder %s199, %s200
    %p209 = scmp.eq.s32.totalorder %s22, 0
    %p210 = por %p208, %p209
    %p211 = scmp.ne.s32.totalorder %s199, %s200
    %p212 = scmp.eq.s32.totalorder %s23, 3
    %p213 = por %p211, %p212
    %p215 = scmp.ne.s32.totalorder %s200, %s214
    %p216 = scmp.eq.s32.totalorder %s23, 0
    %p217 = por %p215, %p216
    %s219 = sadd.s32 %s218, 1
    %p222 = scmp.eq.s32.totalorder %s17, 3
    %p223 = scmp.ne.s32.totalorder %s218, %s220
    %p224 = scmp.eq.s32.totalorder %s17, 0
    %p225 = por %p223, %p224
    %p226 = scmp.ne.s32.totalorder %s218, %s220
    %p227 = scmp.eq.s32.totalorder %s22, 3
    %p228 = por %p226, %p227
    %p229 = scmp.ne.s32.totalorder %s220, %s221
    %p230 = scmp.eq.s32.totalorder %s22, 0
    %p231 = por %p229, %p230
    %p232 = scmp.ne.s32.totalorder %s220, %s221
    %p233 = scmp.eq.s32.totalorder %s23, 3
    %p234 = por %p232, %p233
    %p236 = scmp.ne.s32.totalorder %s221, %s235
    %p237 = scmp.eq.s32.totalorder %s23, 0
    %p238 = por %p236, %p237
    %s240 = sadd.s32 %s239, 1
    %p243 = scmp.eq.s32.totalorder %s17, 3
    %p244 = scmp.ne.s32.totalorder %s239, %s241
    %p245 = scmp.eq.s32.totalorder %s17, 0
    %p246 = por %p244, %p245
    %p247 = scmp.ne.s32.totalorder %s239, %s241
    %p248 = scmp.eq.s32.totalorder %s22, 3
    %p249 = por %p247, %p248
    %p250 = scmp.ne.s32.totalorder %s241, %s242
    %p251 = scmp.eq.s32.totalorder %s22, 0
    %p252 = por %p250, %p251
    %p253 = scmp.ne.s32.totalorder %s241, %s242
    %p254 = scmp.eq.s32.totalorder %s23, 3
    %p255 = por %p253, %p254
    %p257 = scmp.ne.s32.totalorder %s242, %s256
    %p258 = scmp.eq.s32.totalorder %s23, 0
    %p259 = por %p257, %p258
    %s261 = sadd.s32 %s260, 1
    %p264 = scmp.eq.s32.totalorder %s17, 3
    %p265 = scmp.ne.s32.totalorder %s260, %s262
    %p266 = scmp.eq.s32.totalorder %s17, 0
    %p267 = por %p265, %p266
    %p268 = scmp.ne.s32.totalorder %s260, %s262
    %p269 = scmp.eq.s32.totalorder %s22, 3
    %p270 = por %p268, %p269
    %p271 = scmp.ne.s32.totalorder %s262, %s263
    %p272 = scmp.eq.s32.totalorder %s22, 0
    %p273 = por %p271, %p272
    %p274 = scmp.ne.s32.totalorder %s262, %s263
    %p275 = scmp.eq.s32.totalorder %s23, 3
    %p276 = por %p274, %p275
    %p278 = scmp.ne.s32.totalorder %s263, %s277
    %p279 = scmp.eq.s32.totalorder %s23, 0
    %p280 = por %p278, %p279
    %s282 = sadd.s32 %s281, 1
    %p285 = scmp.eq.s32.totalorder %s17, 3
    %p286 = scmp.ne.s32.totalorder %s281, %s283
    %p287 = scmp.eq.s32.totalorder %s17, 0
    %p288 = por %p286, %p287
    %p289 = scmp.ne.s32.totalorder %s281, %s283
    %p290 = scmp.eq.s32.totalorder %s22, 3
    %p291 = por %p289, %p290
    %p292 = scmp.ne.s32.totalorder %s283, %s284
    %p293 = scmp.eq.s32.totalorder %s22, 0
    %p294 = por %p292, %p293
    %p295 = scmp.ne.s32.totalorder %s283, %s284
    %p296 = scmp.eq.s32.totalorder %s23, 3
    %p297 = por %p295, %p296
    %p299 = scmp.ne.s32.totalorder %s284, %s298
    %p300 = scmp.eq.s32.totalorder %s23, 0
    %p301 = por %p299, %p300
    %p302 = scmp.le.s32.totalorder 1, %s17
    %p303 = scmp.lt.s32.totalorder %s17, 5
    %p304 = pnand %p302, %p303
    %p305 = pneg %p304
    // Predicated region
    $region9: #{grit_layer.3} parent=5 // pred_check
      _
    $region10: #{grit_layer.3} parent=5 // pred_check_branch
      %307 = sbr.rel (%p304) target = $region12
    $region11: #{grit_layer.3} parent=5 // pred_region
      %s308 = ssub.s32 %s17, 1
      // Predicated region
      $region13: #{grit_layer.3} parent=11 // pred_check
        %p309 = pneg %p168
      $region14: #{grit_layer.3} parent=11 // pred_check_branch
        %311 = sbr.rel (%p309) target = $region16
      $region15: #{grit_layer.3} parent=11 // pred_region
        _
      $region16: #{grit_layer.3} parent=11 // pred_fallthru
        _
      // Predicated region
      $region17: #{grit_layer.3} parent=11 // pred_check
        %p312 = pneg %p189
      $region18: #{grit_layer.3} parent=11 // pred_check_branch
        %314 = sbr.rel (%p312) target = $region20
      $region19: #{grit_layer.3} parent=11 // pred_region
        _
      $region20: #{grit_layer.3} parent=11 // pred_fallthru
        _
      // Predicated region
      $region21: #{grit_layer.3} parent=11 // pred_check
        %p315 = pneg %p210
      $region22: #{grit_layer.3} parent=11 // pred_check_branch
        %317 = sbr.rel (%p315) target = $region24
      $region23: #{grit_layer.3} parent=11 // pred_region
        _
      $region24: #{grit_layer.3} parent=11 // pred_fallthru
        _
      // Predicated region
      $region25: #{grit_layer.3} parent=11 // pred_check
        %p318 = pneg %p231
      $region26: #{grit_layer.3} parent=11 // pred_check_branch
        %320 = sbr.rel (%p318) target = $region28
      $region27: #{grit_layer.3} parent=11 // pred_region
        _
      $region28: #{grit_layer.3} parent=11 // pred_fallthru
        _
      // Predicated region
      $region29: #{grit_layer.3} parent=11 // pred_check
        %p321 = pneg %p252
      $region30: #{grit_layer.3} parent=11 // pred_check_branch
        %323 = sbr.rel (%p321) target = $region32
      $region31: #{grit_layer.3} parent=11 // pred_region
        _
      $region32: #{grit_layer.3} parent=11 // pred_fallthru
        _
      // Predicated region
      $region33: #{grit_layer.3} parent=11 // pred_check
        %p324 = pneg %p273
      $region34: #{grit_layer.3} parent=11 // pred_check_branch
        %326 = sbr.rel (%p324) target = $region36
      $region35: #{grit_layer.3} parent=11 // pred_region
        _
      $region36: #{grit_layer.3} parent=11 // pred_fallthru
        _
    $region12: #{grit_layer.3} parent=5 // pred_fallthru
      _
    %p327 = scmp.lt.s32.totalorder %s17, 4
    // Predicated region
    $region37: #{grit_layer.3} parent=5 // pred_check
      %p328 = pneg %p327
    $region38: #{grit_layer.3} parent=5 // pred_check_branch
      %330 = sbr.rel (%p328) target = $region40
    $region39: #{grit_layer.3} parent=5 // pred_region
      // Predicated region
      $region41: #{grit_layer.3} parent=39 // pred_check
        %p331 = pneg %p37
      $region42: #{grit_layer.3} parent=39 // pred_check_branch
        %333 = sbr.rel (%p331) target = $region44
      $region43: #{grit_layer.3} parent=39 // pred_region
        %s334 = smul.u32 16, %s17
        %p335 = scmp.lt.s32.totalorder %s334, 63
        %s336 = scalar_select %p335, %s334, 63
        %s337 = smul.addr %s336, 8
        %s338 = scalar_lea.vmem %s0, %s337
        %s339 = smul.u32 16, %s17
      $region44: #{grit_layer.3} parent=39 // pred_fallthru
        _
      // Predicated region
      $region45: #{grit_layer.3} parent=39 // pred_check
        %p340 = pneg %p63
      $region46: #{grit_layer.3} parent=39 // pred_check_branch
        %342 = sbr.rel (%p340) target = $region48
      $region47: #{grit_layer.3} parent=39 // pred_region
        %s343 = smul.u32 16, %s17
        %p344 = scmp.lt.s32.totalorder %s343, 63
        %s345 = scalar_select %p344, %s343, 63
        %s346 = smul.addr %s345, 8
        %s347 = scalar_lea.vmem %s1, %s346
        %s348 = smul.u32 16, %s17
      $region48: #{grit_layer.3} parent=39 // pred_fallthru
        _
      // Predicated region
      $region49: #{grit_layer.3} parent=39 // pred_check
        %p349 = pneg %p89
      $region50: #{grit_layer.3} parent=39 // pred_check_branch
        %351 = sbr.rel (%p349) target = $region52
      $region51: #{grit_layer.3} parent=39 // pred_region
        %p352 = scmp.lt.s32.totalorder %s17, 3
        %s353 = scalar_select %p352, %s17, 3
        %s354 = scalar_lea.vmem %s2, %s353
      $region52: #{grit_layer.3} parent=39 // pred_fallthru
        _
      // Predicated region
      $region53: #{grit_layer.3} parent=39 // pred_check
        %p355 = pneg %p115
      $region54: #{grit_layer.3} parent=39 // pred_check_branch
        %357 = sbr.rel (%p355) target = $region56
      $region55: #{grit_layer.3} parent=39 // pred_region
        %s358 = smul.u32 16, %s17
        %p359 = scmp.lt.s32.totalorder %s358, 63
        %s360 = scalar_select %p359, %s358, 63
        %s361 = smul.addr %s360, 8
        %s362 = scalar_lea.vmem %s3, %s361
        %s363 = smul.u32 16, %s17
      $region56: #{grit_layer.3} parent=39 // pred_fallthru
        _
      // Predicated region
      $region57: #{grit_layer.3} parent=39 // pred_check
        %p364 = pneg %p141
      $region58: #{grit_layer.3} parent=39 // pred_check_branch
        %366 = sbr.rel (%p364) target = $region60
      $region59: #{grit_layer.3} parent=39 // pred_region
        %s367 = smul.u32 16, %s17
        %p368 = scmp.lt.s32.totalorder %s367, 63
        %s369 = scalar_select %p368, %s367, 63
        %s370 = smul.addr %s369, 8
        %s371 = scalar_lea.vmem %s4, %s370
        %s372 = smul.u32 16, %s17
      $region60: #{grit_layer.3} parent=39 // pred_fallthru
        _
    $region40: #{grit_layer.3} parent=5 // pred_fallthru
      _
    %p373 = scmp.le.s32.totalorder 1, %s17
    %p374 = scmp.lt.s32.totalorder %s17, 5
    %p375 = pnand %p373, %p374
    %p376 = pneg %p375
    // Predicated region
    $region61: #{grit_layer.3} parent=5 // pred_check
      _
    $region62: #{grit_layer.3} parent=5 // pred_check_branch
      %378 = sbr.rel (%p375) target = $region64
    $region63: #{grit_layer.3} parent=5 // pred_region
      %s379 = ssub.s32 %s17, 1
      %s380 = smul.u32 16, %s22
      %p381 = scmp.lt.s32.totalorder %s380, 63
      %s382 = scalar_select %p381, %s380, 63
      %s383 = smul.addr %s382, 8
      %s384 = scalar_lea.vmem %s0, %s383
      %p385 = pneg %p43
      %p386 = pneg %p40
      %s387 = smul.u32 16, %s22
      %p388 = scmp.lt.s32.totalorder %s387, 63
      %s389 = scalar_select %p388, %s387, 63
      %s390 = smul.addr %s389, 8
      %s391 = scalar_lea.vmem %s1, %s390
      %p392 = pneg %p69
      %p393 = pneg %p66
      %p394 = scmp.lt.s32.totalorder %s22, 3
      %s395 = scalar_select %p394, %s22, 3
      %s396 = scalar_lea.vmem %s2, %s395
      %p397 = pneg %p95
      %p398 = pneg %p92
      %s399 = smul.u32 16, %s22
      %p400 = scmp.lt.s32.totalorder %s399, 63
      %s401 = scalar_select %p400, %s399, 63
      %s402 = smul.addr %s401, 8
      %s403 = scalar_lea.vmem %s3, %s402
      %p404 = pneg %p121
      %p405 = pneg %p118
      %s406 = smul.u32 16, %s22
      %p407 = scmp.lt.s32.totalorder %s406, 63
      %s408 = scalar_select %p407, %s406, 63
      %s409 = smul.addr %s408, 8
      %s410 = scalar_lea.vmem %s4, %s409
      %p411 = pneg %p147
      %p412 = pneg %p144
      %p413 = pneg %p168
      %p414 = pneg %p165
      %p415 = pneg %p189
      %p416 = pneg %p186
      %p417 = pneg %p210
      %p418 = pneg %p207
      %p419 = pneg %p231
      %p420 = pneg %p228
      %p421 = pneg %p252
      %p422 = pneg %p249
      %p423 = pneg %p273
      %p424 = pneg %p270
      %p425 = pneg %p294
      %p426 = pneg %p291
      %s427 = smul.u32 16, %s22
      %p428 = scmp.lt.s32.totalorder %s427, 63
      %s429 = scalar_select %p428, %s427, 63
      %s430 = smul.addr %s429, 8
      %s431 = scalar_lea.vmem %s0, %s430
      %s432 = smul.u32 16, %s22
      %s433 = smul.u32 16, %s22
      %p434 = scmp.lt.s32.totalorder %s433, 63
      %s435 = scalar_select %p434, %s433, 63
      %s436 = smul.addr %s435, 8
      %s437 = scalar_lea.vmem %s1, %s436
      %s438 = smul.u32 16, %s22
      %p439 = scmp.lt.s32.totalorder %s22, 3
      %s440 = scalar_select %p439, %s22, 3
      %s441 = scalar_lea.vmem %s2, %s440
      %s442 = smul.u32 16, %s22
      %p443 = scmp.lt.s32.totalorder %s442, 63
      %s444 = scalar_select %p443, %s442, 63
      %s445 = smul.addr %s444, 8
      %s446 = scalar_lea.vmem %s3, %s445
      %s447 = smul.u32 16, %s22
      %s448 = smul.u32 16, %s22
      %p449 = scmp.lt.s32.totalorder %s448, 63
      %s450 = scalar_select %p449, %s448, 63
      %s451 = smul.addr %s450, 8
      %s452 = scalar_lea.vmem %s4, %s451
      %s453 = smul.u32 16, %s22
      %p455 = scmp.eq.s32.totalorder %s22, 0
      // Predicated region
      $region65: #{grit_layer.3} parent=63 // pred_check
        %p456 = pneg %p455
      $region66: #{grit_layer.3} parent=63 // pred_check_branch
        %458 = sbr.rel (%p456) target = $region68
      $region67: #{grit_layer.3} parent=63 // pred_region
        %v459 = vld [vmem:[%s5] sm:$0xf]
        %v460 = vld [vmem:[%s5 + $0x4] sm:$0xf]
        %v461 = vld [vmem:[%s5 + $0x8] sm:$0xf]
        %v462 = vld [vmem:[%s5 + $0xc] sm:$0xf]
        %v463 = vld [vmem:[%s5 + $0x10] sm:$0xf]
        %v464 = vld [vmem:[%s5 + $0x14] sm:$0xf]
        %v465 = vld [vmem:[%s5 + $0x18] sm:$0xf]
        %v466 = vld [vmem:[%s5 + $0x1c] sm:$0xf]
        %v467 = vld [vmem:[%s5 + $0x20] sm:$0xf]
        %v468 = vld [vmem:[%s5 + $0x24] sm:$0xf]
        %v469 = vld [vmem:[%s5 + $0x28] sm:$0xf]
        %v470 = vld [vmem:[%s5 + $0x2c] sm:$0xf]
        %v471 = vld [vmem:[%s5 + $0x30] sm:$0xf]
        %v472 = vld [vmem:[%s5 + $0x34] sm:$0xf]
        %v473 = vld [vmem:[%s5 + $0x38] sm:$0xf]
        %v474 = vld [vmem:[%s5 + $0x3c] sm:$0xf]
        %v475 = vld [vmem:[%s6] sm:$0xf]
        %v476 = vld [vmem:[%s6 + $0x4] sm:$0xf]
        %v477 = vld [vmem:[%s6 + $0x8] sm:$0xf]
        %v478 = vld [vmem:[%s6 + $0xc] sm:$0xf]
        %v479 = vld [vmem:[%s7] sm:$0x1]
        %v481 = vperm.slane %v479, 0
        %v499 = vunpack.c.l.b16 %v459
        %v500 = vunpack.c.l.b16 %v460
        %v501 = vunpack.c.l.b16 %v461
        %v502 = vunpack.c.l.b16 %v462
        %v503 = vunpack.c.l.b16 %v463
        %v504 = vunpack.c.l.b16 %v464
        %v505 = vunpack.c.l.b16 %v465
        %v506 = vunpack.c.l.b16 %v466
        %v507 = vunpack.c.l.b16 %v467
        %v508 = vunpack.c.l.b16 %v468
        %v509 = vunpack.c.l.b16 %v469
        %v510 = vunpack.c.l.b16 %v470
        %v511 = vunpack.c.l.b16 %v471
        %v512 = vunpack.c.l.b16 %v472
        %v513 = vunpack.c.l.b16 %v473
        %v514 = vunpack.c.l.b16 %v474
        %v515 = vpack.c.b16 %v500, %v499
        %v516 = vpack.c.b16 %v502, %v501
        %v517 = vpack.c.b16 %v504, %v503
        %v518 = vpack.c.b16 %v506, %v505
        %v519 = vpack.c.b16 %v508, %v507
        %v520 = vpack.c.b16 %v510, %v509
        %v521 = vpack.c.b16 %v512, %v511
        %v522 = vpack.c.b16 %v514, %v513
        %v527 = vunpack.c.l.b16 %v475
        %v528 = vunpack.c.l.b16 %v476
        %v529 = vunpack.c.l.b16 %v477
        %v530 = vunpack.c.l.b16 %v478
        %v531 = vpack.c.b16 %v528, %v527
        %v532 = vpack.c.b16 %v530, %v529
        %vm535 = vcmask 261120
        %v537 = vsel %vm535, %v515, 0
        %v540 = vsel %vm535, %v516, 0
        %v543 = vsel %vm535, %v517, 0
        %v546 = vsel %vm535, %v518, 0
        %v549 = vsel %vm535, %v519, 0
        %v552 = vsel %vm535, %v520, 0
        %v555 = vsel %vm535, %v521, 0
        %v558 = vsel %vm535, %v522, 0
        %560 = vmatpush.bf16.msra.mxu0 0
        %561 = vmatpush.bf16.msra.mxu0 0
        %562 = vmatpush.bf16.msra.mxu0 0
        %563 = vmatpush.bf16.msra.mxu0 0
        %564 = vmatpush.bf16.msra.mxu0 0
        %565 = vmatpush.bf16.msra.mxu0 0
        %566 = vmatpush.bf16.msra.mxu0 %v532
        %567 = vmatpush.bf16.msra.mxu0 %v531
        %568 = vmatmul.bf16.gmra.mxu0 %v537
        %v569 = vpop.f32.mrf.mxu0
        %v570 = vadd.f32 %v481, %v569
        %v571 = vpop.f32.mrf.mxu0
        %v572 = vadd.f32 %v481, %v571
        %573 = vmatmul.bf16.gmra.mxu0 %v540
        %v574 = vpop.f32.mrf.mxu0
        %v575 = vadd.f32 %v481, %v574
        %v576 = vpop.f32.mrf.mxu0
        %v577 = vadd.f32 %v481, %v576
        %578 = vmatmul.bf16.gmra.mxu0 %v543
        %v579 = vpop.f32.mrf.mxu0
        %v580 = vadd.f32 %v481, %v579
        %v581 = vpop.f32.mrf.mxu0
        %v582 = vadd.f32 %v481, %v581
        %583 = vmatmul.bf16.gmra.mxu0 %v546
        %v584 = vpop.f32.mrf.mxu0
        %v585 = vadd.f32 %v481, %v584
        %v586 = vpop.f32.mrf.mxu0
        %v587 = vadd.f32 %v481, %v586
        %588 = vmatmul.bf16.gmra.mxu0 %v549
        %v589 = vpop.f32.mrf.mxu0
        %v590 = vadd.f32 %v481, %v589
        %v591 = vpop.f32.mrf.mxu0
        %v592 = vadd.f32 %v481, %v591
        %593 = vmatmul.bf16.gmra.mxu0 %v552
        %v594 = vpop.f32.mrf.mxu0
        %v595 = vadd.f32 %v481, %v594
        %v596 = vpop.f32.mrf.mxu0
        %v597 = vadd.f32 %v481, %v596
        %598 = vmatmul.bf16.gmra.mxu0 %v555
        %v599 = vpop.f32.mrf.mxu0
        %v600 = vadd.f32 %v481, %v599
        %v601 = vpop.f32.mrf.mxu0
        %v602 = vadd.f32 %v481, %v601
        %603 = vmatmul.bf16.gmra.mxu0 %v558
        %v604 = vpop.f32.mrf.mxu0
        %v605 = vadd.f32 %v481, %v604
        %v606 = vpop.f32.mrf.mxu0
        %v607 = vadd.f32 %v481, %v606
        %608 = vdwg.mxu0
        %v609 = vpack.c.bf16 %v570, %v570
        %v610 = vpack.c.bf16 %v572, %v572
        %v611 = vpack.c.bf16 %v575, %v575
        %v612 = vpack.c.bf16 %v577, %v577
        %v613 = vpack.c.bf16 %v580, %v580
        %v614 = vpack.c.bf16 %v582, %v582
        %v615 = vpack.c.bf16 %v585, %v585
        %v616 = vpack.c.bf16 %v587, %v587
        %v617 = vpack.c.bf16 %v590, %v590
        %v618 = vpack.c.bf16 %v592, %v592
        %v619 = vpack.c.bf16 %v595, %v595
        %v620 = vpack.c.bf16 %v597, %v597
        %v621 = vpack.c.bf16 %v600, %v600
        %v622 = vpack.c.bf16 %v602, %v602
        %v623 = vpack.c.bf16 %v605, %v605
        %v624 = vpack.c.bf16 %v607, %v607
        %625 = vst [vmem:[#allocation2] sm:$0xf] %v609
        %626 = vst [vmem:[#allocation2 + $0x4] sm:$0xf] %v610
        %627 = vst [vmem:[#allocation2 + $0x8] sm:$0xf] %v611
        %628 = vst [vmem:[#allocation2 + $0xc] sm:$0xf] %v612
        %629 = vst [vmem:[#allocation2 + $0x10] sm:$0xf] %v613
        %630 = vst [vmem:[#allocation2 + $0x14] sm:$0xf] %v614
        %631 = vst [vmem:[#allocation2 + $0x18] sm:$0xf] %v615
        %632 = vst [vmem:[#allocation2 + $0x1c] sm:$0xf] %v616
        %633 = vst [vmem:[#allocation2 + $0x20] sm:$0xf] %v617
        %634 = vst [vmem:[#allocation2 + $0x24] sm:$0xf] %v618
        %635 = vst [vmem:[#allocation2 + $0x28] sm:$0xf] %v619
        %636 = vst [vmem:[#allocation2 + $0x2c] sm:$0xf] %v620
        %637 = vst [vmem:[#allocation2 + $0x30] sm:$0xf] %v621
        %638 = vst [vmem:[#allocation2 + $0x34] sm:$0xf] %v622
        %639 = vst [vmem:[#allocation2 + $0x38] sm:$0xf] %v623
        %640 = vst [vmem:[#allocation2 + $0x3c] sm:$0xf] %v624
        %641 = vst [vmem:[#allocation3] sm:$0xff] 0.0
        %642 = vst [vmem:[#allocation3 + $0x8] sm:$0xff] 0.0
        %643 = vst [vmem:[#allocation3 + $0x10] sm:$0xff] 0.0
        %644 = vst [vmem:[#allocation3 + $0x18] sm:$0xff] 0.0
        %645 = vst [vmem:[#allocation3 + $0x20] sm:$0xff] 0.0
        %646 = vst [vmem:[#allocation3 + $0x28] sm:$0xff] 0.0
        %647 = vst [vmem:[#allocation3 + $0x30] sm:$0xff] 0.0
        %648 = vst [vmem:[#allocation3 + $0x38] sm:$0xff] 0.0
        %649 = vst [vmem:[#allocation3 + $0x40] sm:$0xff] 0.0
        %650 = vst [vmem:[#allocation3 + $0x48] sm:$0xff] 0.0
        %651 = vst [vmem:[#allocation3 + $0x50] sm:$0xff] 0.0
        %652 = vst [vmem:[#allocation3 + $0x58] sm:$0xff] 0.0
        %653 = vst [vmem:[#allocation3 + $0x60] sm:$0xff] 0.0
        %654 = vst [vmem:[#allocation3 + $0x68] sm:$0xff] 0.0
        %655 = vst [vmem:[#allocation3 + $0x70] sm:$0xff] 0.0
        %656 = vst [vmem:[#allocation3 + $0x78] sm:$0xff] 0.0
        %657 = vst [vmem:[#allocation3 + $0x80] sm:$0xff] 0.0
        %658 = vst [vmem:[#allocation3 + $0x88] sm:$0xff] 0.0
        %659 = vst [vmem:[#allocation3 + $0x90] sm:$0xff] 0.0
        %660 = vst [vmem:[#allocation3 + $0x98] sm:$0xff] 0.0
        %661 = vst [vmem:[#allocation3 + $0xa0] sm:$0xff] 0.0
        %662 = vst [vmem:[#allocation3 + $0xa8] sm:$0xff] 0.0
        %663 = vst [vmem:[#allocation3 + $0xb0] sm:$0xff] 0.0
        %664 = vst [vmem:[#allocation3 + $0xb8] sm:$0xff] 0.0
        %665 = vst [vmem:[#allocation3 + $0xc0] sm:$0xff] 0.0
        %666 = vst [vmem:[#allocation3 + $0xc8] sm:$0xff] 0.0
        %667 = vst [vmem:[#allocation3 + $0xd0] sm:$0xff] 0.0
        %668 = vst [vmem:[#allocation3 + $0xd8] sm:$0xff] 0.0
        %669 = vst [vmem:[#allocation3 + $0xe0] sm:$0xff] 0.0
        %670 = vst [vmem:[#allocation3 + $0xe8] sm:$0xff] 0.0
        %671 = vst [vmem:[#allocation3 + $0xf0] sm:$0xff] 0.0
        %672 = vst [vmem:[#allocation3 + $0xf8] sm:$0xff] 0.0
      $region68: #{grit_layer.3} parent=63 // pred_fallthru
        _
      %v673 = vld [vmem:[%s431] sm:$0xff]
      %v674 = vld [vmem:[%s431 + $0x8] sm:$0xff]
      %v675 = vld [vmem:[%s431 + $0x10] sm:$0xff]
      %v676 = vld [vmem:[%s431 + $0x18] sm:$0xff]
      %v677 = vld [vmem:[%s431 + $0x20] sm:$0xff]
      %v678 = vld [vmem:[%s431 + $0x28] sm:$0xff]
      %v679 = vld [vmem:[%s431 + $0x30] sm:$0xff]
      %v680 = vld [vmem:[%s431 + $0x38] sm:$0xff]
      %v681 = vld [vmem:[%s431 + $0x40] sm:$0xff]
      %v682 = vld [vmem:[%s431 + $0x48] sm:$0xff]
      %v683 = vld [vmem:[%s431 + $0x50] sm:$0xff]
      %v684 = vld [vmem:[%s431 + $0x58] sm:$0xff]
      %v685 = vld [vmem:[%s431 + $0x60] sm:$0xff]
      %v686 = vld [vmem:[%s431 + $0x68] sm:$0xff]
      %v687 = vld [vmem:[%s431 + $0x70] sm:$0xff]
      %v688 = vld [vmem:[%s431 + $0x78] sm:$0xff]
      %v689 = vld [vmem:[%s437] sm:$0xff]
      %v690 = vld [vmem:[%s437 + $0x8] sm:$0xff]
      %v691 = vld [vmem:[%s437 + $0x10] sm:$0xff]
      %v692 = vld [vmem:[%s437 + $0x18] sm:$0xff]
      %v693 = vld [vmem:[%s437 + $0x20] sm:$0xff]
      %v694 = vld [vmem:[%s437 + $0x28] sm:$0xff]
      %v695 = vld [vmem:[%s437 + $0x30] sm:$0xff]
      %v696 = vld [vmem:[%s437 + $0x38] sm:$0xff]
      %v697 = vld [vmem:[%s437 + $0x40] sm:$0xff]
      %v698 = vld [vmem:[%s437 + $0x48] sm:$0xff]
      %v699 = vld [vmem:[%s437 + $0x50] sm:$0xff]
      %v700 = vld [vmem:[%s437 + $0x58] sm:$0xff]
      %v701 = vld [vmem:[%s437 + $0x60] sm:$0xff]
      %v702 = vld [vmem:[%s437 + $0x68] sm:$0xff]
      %v703 = vld [vmem:[%s437 + $0x70] sm:$0xff]
      %v704 = vld [vmem:[%s437 + $0x78] sm:$0xff]
      %v705 = vld [vmem:[%s441] sm:$0x1]
      %v706 = vlaneseq
      %v707 = vand.u32 %v706, 127
      %v708 = vlaneseq
      %v709 = vshrl.u32 %v708, 7
      %v710 = vadd.s32 %v709, 8
      %v711 = vadd.s32 %v709, 16
      %v712 = vadd.s32 %v709, 24
      %v713 = vadd.s32 %v709, 32
      %v714 = vadd.s32 %v709, 40
      %v715 = vadd.s32 %v709, 48
      %v716 = vadd.s32 %v709, 56
      %v717 = vadd.s32 %v709, 64
      %v718 = vadd.s32 %v709, 72
      %v719 = vadd.s32 %v709, 80
      %v720 = vadd.s32 %v709, 88
      %v721 = vadd.s32 %v709, 96
      %v722 = vadd.s32 %v709, 104
      %v723 = vadd.s32 %v709, 112
      %v724 = vadd.s32 %v709, 120
      %725 = vset.pattern.permute.xlu0 0
      %726 = vperm.xlu0 %725, %v673
      %v727 = vpop.permute.xlu0 %726
      %728 = vset.pattern.permute.xlu0 0
      %729 = vperm.xlu0 %728, %v674
      %v730 = vpop.permute.xlu0 %729
      %731 = vset.pattern.permute.xlu0 0
      %732 = vperm.xlu0 %731, %v675
      %v733 = vpop.permute.xlu0 %732
      %734 = vset.pattern.permute.xlu0 0
      %735 = vperm.xlu0 %734, %v676
      %v736 = vpop.permute.xlu0 %735
      %737 = vset.pattern.permute.xlu0 0
      %738 = vperm.xlu0 %737, %v677
      %v739 = vpop.permute.xlu0 %738
      %740 = vset.pattern.permute.xlu0 0
      %741 = vperm.xlu0 %740, %v678
      %v742 = vpop.permute.xlu0 %741
      %743 = vset.pattern.permute.xlu0 0
      %744 = vperm.xlu0 %743, %v679
      %v745 = vpop.permute.xlu0 %744
      %746 = vset.pattern.permute.xlu0 0
      %747 = vperm.xlu0 %746, %v680
      %v748 = vpop.permute.xlu0 %747
      %749 = vset.pattern.permute.xlu0 0
      %750 = vperm.xlu0 %749, %v681
      %v751 = vpop.permute.xlu0 %750
      %752 = vset.pattern.permute.xlu0 0
      %753 = vperm.xlu0 %752, %v682
      %v754 = vpop.permute.xlu0 %753
      %755 = vset.pattern.permute.xlu0 0
      %756 = vperm.xlu0 %755, %v683
      %v757 = vpop.permute.xlu0 %756
      %758 = vset.pattern.permute.xlu0 0
      %759 = vperm.xlu0 %758, %v684
      %v760 = vpop.permute.xlu0 %759
      %761 = vset.pattern.permute.xlu0 0
      %762 = vperm.xlu0 %761, %v685
      %v763 = vpop.permute.xlu0 %762
      %764 = vset.pattern.permute.xlu0 0
      %765 = vperm.xlu0 %764, %v686
      %v766 = vpop.permute.xlu0 %765
      %767 = vset.pattern.permute.xlu0 0
      %768 = vperm.xlu0 %767, %v687
      %v769 = vpop.permute.xlu0 %768
      %770 = vset.pattern.permute.xlu0 0
      %771 = vperm.xlu0 %770, %v688
      %v772 = vpop.permute.xlu0 %771
      %vm773 = vcmp.eq.s32.totalorder %v707, %v727
      %vm774 = vcmp.eq.s32.totalorder %v707, %v730
      %vm775 = vcmp.eq.s32.totalorder %v707, %v733
      %vm776 = vcmp.eq.s32.totalorder %v707, %v736
      %vm777 = vcmp.eq.s32.totalorder %v707, %v739
      %vm778 = vcmp.eq.s32.totalorder %v707, %v742
      %vm779 = vcmp.eq.s32.totalorder %v707, %v745
      %vm780 = vcmp.eq.s32.totalorder %v707, %v748
      %vm781 = vcmp.eq.s32.totalorder %v707, %v751
      %vm782 = vcmp.eq.s32.totalorder %v707, %v754
      %vm783 = vcmp.eq.s32.totalorder %v707, %v757
      %vm784 = vcmp.eq.s32.totalorder %v707, %v760
      %vm785 = vcmp.eq.s32.totalorder %v707, %v763
      %vm786 = vcmp.eq.s32.totalorder %v707, %v766
      %vm787 = vcmp.eq.s32.totalorder %v707, %v769
      %vm788 = vcmp.eq.s32.totalorder %v707, %v772
      %v789 = vsel %vm773, 1.0, 0.0
      %v790 = vsel %vm774, 1.0, 0.0
      %v791 = vsel %vm775, 1.0, 0.0
      %v792 = vsel %vm776, 1.0, 0.0
      %v793 = vsel %vm777, 1.0, 0.0
      %v794 = vsel %vm778, 1.0, 0.0
      %v795 = vsel %vm779, 1.0, 0.0
      %v796 = vsel %vm780, 1.0, 0.0
      %v797 = vsel %vm781, 1.0, 0.0
      %v798 = vsel %vm782, 1.0, 0.0
      %v799 = vsel %vm783, 1.0, 0.0
      %v800 = vsel %vm784, 1.0, 0.0
      %v801 = vsel %vm785, 1.0, 0.0
      %v802 = vsel %vm786, 1.0, 0.0
      %v803 = vsel %vm787, 1.0, 0.0
      %v804 = vsel %vm788, 1.0, 0.0
      %v805 = vpack.c.bf16 %v790, %v789
      %v806 = vpack.c.bf16 %v792, %v791
      %v807 = vpack.c.bf16 %v794, %v793
      %v808 = vpack.c.bf16 %v796, %v795
      %v809 = vpack.c.bf16 %v798, %v797
      %v810 = vpack.c.bf16 %v800, %v799
      %v811 = vpack.c.bf16 %v802, %v801
      %v812 = vpack.c.bf16 %v804, %v803
      %813 = vset.pattern.permute.xlu0 0
      %814 = vperm.xlu0 %813, %v689
      %v815 = vpop.permute.xlu0 %814
      %816 = vset.pattern.permute.xlu0 0
      %817 = vperm.xlu0 %816, %v690
      %v818 = vpop.permute.xlu0 %817
      %819 = vset.pattern.permute.xlu0 0
      %820 = vperm.xlu0 %819, %v691
      %v821 = vpop.permute.xlu0 %820
      %822 = vset.pattern.permute.xlu0 0
      %823 = vperm.xlu0 %822, %v692
      %v824 = vpop.permute.xlu0 %823
      %825 = vset.pattern.permute.xlu0 0
      %826 = vperm.xlu0 %825, %v693
      %v827 = vpop.permute.xlu0 %826
      %828 = vset.pattern.permute.xlu0 0
      %829 = vperm.xlu0 %828, %v694
      %v830 = vpop.permute.xlu0 %829
      %831 = vset.pattern.permute.xlu0 0
      %832 = vperm.xlu0 %831, %v695
      %v833 = vpop.permute.xlu0 %832
      %834 = vset.pattern.permute.xlu0 0
      %835 = vperm.xlu0 %834, %v696
      %v836 = vpop.permute.xlu0 %835
      %837 = vset.pattern.permute.xlu0 0
      %838 = vperm.xlu0 %837, %v697
      %v839 = vpop.permute.xlu0 %838
      %840 = vset.pattern.permute.xlu0 0
      %841 = vperm.xlu0 %840, %v698
      %v842 = vpop.permute.xlu0 %841
      %843 = vset.pattern.permute.xlu0 0
      %844 = vperm.xlu0 %843, %v699
      %v845 = vpop.permute.xlu0 %844
      %846 = vset.pattern.permute.xlu0 0
      %847 = vperm.xlu0 %846, %v700
      %v848 = vpop.permute.xlu0 %847
      %849 = vset.pattern.permute.xlu0 0
      %850 = vperm.xlu0 %849, %v701
      %v851 = vpop.permute.xlu0 %850
      %852 = vset.pattern.permute.xlu0 0
      %853 = vperm.xlu0 %852, %v702
      %v854 = vpop.permute.xlu0 %853
      %855 = vset.pattern.permute.xlu0 0
      %856 = vperm.xlu0 %855, %v703
      %v857 = vpop.permute.xlu0 %856
      %858 = vset.pattern.permute.xlu0 0
      %859 = vperm.xlu0 %858, %v704
      %v860 = vpop.permute.xlu0 %859
      %vm861 = vcmp.eq.s32.totalorder %v707, %v815
      %vm862 = vcmp.eq.s32.totalorder %v707, %v818
      %vm863 = vcmp.eq.s32.totalorder %v707, %v821
      %vm864 = vcmp.eq.s32.totalorder %v707, %v824
      %vm865 = vcmp.eq.s32.totalorder %v707, %v827
      %vm866 = vcmp.eq.s32.totalorder %v707, %v830
      %vm867 = vcmp.eq.s32.totalorder %v707, %v833
      %vm868 = vcmp.eq.s32.totalorder %v707, %v836
      %vm869 = vcmp.eq.s32.totalorder %v707, %v839
      %vm870 = vcmp.eq.s32.totalorder %v707, %v842
      %vm871 = vcmp.eq.s32.totalorder %v707, %v845
      %vm872 = vcmp.eq.s32.totalorder %v707, %v848
      %vm873 = vcmp.eq.s32.totalorder %v707, %v851
      %vm874 = vcmp.eq.s32.totalorder %v707, %v854
      %vm875 = vcmp.eq.s32.totalorder %v707, %v857
      %vm876 = vcmp.eq.s32.totalorder %v707, %v860
      %v877 = vsel %vm861, 1.0, 0.0
      %v878 = vsel %vm862, 1.0, 0.0
      %v879 = vsel %vm863, 1.0, 0.0
      %v880 = vsel %vm864, 1.0, 0.0
      %v881 = vsel %vm865, 1.0, 0.0
      %v882 = vsel %vm866, 1.0, 0.0
      %v883 = vsel %vm867, 1.0, 0.0
      %v884 = vsel %vm868, 1.0, 0.0
      %v885 = vsel %vm869, 1.0, 0.0
      %v886 = vsel %vm870, 1.0, 0.0
      %v887 = vsel %vm871, 1.0, 0.0
      %v888 = vsel %vm872, 1.0, 0.0
      %v889 = vsel %vm873, 1.0, 0.0
      %v890 = vsel %vm874, 1.0, 0.0
      %v891 = vsel %vm875, 1.0, 0.0
      %v892 = vsel %vm876, 1.0, 0.0
      %v893 = vperm.slane %v705, 0
      %vm894 = vcmp.eq.s32.totalorder %v709, %v893
      %vm895 = vcmp.eq.s32.totalorder %v710, %v893
      %vm896 = vcmp.eq.s32.totalorder %v711, %v893
      %vm897 = vcmp.eq.s32.totalorder %v712, %v893
      %vm898 = vcmp.eq.s32.totalorder %v713, %v893
      %vm899 = vcmp.eq.s32.totalorder %v714, %v893
      %vm900 = vcmp.eq.s32.totalorder %v715, %v893
      %vm901 = vcmp.eq.s32.totalorder %v716, %v893
      %vm902 = vcmp.eq.s32.totalorder %v717, %v893
      %vm903 = vcmp.eq.s32.totalorder %v718, %v893
      %vm904 = vcmp.eq.s32.totalorder %v719, %v893
      %vm905 = vcmp.eq.s32.totalorder %v720, %v893
      %vm906 = vcmp.eq.s32.totalorder %v721, %v893
      %vm907 = vcmp.eq.s32.totalorder %v722, %v893
      %vm908 = vcmp.eq.s32.totalorder %v723, %v893
      %vm909 = vcmp.eq.s32.totalorder %v724, %v893
      %v910 = vsel %vm894, 1.0, 0.0
      %v911 = vsel %vm895, 1.0, 0.0
      %v912 = vsel %vm896, 1.0, 0.0
      %v913 = vsel %vm897, 1.0, 0.0
      %v914 = vsel %vm898, 1.0, 0.0
      %v915 = vsel %vm899, 1.0, 0.0
      %v916 = vsel %vm900, 1.0, 0.0
      %v917 = vsel %vm901, 1.0, 0.0
      %v918 = vsel %vm902, 1.0, 0.0
      %v919 = vsel %vm903, 1.0, 0.0
      %v920 = vsel %vm904, 1.0, 0.0
      %v921 = vsel %vm905, 1.0, 0.0
      %v922 = vsel %vm906, 1.0, 0.0
      %v923 = vsel %vm907, 1.0, 0.0
      %v924 = vsel %vm908, 1.0, 0.0
      %v925 = vsel %vm909, 1.0, 0.0
      %v926 = vpack.c.bf16 %v911, %v910
      %v927 = vpack.c.bf16 %v913, %v912
      %v928 = vpack.c.bf16 %v915, %v914
      %v929 = vpack.c.bf16 %v917, %v916
      %v930 = vpack.c.bf16 %v919, %v918
      %v931 = vpack.c.bf16 %v921, %v920
      %v932 = vpack.c.bf16 %v923, %v922
      %v933 = vpack.c.bf16 %v925, %v924
      %v934 = vld [vmem:[%s446] sm:$0xff]
      %v935 = vld [vmem:[%s446 + $0x8] sm:$0xff]
      %v936 = vld [vmem:[%s446 + $0x10] sm:$0xff]
      %v937 = vld [vmem:[%s446 + $0x18] sm:$0xff]
      %v938 = vld [vmem:[%s446 + $0x20] sm:$0xff]
      %v939 = vld [vmem:[%s446 + $0x28] sm:$0xff]
      %v940 = vld [vmem:[%s446 + $0x30] sm:$0xff]
      %v941 = vld [vmem:[%s446 + $0x38] sm:$0xff]
      %v942 = vld [vmem:[%s446 + $0x40] sm:$0xff]
      %v943 = vld [vmem:[%s446 + $0x48] sm:$0xff]
      %v944 = vld [vmem:[%s446 + $0x50] sm:$0xff]
      %v945 = vld [vmem:[%s446 + $0x58] sm:$0xff]
      %v946 = vld [vmem:[%s446 + $0x60] sm:$0xff]
      %v947 = vld [vmem:[%s446 + $0x68] sm:$0xff]
      %v948 = vld [vmem:[%s446 + $0x70] sm:$0xff]
      %v949 = vld [vmem:[%s446 + $0x78] sm:$0xff]
      %v950 = vld [vmem:[%s452] sm:$0xff]
      %v951 = vld [vmem:[%s452 + $0x8] sm:$0xff]
      %v952 = vld [vmem:[%s452 + $0x10] sm:$0xff]
      %v953 = vld [vmem:[%s452 + $0x18] sm:$0xff]
      %v954 = vld [vmem:[%s452 + $0x20] sm:$0xff]
      %v955 = vld [vmem:[%s452 + $0x28] sm:$0xff]
      %v956 = vld [vmem:[%s452 + $0x30] sm:$0xff]
      %v957 = vld [vmem:[%s452 + $0x38] sm:$0xff]
      %v958 = vld [vmem:[%s452 + $0x40] sm:$0xff]
      %v959 = vld [vmem:[%s452 + $0x48] sm:$0xff]
      %v960 = vld [vmem:[%s452 + $0x50] sm:$0xff]
      %v961 = vld [vmem:[%s452 + $0x58] sm:$0xff]
      %v962 = vld [vmem:[%s452 + $0x60] sm:$0xff]
      %v963 = vld [vmem:[%s452 + $0x68] sm:$0xff]
      %v964 = vld [vmem:[%s452 + $0x70] sm:$0xff]
      %v965 = vld [vmem:[%s452 + $0x78] sm:$0xff]
      %v966 = vld [vmem:[%s8] sm:$0xff]
      %v967 = vld [vmem:[%s8 + $0x8] sm:$0xff]
      %v968 = vld [vmem:[%s8 + $0x10] sm:$0xff]
      %v969 = vld [vmem:[%s8 + $0x18] sm:$0xff]
      %v970 = vld [vmem:[%s8 + $0x20] sm:$0xff]
      %v971 = vld [vmem:[%s8 + $0x28] sm:$0xff]
      %v972 = vld [vmem:[%s8 + $0x30] sm:$0xff]
      %v973 = vld [vmem:[%s8 + $0x38] sm:$0xff]
      %v974 = vld [vmem:[%s8 + $0x40] sm:$0xff]
      %v975 = vld [vmem:[%s8 + $0x48] sm:$0xff]
      %v976 = vld [vmem:[%s8 + $0x50] sm:$0xff]
      %v977 = vld [vmem:[%s8 + $0x58] sm:$0xff]
      %v978 = vld [vmem:[%s8 + $0x60] sm:$0xff]
      %v979 = vld [vmem:[%s8 + $0x68] sm:$0xff]
      %v980 = vld [vmem:[%s8 + $0x70] sm:$0xff]
      %v981 = vld [vmem:[%s8 + $0x78] sm:$0xff]
      %982 = vmatpush.msra.mxu0 %v981
      %983 = vmatpush.msra.mxu0 %v980
      %984 = vmatpush.msra.mxu0 %v979
      %985 = vmatpush.msra.mxu0 %v978
      %986 = vmatpush.msra.mxu0 %v977
      %987 = vmatpush.msra.mxu0 %v976
      %988 = vmatpush.msra.mxu0 %v975
      %989 = vmatpush.msra.mxu0 %v974
      %990 = vmatpush.msra.mxu0 %v973
      %991 = vmatpush.msra.mxu0 %v972
      %992 = vmatpush.msra.mxu0 %v971
      %993 = vmatpush.msra.mxu0 %v970
      %994 = vmatpush.msra.mxu0 %v969
      %995 = vmatpush.msra.mxu0 %v968
      %996 = vmatpush.msra.mxu0 %v967
      %997 = vmatpush.msra.mxu0 %v966
      %998 = vmatmul.f32.gmra.mxu0 %v877
      %v999 = vpop.f32.mrf.mxu0
      %v1000 = vadd.f32 0.0, %v999
      %1001 = vmatmul.f32.gmra.mxu0 %v878
      %v1002 = vpop.f32.mrf.mxu0
      %v1003 = vadd.f32 0.0, %v1002
      %1004 = vmatmul.f32.gmra.mxu0 %v879
      %v1005 = vpop.f32.mrf.mxu0
      %v1006 = vadd.f32 0.0, %v1005
      %1007 = vmatmul.f32.gmra.mxu0 %v880
      %v1008 = vpop.f32.mrf.mxu0
      %v1009 = vadd.f32 0.0, %v1008
      %1010 = vmatmul.f32.gmra.mxu0 %v881
      %v1011 = vpop.f32.mrf.mxu0
      %v1012 = vadd.f32 0.0, %v1011
      %1013 = vmatmul.f32.gmra.mxu0 %v882
      %v1014 = vpop.f32.mrf.mxu0
      %v1015 = vadd.f32 0.0, %v1014
      %1016 = vmatmul.f32.gmra.mxu0 %v883
      %v1017 = vpop.f32.mrf.mxu0
      %v1018 = vadd.f32 0.0, %v1017
      %1019 = vmatmul.f32.gmra.mxu0 %v884
      %v1020 = vpop.f32.mrf.mxu0
      %v1021 = vadd.f32 0.0, %v1020
      %1022 = vmatmul.f32.gmra.mxu0 %v885
      %v1023 = vpop.f32.mrf.mxu0
      %v1024 = vadd.f32 0.0, %v1023
      %1025 = vmatmul.f32.gmra.mxu0 %v886
      %v1026 = vpop.f32.mrf.mxu0
      %v1027 = vadd.f32 0.0, %v1026
      %1028 = vmatmul.f32.gmra.mxu0 %v887
      %v1029 = vpop.f32.mrf.mxu0
      %v1030 = vadd.f32 0.0, %v1029
      %1031 = vmatmul.f32.gmra.mxu0 %v888
      %v1032 = vpop.f32.mrf.mxu0
      %v1033 = vadd.f32 0.0, %v1032
      %1034 = vmatmul.f32.gmra.mxu0 %v889
      %v1035 = vpop.f32.mrf.mxu0
      %v1036 = vadd.f32 0.0, %v1035
      %1037 = vmatmul.f32.gmra.mxu0 %v890
      %v1038 = vpop.f32.mrf.mxu0
      %v1039 = vadd.f32 0.0, %v1038
      %1040 = vmatmul.f32.gmra.mxu0 %v891
      %v1041 = vpop.f32.mrf.mxu0
      %v1042 = vadd.f32 0.0, %v1041
      %1043 = vmatmul.f32.gmra.mxu0 %v892
      %v1044 = vpop.f32.mrf.mxu0
      %v1045 = vadd.f32 0.0, %v1044
      %1046 = vdwg.mxu0
      %v1047 = vsub.f32 %v950, %v1000
      %v1048 = vsub.f32 %v951, %v1003
      %v1049 = vsub.f32 %v952, %v1006
      %v1050 = vsub.f32 %v953, %v1009
      %v1051 = vsub.f32 %v954, %v1012
      %v1052 = vsub.f32 %v955, %v1015
      %v1053 = vsub.f32 %v956, %v1018
      %v1054 = vsub.f32 %v957, %v1021
      %v1055 = vsub.f32 %v958, %v1024
      %v1056 = vsub.f32 %v959, %v1027
      %v1057 = vsub.f32 %v960, %v1030
      %v1058 = vsub.f32 %v961, %v1033
      %v1059 = vsub.f32 %v962, %v1036
      %v1060 = vsub.f32 %v963, %v1039
      %v1061 = vsub.f32 %v964, %v1042
      %v1062 = vsub.f32 %v965, %v1045
      %v1063 = vmul.f32 %v1047, 1.442695
      %v1064 = vpow.pop %v1063
      %v1065 = vmul.f32 %v1048, 1.442695
      %v1066 = vpow.pop %v1065
      %v1067 = vmul.f32 %v1049, 1.442695
      %v1068 = vpow.pop %v1067
      %v1069 = vmul.f32 %v1050, 1.442695
      %v1070 = vpow.pop %v1069
      %v1071 = vmul.f32 %v1051, 1.442695
      %v1072 = vpow.pop %v1071
      %v1073 = vmul.f32 %v1052, 1.442695
      %v1074 = vpow.pop %v1073
      %v1075 = vmul.f32 %v1053, 1.442695
      %v1076 = vpow.pop %v1075
      %v1077 = vmul.f32 %v1054, 1.442695
      %v1078 = vpow.pop %v1077
      %v1079 = vmul.f32 %v1055, 1.442695
      %v1080 = vpow.pop %v1079
      %v1081 = vmul.f32 %v1056, 1.442695
      %v1082 = vpow.pop %v1081
      %v1083 = vmul.f32 %v1057, 1.442695
      %v1084 = vpow.pop %v1083
      %v1085 = vmul.f32 %v1058, 1.442695
      %v1086 = vpow.pop %v1085
      %v1087 = vmul.f32 %v1059, 1.442695
      %v1088 = vpow.pop %v1087
      %v1089 = vmul.f32 %v1060, 1.442695
      %v1090 = vpow.pop %v1089
      %v1091 = vmul.f32 %v1061, 1.442695
      %v1092 = vpow.pop %v1091
      %v1093 = vmul.f32 %v1062, 1.442695
      %v1094 = vpow.pop %v1093
      %vm1095 = vcmp.gt.f32.partialorder %v1000, 0.0
      %vm1096 = vcmp.gt.f32.partialorder %v1003, 0.0
      %vm1097 = vcmp.gt.f32.partialorder %v1006, 0.0
      %vm1098 = vcmp.gt.f32.partialorder %v1009, 0.0
      %vm1099 = vcmp.gt.f32.partialorder %v1012, 0.0
      %vm1100 = vcmp.gt.f32.partialorder %v1015, 0.0
      %vm1101 = vcmp.gt.f32.partialorder %v1018, 0.0
      %vm1102 = vcmp.gt.f32.partialorder %v1021, 0.0
      %vm1103 = vcmp.gt.f32.partialorder %v1024, 0.0
      %vm1104 = vcmp.gt.f32.partialorder %v1027, 0.0
      %vm1105 = vcmp.gt.f32.partialorder %v1030, 0.0
      %vm1106 = vcmp.gt.f32.partialorder %v1033, 0.0
      %vm1107 = vcmp.gt.f32.partialorder %v1036, 0.0
      %vm1108 = vcmp.gt.f32.partialorder %v1039, 0.0
      %vm1109 = vcmp.gt.f32.partialorder %v1042, 0.0
      %vm1110 = vcmp.gt.f32.partialorder %v1045, 0.0
      %v1111 = vadd.f32 %v1000, 1e-16
      %v1112 = vadd.f32 %v1003, 1e-16
      %v1113 = vadd.f32 %v1006, 1e-16
      %v1114 = vadd.f32 %v1009, 1e-16
      %v1115 = vadd.f32 %v1012, 1e-16
      %v1116 = vadd.f32 %v1015, 1e-16
      %v1117 = vadd.f32 %v1018, 1e-16
      %v1118 = vadd.f32 %v1021, 1e-16
      %v1119 = vadd.f32 %v1024, 1e-16
      %v1120 = vadd.f32 %v1027, 1e-16
      %v1121 = vadd.f32 %v1030, 1e-16
      %v1122 = vadd.f32 %v1033, 1e-16
      %v1123 = vadd.f32 %v1036, 1e-16
      %v1124 = vadd.f32 %v1039, 1e-16
      %v1125 = vadd.f32 %v1042, 1e-16
      %v1126 = vadd.f32 %v1045, 1e-16
      %1143 = vrot.lane.b32.xlu0 %v1111, 124
      %v1144 = vpop.permute.xlu0 %1143
      %1145 = vrot.lane.b32.xlu0 %v1112, 124
      %v1146 = vpop.permute.xlu0 %1145
      %1147 = vrot.lane.b32.xlu0 %v1113, 124
      %v1148 = vpop.permute.xlu0 %1147
      %1149 = vrot.lane.b32.xlu0 %v1114, 124
      %v1150 = vpop.permute.xlu0 %1149
      %1151 = vrot.lane.b32.xlu0 %v1115, 124
      %v1152 = vpop.permute.xlu0 %1151
      %1153 = vrot.lane.b32.xlu0 %v1116, 124
      %v1154 = vpop.permute.xlu0 %1153
      %1155 = vrot.lane.b32.xlu0 %v1117, 124
      %v1156 = vpop.permute.xlu0 %1155
      %1157 = vrot.lane.b32.xlu0 %v1118, 124
      %v1158 = vpop.permute.xlu0 %1157
      %1159 = vrot.lane.b32.xlu0 %v1119, 124
      %v1160 = vpop.permute.xlu0 %1159
      %1161 = vrot.lane.b32.xlu0 %v1120, 124
      %v1162 = vpop.permute.xlu0 %1161
      %1163 = vrot.lane.b32.xlu0 %v1121, 124
      %v1164 = vpop.permute.xlu0 %1163
      %1165 = vrot.lane.b32.xlu0 %v1122, 124
      %v1166 = vpop.permute.xlu0 %1165
      %1167 = vrot.lane.b32.xlu0 %v1123, 124
      %v1168 = vpop.permute.xlu0 %1167
      %1169 = vrot.lane.b32.xlu0 %v1124, 124
      %v1170 = vpop.permute.xlu0 %1169
      %1171 = vrot.lane.b32.xlu0 %v1125, 124
      %v1172 = vpop.permute.xlu0 %1171
      %1173 = vrot.lane.b32.xlu0 %v1126, 124
      %v1174 = vpop.permute.xlu0 %1173
      %v1191 = vrcp.pop %v1144
      %v1192 = vmul.f32 %v1144, %v1191
      %v1193 = vsub.f32 1.0, %v1192
      %v1194 = vmul.f32 %v1191, %v1193
      %v1195 = vadd.f32 %v1191, %v1194
      %vm1196 = vweird.f32 %v1144
      %vm1197 = vweird.f32 %v1191
      %vm1198 = vmor %vm1196, %vm1197
      %v1199 = vsel %vm1198, %v1191, %v1195
      %v1200 = vand.u32 2147483647, %v1144
      %vm1201 = vcmp.eq.f32.partialorder %v1200, 8.507059e+37
      %v1202 = vand.u32 %v1144, 2147483648
      %v1203 = vor.u32 1.1754944e-38, %v1202
      %v1204 = vsel %vm1201, %v1203, %v1199
      %v1205 = vmul.f32 %v1064, %v1204
      %v1206 = vrcp.pop %v1146
      %v1207 = vmul.f32 %v1146, %v1206
      %v1208 = vsub.f32 1.0, %v1207
      %v1209 = vmul.f32 %v1206, %v1208
      %v1210 = vadd.f32 %v1206, %v1209
      %vm1211 = vweird.f32 %v1146
      %vm1212 = vweird.f32 %v1206
      %vm1213 = vmor %vm1211, %vm1212
      %v1214 = vsel %vm1213, %v1206, %v1210
      %v1215 = vand.u32 2147483647, %v1146
      %vm1216 = vcmp.eq.f32.partialorder %v1215, 8.507059e+37
      %v1217 = vand.u32 %v1146, 2147483648
      %v1218 = vor.u32 1.1754944e-38, %v1217
      %v1219 = vsel %vm1216, %v1218, %v1214
      %v1220 = vmul.f32 %v1066, %v1219
      %v1221 = vrcp.pop %v1148
      %v1222 = vmul.f32 %v1148, %v1221
      %v1223 = vsub.f32 1.0, %v1222
      %v1224 = vmul.f32 %v1221, %v1223
      %v1225 = vadd.f32 %v1221, %v1224
      %vm1226 = vweird.f32 %v1148
      %vm1227 = vweird.f32 %v1221
      %vm1228 = vmor %vm1226, %vm1227
      %v1229 = vsel %vm1228, %v1221, %v1225
      %v1230 = vand.u32 2147483647, %v1148
      %vm1231 = vcmp.eq.f32.partialorder %v1230, 8.507059e+37
      %v1232 = vand.u32 %v1148, 2147483648
      %v1233 = vor.u32 1.1754944e-38, %v1232
      %v1234 = vsel %vm1231, %v1233, %v1229
      %v1235 = vmul.f32 %v1068, %v1234
      %v1236 = vrcp.pop %v1150
      %v1237 = vmul.f32 %v1150, %v1236
      %v1238 = vsub.f32 1.0, %v1237
      %v1239 = vmul.f32 %v1236, %v1238
      %v1240 = vadd.f32 %v1236, %v1239
      %vm1241 = vweird.f32 %v1150
      %vm1242 = vweird.f32 %v1236
      %vm1243 = vmor %vm1241, %vm1242
      %v1244 = vsel %vm1243, %v1236, %v1240
      %v1245 = vand.u32 2147483647, %v1150
      %vm1246 = vcmp.eq.f32.partialorder %v1245, 8.507059e+37
      %v1247 = vand.u32 %v1150, 2147483648
      %v1248 = vor.u32 1.1754944e-38, %v1247
      %v1249 = vsel %vm1246, %v1248, %v1244
      %v1250 = vmul.f32 %v1070, %v1249
      %v1251 = vrcp.pop %v1152
      %v1252 = vmul.f32 %v1152, %v1251
      %v1253 = vsub.f32 1.0, %v1252
      %v1254 = vmul.f32 %v1251, %v1253
      %v1255 = vadd.f32 %v1251, %v1254
      %vm1256 = vweird.f32 %v1152
      %vm1257 = vweird.f32 %v1251
      %vm1258 = vmor %vm1256, %vm1257
      %v1259 = vsel %vm1258, %v1251, %v1255
      %v1260 = vand.u32 2147483647, %v1152
      %vm1261 = vcmp.eq.f32.partialorder %v1260, 8.507059e+37
      %v1262 = vand.u32 %v1152, 2147483648
      %v1263 = vor.u32 1.1754944e-38, %v1262
      %v1264 = vsel %vm1261, %v1263, %v1259
      %v1265 = vmul.f32 %v1072, %v1264
      %v1266 = vrcp.pop %v1154
      %v1267 = vmul.f32 %v1154, %v1266
      %v1268 = vsub.f32 1.0, %v1267
      %v1269 = vmul.f32 %v1266, %v1268
      %v1270 = vadd.f32 %v1266, %v1269
      %vm1271 = vweird.f32 %v1154
      %vm1272 = vweird.f32 %v1266
      %vm1273 = vmor %vm1271, %vm1272
      %v1274 = vsel %vm1273, %v1266, %v1270
      %v1275 = vand.u32 2147483647, %v1154
      %vm1276 = vcmp.eq.f32.partialorder %v1275, 8.507059e+37
      %v1277 = vand.u32 %v1154, 2147483648
      %v1278 = vor.u32 1.1754944e-38, %v1277
      %v1279 = vsel %vm1276, %v1278, %v1274
      %v1280 = vmul.f32 %v1074, %v1279
      %v1281 = vrcp.pop %v1156
      %v1282 = vmul.f32 %v1156, %v1281
      %v1283 = vsub.f32 1.0, %v1282
      %v1284 = vmul.f32 %v1281, %v1283
      %v1285 = vadd.f32 %v1281, %v1284
      %vm1286 = vweird.f32 %v1156
      %vm1287 = vweird.f32 %v1281
      %vm1288 = vmor %vm1286, %vm1287
      %v1289 = vsel %vm1288, %v1281, %v1285
      %v1290 = vand.u32 2147483647, %v1156
      %vm1291 = vcmp.eq.f32.partialorder %v1290, 8.507059e+37
      %v1292 = vand.u32 %v1156, 2147483648
      %v1293 = vor.u32 1.1754944e-38, %v1292
      %v1294 = vsel %vm1291, %v1293, %v1289
      %v1295 = vmul.f32 %v1076, %v1294
      %v1296 = vrcp.pop %v1158
      %v1297 = vmul.f32 %v1158, %v1296
      %v1298 = vsub.f32 1.0, %v1297
      %v1299 = vmul.f32 %v1296, %v1298
      %v1300 = vadd.f32 %v1296, %v1299
      %vm1301 = vweird.f32 %v1158
      %vm1302 = vweird.f32 %v1296
      %vm1303 = vmor %vm1301, %vm1302
      %v1304 = vsel %vm1303, %v1296, %v1300
      %v1305 = vand.u32 2147483647, %v1158
      %vm1306 = vcmp.eq.f32.partialorder %v1305, 8.507059e+37
      %v1307 = vand.u32 %v1158, 2147483648
      %v1308 = vor.u32 1.1754944e-38, %v1307
      %v1309 = vsel %vm1306, %v1308, %v1304
      %v1310 = vmul.f32 %v1078, %v1309
      %v1311 = vrcp.pop %v1160
      %v1312 = vmul.f32 %v1160, %v1311
      %v1313 = vsub.f32 1.0, %v1312
      %v1314 = vmul.f32 %v1311, %v1313
      %v1315 = vadd.f32 %v1311, %v1314
      %vm1316 = vweird.f32 %v1160
      %vm1317 = vweird.f32 %v1311
      %vm1318 = vmor %vm1316, %vm1317
      %v1319 = vsel %vm1318, %v1311, %v1315
      %v1320 = vand.u32 2147483647, %v1160
      %vm1321 = vcmp.eq.f32.partialorder %v1320, 8.507059e+37
      %v1322 = vand.u32 %v1160, 2147483648
      %v1323 = vor.u32 1.1754944e-38, %v1322
      %v1324 = vsel %vm1321, %v1323, %v1319
      %v1325 = vmul.f32 %v1080, %v1324
      %v1326 = vrcp.pop %v1162
      %v1327 = vmul.f32 %v1162, %v1326
      %v1328 = vsub.f32 1.0, %v1327
      %v1329 = vmul.f32 %v1326, %v1328
      %v1330 = vadd.f32 %v1326, %v1329
      %vm1331 = vweird.f32 %v1162
      %vm1332 = vweird.f32 %v1326
      %vm1333 = vmor %vm1331, %vm1332
      %v1334 = vsel %vm1333, %v1326, %v1330
      %v1335 = vand.u32 2147483647, %v1162
      %vm1336 = vcmp.eq.f32.partialorder %v1335, 8.507059e+37
      %v1337 = vand.u32 %v1162, 2147483648
      %v1338 = vor.u32 1.1754944e-38, %v1337
      %v1339 = vsel %vm1336, %v1338, %v1334
      %v1340 = vmul.f32 %v1082, %v1339
      %v1341 = vrcp.pop %v1164
      %v1342 = vmul.f32 %v1164, %v1341
      %v1343 = vsub.f32 1.0, %v1342
      %v1344 = vmul.f32 %v1341, %v1343
      %v1345 = vadd.f32 %v1341, %v1344
      %vm1346 = vweird.f32 %v1164
      %vm1347 = vweird.f32 %v1341
      %vm1348 = vmor %vm1346, %vm1347
      %v1349 = vsel %vm1348, %v1341, %v1345
      %v1350 = vand.u32 2147483647, %v1164
      %vm1351 = vcmp.eq.f32.partialorder %v1350, 8.507059e+37
      %v1352 = vand.u32 %v1164, 2147483648
      %v1353 = vor.u32 1.1754944e-38, %v1352
      %v1354 = vsel %vm1351, %v1353, %v1349
      %v1355 = vmul.f32 %v1084, %v1354
      %v1356 = vrcp.pop %v1166
      %v1357 = vmul.f32 %v1166, %v1356
      %v1358 = vsub.f32 1.0, %v1357
      %v1359 = vmul.f32 %v1356, %v1358
      %v1360 = vadd.f32 %v1356, %v1359
      %vm1361 = vweird.f32 %v1166
      %vm1362 = vweird.f32 %v1356
      %vm1363 = vmor %vm1361, %vm1362
      %v1364 = vsel %vm1363, %v1356, %v1360
      %v1365 = vand.u32 2147483647, %v1166
      %vm1366 = vcmp.eq.f32.partialorder %v1365, 8.507059e+37
      %v1367 = vand.u32 %v1166, 2147483648
      %v1368 = vor.u32 1.1754944e-38, %v1367
      %v1369 = vsel %vm1366, %v1368, %v1364
      %v1370 = vmul.f32 %v1086, %v1369
      %v1371 = vrcp.pop %v1168
      %v1372 = vmul.f32 %v1168, %v1371
      %v1373 = vsub.f32 1.0, %v1372
      %v1374 = vmul.f32 %v1371, %v1373
      %v1375 = vadd.f32 %v1371, %v1374
      %vm1376 = vweird.f32 %v1168
      %vm1377 = vweird.f32 %v1371
      %vm1378 = vmor %vm1376, %vm1377
      %v1379 = vsel %vm1378, %v1371, %v1375
      %v1380 = vand.u32 2147483647, %v1168
      %vm1381 = vcmp.eq.f32.partialorder %v1380, 8.507059e+37
      %v1382 = vand.u32 %v1168, 2147483648
      %v1383 = vor.u32 1.1754944e-38, %v1382
      %v1384 = vsel %vm1381, %v1383, %v1379
      %v1385 = vmul.f32 %v1088, %v1384
      %v1386 = vrcp.pop %v1170
      %v1387 = vmul.f32 %v1170, %v1386
      %v1388 = vsub.f32 1.0, %v1387
      %v1389 = vmul.f32 %v1386, %v1388
      %v1390 = vadd.f32 %v1386, %v1389
      %vm1391 = vweird.f32 %v1170
      %vm1392 = vweird.f32 %v1386
      %vm1393 = vmor %vm1391, %vm1392
      %v1394 = vsel %vm1393, %v1386, %v1390
      %v1395 = vand.u32 2147483647, %v1170
      %vm1396 = vcmp.eq.f32.partialorder %v1395, 8.507059e+37
      %v1397 = vand.u32 %v1170, 2147483648
      %v1398 = vor.u32 1.1754944e-38, %v1397
      %v1399 = vsel %vm1396, %v1398, %v1394
      %v1400 = vmul.f32 %v1090, %v1399
      %v1401 = vrcp.pop %v1172
      %v1402 = vmul.f32 %v1172, %v1401
      %v1403 = vsub.f32 1.0, %v1402
      %v1404 = vmul.f32 %v1401, %v1403
      %v1405 = vadd.f32 %v1401, %v1404
      %vm1406 = vweird.f32 %v1172
      %vm1407 = vweird.f32 %v1401
      %vm1408 = vmor %vm1406, %vm1407
      %v1409 = vsel %vm1408, %v1401, %v1405
      %v1410 = vand.u32 2147483647, %v1172
      %vm1411 = vcmp.eq.f32.partialorder %v1410, 8.507059e+37
      %v1412 = vand.u32 %v1172, 2147483648
      %v1413 = vor.u32 1.1754944e-38, %v1412
      %v1414 = vsel %vm1411, %v1413, %v1409
      %v1415 = vmul.f32 %v1092, %v1414
      %v1416 = vrcp.pop %v1174
      %v1417 = vmul.f32 %v1174, %v1416
      %v1418 = vsub.f32 1.0, %v1417
      %v1419 = vmul.f32 %v1416, %v1418
      %v1420 = vadd.f32 %v1416, %v1419
      %vm1421 = vweird.f32 %v1174
      %vm1422 = vweird.f32 %v1416
      %vm1423 = vmor %vm1421, %vm1422
      %v1424 = vsel %vm1423, %v1416, %v1420
      %v1425 = vand.u32 2147483647, %v1174
      %vm1426 = vcmp.eq.f32.partialorder %v1425, 8.507059e+37
      %v1427 = vand.u32 %v1174, 2147483648
      %v1428 = vor.u32 1.1754944e-38, %v1427
      %v1429 = vsel %vm1426, %v1428, %v1424
      %v1430 = vmul.f32 %v1094, %v1429
      %1447 = vrot.lane.b32.xlu0 %v1205, 4
      %v1448 = vpop.permute.xlu0 %1447
      %1449 = vrot.lane.b32.xlu0 %v1220, 4
      %v1450 = vpop.permute.xlu0 %1449
      %1451 = vrot.lane.b32.xlu0 %v1235, 4
      %v1452 = vpop.permute.xlu0 %1451
      %1453 = vrot.lane.b32.xlu0 %v1250, 4
      %v1454 = vpop.permute.xlu0 %1453
      %1455 = vrot.lane.b32.xlu0 %v1265, 4
      %v1456 = vpop.permute.xlu0 %1455
      %1457 = vrot.lane.b32.xlu0 %v1280, 4
      %v1458 = vpop.permute.xlu0 %1457
      %1459 = vrot.lane.b32.xlu0 %v1295, 4
      %v1460 = vpop.permute.xlu0 %1459
      %1461 = vrot.lane.b32.xlu0 %v1310, 4
      %v1462 = vpop.permute.xlu0 %1461
      %1463 = vrot.lane.b32.xlu0 %v1325, 4
      %v1464 = vpop.permute.xlu0 %1463
      %1465 = vrot.lane.b32.xlu0 %v1340, 4
      %v1466 = vpop.permute.xlu0 %1465
      %1467 = vrot.lane.b32.xlu0 %v1355, 4
      %v1468 = vpop.permute.xlu0 %1467
      %1469 = vrot.lane.b32.xlu0 %v1370, 4
      %v1470 = vpop.permute.xlu0 %1469
      %1471 = vrot.lane.b32.xlu0 %v1385, 4
      %v1472 = vpop.permute.xlu0 %1471
      %1473 = vrot.lane.b32.xlu0 %v1400, 4
      %v1474 = vpop.permute.xlu0 %1473
      %1475 = vrot.lane.b32.xlu0 %v1415, 4
      %v1476 = vpop.permute.xlu0 %1475
      %1477 = vrot.lane.b32.xlu0 %v1430, 4
      %v1478 = vpop.permute.xlu0 %1477
      %v1495 = vsel %vm1095, %v1448, 0.0
      %v1496 = vsel %vm1096, %v1450, 0.0
      %v1497 = vsel %vm1097, %v1452, 0.0
      %v1498 = vsel %vm1098, %v1454, 0.0
      %v1499 = vsel %vm1099, %v1456, 0.0
      %v1500 = vsel %vm1100, %v1458, 0.0
      %v1501 = vsel %vm1101, %v1460, 0.0
      %v1502 = vsel %vm1102, %v1462, 0.0
      %v1503 = vsel %vm1103, %v1464, 0.0
      %v1504 = vsel %vm1104, %v1466, 0.0
      %v1505 = vsel %vm1105, %v1468, 0.0
      %v1506 = vsel %vm1106, %v1470, 0.0
      %v1507 = vsel %vm1107, %v1472, 0.0
      %v1508 = vsel %vm1108, %v1474, 0.0
      %v1509 = vsel %vm1109, %v1476, 0.0
      %v1510 = vsel %vm1110, %v1478, 0.0
      %v1511 = vld [vmem:[%s9] sm:$0xf]
      %1528 = vrot.lane.b32.xlu0 %v1495, 124
      %v1529 = vpop.permute.xlu0 %1528
      %1530 = vrot.lane.b32.xlu0 %v1496, 124
      %v1531 = vpop.permute.xlu0 %1530
      %1532 = vrot.lane.b32.xlu0 %v1497, 124
      %v1533 = vpop.permute.xlu0 %1532
      %1534 = vrot.lane.b32.xlu0 %v1498, 124
      %v1535 = vpop.permute.xlu0 %1534
      %1536 = vrot.lane.b32.xlu0 %v1499, 124
      %v1537 = vpop.permute.xlu0 %1536
      %1538 = vrot.lane.b32.xlu0 %v1500, 124
      %v1539 = vpop.permute.xlu0 %1538
      %1540 = vrot.lane.b32.xlu0 %v1501, 124
      %v1541 = vpop.permute.xlu0 %1540
      %1542 = vrot.lane.b32.xlu0 %v1502, 124
      %v1543 = vpop.permute.xlu0 %1542
      %1544 = vrot.lane.b32.xlu0 %v1503, 124
      %v1545 = vpop.permute.xlu0 %1544
      %1546 = vrot.lane.b32.xlu0 %v1504, 124
      %v1547 = vpop.permute.xlu0 %1546
      %1548 = vrot.lane.b32.xlu0 %v1505, 124
      %v1549 = vpop.permute.xlu0 %1548
      %1550 = vrot.lane.b32.xlu0 %v1506, 124
      %v1551 = vpop.permute.xlu0 %1550
      %1552 = vrot.lane.b32.xlu0 %v1507, 124
      %v1553 = vpop.permute.xlu0 %1552
      %1554 = vrot.lane.b32.xlu0 %v1508, 124
      %v1555 = vpop.permute.xlu0 %1554
      %1556 = vrot.lane.b32.xlu0 %v1509, 124
      %v1557 = vpop.permute.xlu0 %1556
      %1558 = vrot.lane.b32.xlu0 %v1510, 124
      %v1559 = vpop.permute.xlu0 %1558
      %vm1560 = vcmask 31744
      %v1561 = vsel %vm1560, %v1529, 0
      %v1563 = vsel %vm1560, %v1531, 0
      %v1565 = vsel %vm1560, %v1533, 0
      %v1567 = vsel %vm1560, %v1535, 0
      %v1569 = vsel %vm1560, %v1537, 0
      %v1571 = vsel %vm1560, %v1539, 0
      %v1573 = vsel %vm1560, %v1541, 0
      %v1575 = vsel %vm1560, %v1543, 0
      %v1577 = vsel %vm1560, %v1545, 0
      %v1579 = vsel %vm1560, %v1547, 0
      %v1581 = vsel %vm1560, %v1549, 0
      %v1583 = vsel %vm1560, %v1551, 0
      %v1585 = vsel %vm1560, %v1553, 0
      %v1587 = vsel %vm1560, %v1555, 0
      %v1589 = vsel %vm1560, %v1557, 0
      %v1591 = vsel %vm1560, %v1559, 0
      %vm1593 = vcmask 1043456
      %v1595 = vsel %vm1593, %v1511, 0
      %1597 = vmatpush.msra.mxu0 0.0
      %1598 = vmatpush.msra.mxu0 0.0
      %1599 = vmatpush.msra.mxu0 0.0
      %1600 = vmatpush.msra.mxu0 0.0
      %1601 = vmatpush.msra.mxu0 0.0
      %1602 = vmatpush.msra.mxu0 0.0
      %1603 = vmatpush.msra.mxu0 0.0
      %1604 = vmatpush.msra.mxu0 0.0
      %1605 = vmatpush.msra.mxu0 0.0
      %1606 = vmatpush.msra.mxu0 0.0
      %1607 = vmatpush.msra.mxu0 0.0
      %1608 = vmatpush.msra.mxu0 0.0
      %1609 = vmatpush.msra.mxu0 0.0
      %1610 = vmatpush.msra.mxu0 0.0
      %1611 = vmatpush.msra.mxu0 0.0
      %1612 = vmatpush.msra.mxu0 %v1595
      %1613 = vmatmul.f32.gmra.mxu0 %v1561
      %v1614 = vpop.f32.mrf.mxu0
      %v1615 = vadd.f32 0.0, %v1614
      %1616 = vmatmul.f32.gmra.mxu0 %v1563
      %v1617 = vpop.f32.mrf.mxu0
      %v1618 = vadd.f32 0.0, %v1617
      %1619 = vmatmul.f32.gmra.mxu0 %v1565
      %v1620 = vpop.f32.mrf.mxu0
      %v1621 = vadd.f32 0.0, %v1620
      %1622 = vmatmul.f32.gmra.mxu0 %v1567
      %v1623 = vpop.f32.mrf.mxu0
      %v1624 = vadd.f32 0.0, %v1623
      %1625 = vmatmul.f32.gmra.mxu0 %v1569
      %v1626 = vpop.f32.mrf.mxu0
      %v1627 = vadd.f32 0.0, %v1626
      %1628 = vmatmul.f32.gmra.mxu0 %v1571
      %v1629 = vpop.f32.mrf.mxu0
      %v1630 = vadd.f32 0.0, %v1629
      %1631 = vmatmul.f32.gmra.mxu0 %v1573
      %v1632 = vpop.f32.mrf.mxu0
      %v1633 = vadd.f32 0.0, %v1632
      %1634 = vmatmul.f32.gmra.mxu0 %v1575
      %v1635 = vpop.f32.mrf.mxu0
      %v1636 = vadd.f32 0.0, %v1635
      %1637 = vmatmul.f32.gmra.mxu0 %v1577
      %v1638 = vpop.f32.mrf.mxu0
      %v1639 = vadd.f32 0.0, %v1638
      %1640 = vmatmul.f32.gmra.mxu0 %v1579
      %v1641 = vpop.f32.mrf.mxu0
      %v1642 = vadd.f32 0.0, %v1641
      %1643 = vmatmul.f32.gmra.mxu0 %v1581
      %v1644 = vpop.f32.mrf.mxu0
      %v1645 = vadd.f32 0.0, %v1644
      %1646 = vmatmul.f32.gmra.mxu0 %v1583
      %v1647 = vpop.f32.mrf.mxu0
      %v1648 = vadd.f32 0.0, %v1647
      %1649 = vmatmul.f32.gmra.mxu0 %v1585
      %v1650 = vpop.f32.mrf.mxu0
      %v1651 = vadd.f32 0.0, %v1650
      %1652 = vmatmul.f32.gmra.mxu0 %v1587
      %v1653 = vpop.f32.mrf.mxu0
      %v1654 = vadd.f32 0.0, %v1653
      %1655 = vmatmul.f32.gmra.mxu0 %v1589
      %v1656 = vpop.f32.mrf.mxu0
      %v1657 = vadd.f32 0.0, %v1656
      %1658 = vmatmul.f32.gmra.mxu0 %v1591
      %v1659 = vpop.f32.mrf.mxu0
      %v1660 = vadd.f32 0.0, %v1659
      %1661 = vdwg.mxu0
      %v1662 = vld [vmem:[#allocation2] sm:$0xf]
      %v1663 = vld [vmem:[#allocation2 + $0x4] sm:$0xf]
      %v1664 = vld [vmem:[#allocation2 + $0x8] sm:$0xf]
      %v1665 = vld [vmem:[#allocation2 + $0xc] sm:$0xf]
      %v1666 = vld [vmem:[#allocation2 + $0x10] sm:$0xf]
      %v1667 = vld [vmem:[#allocation2 + $0x14] sm:$0xf]
      %v1668 = vld [vmem:[#allocation2 + $0x18] sm:$0xf]
      %v1669 = vld [vmem:[#allocation2 + $0x1c] sm:$0xf]
      %v1670 = vld [vmem:[#allocation2 + $0x20] sm:$0xf]
      %v1671 = vld [vmem:[#allocation2 + $0x24] sm:$0xf]
      %v1672 = vld [vmem:[#allocation2 + $0x28] sm:$0xf]
      %v1673 = vld [vmem:[#allocation2 + $0x2c] sm:$0xf]
      %v1674 = vld [vmem:[#allocation2 + $0x30] sm:$0xf]
      %v1675 = vld [vmem:[#allocation2 + $0x34] sm:$0xf]
      %v1676 = vld [vmem:[#allocation2 + $0x38] sm:$0xf]
      %v1677 = vld [vmem:[#allocation2 + $0x3c] sm:$0xf]
      %v1694 = vunpack.c.l.b16 %v1662
      %v1695 = vunpack.c.l.b16 %v1663
      %v1696 = vunpack.c.l.b16 %v1664
      %v1697 = vunpack.c.l.b16 %v1665
      %v1698 = vunpack.c.l.b16 %v1666
      %v1699 = vunpack.c.l.b16 %v1667
      %v1700 = vunpack.c.l.b16 %v1668
      %v1701 = vunpack.c.l.b16 %v1669
      %v1702 = vunpack.c.l.b16 %v1670
      %v1703 = vunpack.c.l.b16 %v1671
      %v1704 = vunpack.c.l.b16 %v1672
      %v1705 = vunpack.c.l.b16 %v1673
      %v1706 = vunpack.c.l.b16 %v1674
      %v1707 = vunpack.c.l.b16 %v1675
      %v1708 = vunpack.c.l.b16 %v1676
      %v1709 = vunpack.c.l.b16 %v1677
      %v1710 = vpack.c.b16 %v1695, %v1694
      %v1711 = vpack.c.b16 %v1697, %v1696
      %v1712 = vpack.c.b16 %v1699, %v1698
      %v1713 = vpack.c.b16 %v1701, %v1700
      %v1714 = vpack.c.b16 %v1703, %v1702
      %v1715 = vpack.c.b16 %v1705, %v1704
      %v1716 = vpack.c.b16 %v1707, %v1706
      %v1717 = vpack.c.b16 %v1709, %v1708
      %1726 = vmatpush.bf16.msra.mxu0 %v1717
      %1727 = vmatpush.bf16.msra.mxu0 %v1716
      %1728 = vmatpush.bf16.msra.mxu0 %v1715
      %1729 = vmatpush.bf16.msra.mxu0 %v1714
      %1730 = vmatpush.bf16.msra.mxu0 %v1713
      %1731 = vmatpush.bf16.msra.mxu0 %v1712
      %1732 = vmatpush.bf16.msra.mxu0 %v1711
      %1733 = vmatpush.bf16.msra.mxu0 %v1710
      %1734 = vmatmul.bf16.gmra.mxu0 %v805
      %v1735 = vpop.f32.mrf.mxu0
      %v1736 = vadd.f32 0.0, %v1735
      %v1737 = vpop.f32.mrf.mxu0
      %v1738 = vadd.f32 0.0, %v1737
      %1739 = vmatmul.bf16.gmra.mxu0 %v806
      %v1740 = vpop.f32.mrf.mxu0
      %v1741 = vadd.f32 0.0, %v1740
      %v1742 = vpop.f32.mrf.mxu0
      %v1743 = vadd.f32 0.0, %v1742
      %1744 = vmatmul.bf16.gmra.mxu0 %v807
      %v1745 = vpop.f32.mrf.mxu0
      %v1746 = vadd.f32 0.0, %v1745
      %v1747 = vpop.f32.mrf.mxu0
      %v1748 = vadd.f32 0.0, %v1747
      %1749 = vmatmul.bf16.gmra.mxu0 %v808
      %v1750 = vpop.f32.mrf.mxu0
      %v1751 = vadd.f32 0.0, %v1750
      %v1752 = vpop.f32.mrf.mxu0
      %v1753 = vadd.f32 0.0, %v1752
      %1754 = vmatmul.bf16.gmra.mxu0 %v809
      %v1755 = vpop.f32.mrf.mxu0
      %v1756 = vadd.f32 0.0, %v1755
      %v1757 = vpop.f32.mrf.mxu0
      %v1758 = vadd.f32 0.0, %v1757
      %1759 = vmatmul.bf16.gmra.mxu0 %v810
      %v1760 = vpop.f32.mrf.mxu0
      %v1761 = vadd.f32 0.0, %v1760
      %v1762 = vpop.f32.mrf.mxu0
      %v1763 = vadd.f32 0.0, %v1762
      %1764 = vmatmul.bf16.gmra.mxu0 %v811
      %v1765 = vpop.f32.mrf.mxu0
      %v1766 = vadd.f32 0.0, %v1765
      %v1767 = vpop.f32.mrf.mxu0
      %v1768 = vadd.f32 0.0, %v1767
      %1769 = vmatmul.bf16.gmra.mxu0 %v812
      %v1770 = vpop.f32.mrf.mxu0
      %v1771 = vadd.f32 0.0, %v1770
      %v1772 = vpop.f32.mrf.mxu0
      %v1773 = vadd.f32 0.0, %v1772
      %1774 = vdwg.mxu0
      %v1775 = vmul.f32 %v1615, %v1736
      %v1776 = vmul.f32 %v1618, %v1738
      %v1777 = vmul.f32 %v1621, %v1741
      %v1778 = vmul.f32 %v1624, %v1743
      %v1779 = vmul.f32 %v1627, %v1746
      %v1780 = vmul.f32 %v1630, %v1748
      %v1781 = vmul.f32 %v1633, %v1751
      %v1782 = vmul.f32 %v1636, %v1753
      %v1783 = vmul.f32 %v1639, %v1756
      %v1784 = vmul.f32 %v1642, %v1758
      %v1785 = vmul.f32 %v1645, %v1761
      %v1786 = vmul.f32 %v1648, %v1763
      %v1787 = vmul.f32 %v1651, %v1766
      %v1788 = vmul.f32 %v1654, %v1768
      %v1789 = vmul.f32 %v1657, %v1771
      %v1790 = vmul.f32 %v1660, %v1773
      %v1791 = vmul.f32 %v1615, %v934
      %v1792 = vmul.f32 %v1618, %v935
      %v1793 = vmul.f32 %v1621, %v936
      %v1794 = vmul.f32 %v1624, %v937
      %v1795 = vmul.f32 %v1627, %v938
      %v1796 = vmul.f32 %v1630, %v939
      %v1797 = vmul.f32 %v1633, %v940
      %v1798 = vmul.f32 %v1636, %v941
      %v1799 = vmul.f32 %v1639, %v942
      %v1800 = vmul.f32 %v1642, %v943
      %v1801 = vmul.f32 %v1645, %v944
      %v1802 = vmul.f32 %v1648, %v945
      %v1803 = vmul.f32 %v1651, %v946
      %v1804 = vmul.f32 %v1654, %v947
      %v1805 = vmul.f32 %v1657, %v948
      %v1806 = vmul.f32 %v1660, %v949
      %v1807 = vld [vmem:[#allocation3] sm:$0xff]
      %v1808 = vld [vmem:[#allocation3 + $0x8] sm:$0xff]
      %v1809 = vld [vmem:[#allocation3 + $0x10] sm:$0xff]
      %v1810 = vld [vmem:[#allocation3 + $0x18] sm:$0xff]
      %v1811 = vld [vmem:[#allocation3 + $0x20] sm:$0xff]
      %v1812 = vld [vmem:[#allocation3 + $0x28] sm:$0xff]
      %v1813 = vld [vmem:[#allocation3 + $0x30] sm:$0xff]
      %v1814 = vld [vmem:[#allocation3 + $0x38] sm:$0xff]
      %v1815 = vld [vmem:[#allocation3 + $0x40] sm:$0xff]
      %v1816 = vld [vmem:[#allocation3 + $0x48] sm:$0xff]
      %v1817 = vld [vmem:[#allocation3 + $0x50] sm:$0xff]
      %v1818 = vld [vmem:[#allocation3 + $0x58] sm:$0xff]
      %v1819 = vld [vmem:[#allocation3 + $0x60] sm:$0xff]
      %v1820 = vld [vmem:[#allocation3 + $0x68] sm:$0xff]
      %v1821 = vld [vmem:[#allocation3 + $0x70] sm:$0xff]
      %v1822 = vld [vmem:[#allocation3 + $0x78] sm:$0xff]
      %v1823 = vld [vmem:[#allocation3 + $0x80] sm:$0xff]
      %v1824 = vld [vmem:[#allocation3 + $0x88] sm:$0xff]
      %v1825 = vld [vmem:[#allocation3 + $0x90] sm:$0xff]
      %v1826 = vld [vmem:[#allocation3 + $0x98] sm:$0xff]
      %v1827 = vld [vmem:[#allocation3 + $0xa0] sm:$0xff]
      %v1828 = vld [vmem:[#allocation3 + $0xa8] sm:$0xff]
      %v1829 = vld [vmem:[#allocation3 + $0xb0] sm:$0xff]
      %v1830 = vld [vmem:[#allocation3 + $0xb8] sm:$0xff]
      %v1831 = vld [vmem:[#allocation3 + $0xc0] sm:$0xff]
      %v1832 = vld [vmem:[#allocation3 + $0xc8] sm:$0xff]
      %v1833 = vld [vmem:[#allocation3 + $0xd0] sm:$0xff]
      %v1834 = vld [vmem:[#allocation3 + $0xd8] sm:$0xff]
      %v1835 = vld [vmem:[#allocation3 + $0xe0] sm:$0xff]
      %v1836 = vld [vmem:[#allocation3 + $0xe8] sm:$0xff]
      %v1837 = vld [vmem:[#allocation3 + $0xf0] sm:$0xff]
      %v1838 = vld [vmem:[#allocation3 + $0xf8] sm:$0xff]
      %v1839 = vpack.c.bf16 %v1776, %v1775
      %v1840 = vpack.c.bf16 %v1792, %v1791
      %v1841 = vpack.c.bf16 %v1778, %v1777
      %v1842 = vpack.c.bf16 %v1794, %v1793
      %v1843 = vpack.c.bf16 %v1780, %v1779
      %v1844 = vpack.c.bf16 %v1796, %v1795
      %v1845 = vpack.c.bf16 %v1782, %v1781
      %v1846 = vpack.c.bf16 %v1798, %v1797
      %v1847 = vpack.c.bf16 %v1784, %v1783
      %v1848 = vpack.c.bf16 %v1800, %v1799
      %v1849 = vpack.c.bf16 %v1786, %v1785
      %v1850 = vpack.c.bf16 %v1802, %v1801
      %v1851 = vpack.c.bf16 %v1788, %v1787
      %v1852 = vpack.c.bf16 %v1804, %v1803
      %v1853 = vpack.c.bf16 %v1790, %v1789
      %v1854 = vpack.c.bf16 %v1806, %v1805
      %1855 = vmatpush.bf16.msra.mxu0 %v1853
      %1856 = vmatpush.bf16.msra.mxu0 %v1851
      %1857 = vmatpush.bf16.msra.mxu0 %v1849
      %1858 = vmatpush.bf16.msra.mxu0 %v1847
      %1859 = vmatpush.bf16.msra.mxu0 %v1845
      %1860 = vmatpush.bf16.msra.mxu0 %v1843
      %1861 = vmatpush.bf16.msra.mxu0 %v1841
      %1862 = vmatpush.bf16.msra.mxu0 %v1839
      %1863 = vmatmul.bf16.gmra.mxu0 %v926
      %v1864 = vpop.f32.mrf.mxu0
      %v1865 = vadd.f32 0.0, %v1864
      %v1866 = vpop.f32.mrf.mxu0
      %v1867 = vadd.f32 0.0, %v1866
      %1868 = vmatmul.bf16.gmra.mxu0 %v927
      %v1869 = vpop.f32.mrf.mxu0
      %v1870 = vadd.f32 0.0, %v1869
      %v1871 = vpop.f32.mrf.mxu0
      %v1872 = vadd.f32 0.0, %v1871
      %1873 = vmatmul.bf16.gmra.mxu0 %v928
      %v1874 = vpop.f32.mrf.mxu0
      %v1875 = vadd.f32 0.0, %v1874
      %v1876 = vpop.f32.mrf.mxu0
      %v1877 = vadd.f32 0.0, %v1876
      %1878 = vmatmul.bf16.gmra.mxu0 %v929
      %v1879 = vpop.f32.mrf.mxu0
      %v1880 = vadd.f32 0.0, %v1879
      %v1881 = vpop.f32.mrf.mxu0
      %v1882 = vadd.f32 0.0, %v1881
      %1883 = vmatmul.bf16.gmra.mxu0 %v930
      %v1884 = vpop.f32.mrf.mxu0
      %v1885 = vadd.f32 0.0, %v1884
      %v1886 = vpop.f32.mrf.mxu0
      %v1887 = vadd.f32 0.0, %v1886
      %1888 = vmatmul.bf16.gmra.mxu0 %v931
      %v1889 = vpop.f32.mrf.mxu0
      %v1890 = vadd.f32 0.0, %v1889
      %v1891 = vpop.f32.mrf.mxu0
      %v1892 = vadd.f32 0.0, %v1891
      %1893 = vmatmul.bf16.gmra.mxu0 %v932
      %v1894 = vpop.f32.mrf.mxu0
      %v1895 = vadd.f32 0.0, %v1894
      %v1896 = vpop.f32.mrf.mxu0
      %v1897 = vadd.f32 0.0, %v1896
      %1898 = vmatmul.bf16.gmra.mxu0 %v933
      %v1899 = vpop.f32.mrf.mxu0
      %v1900 = vadd.f32 0.0, %v1899
      %v1901 = vpop.f32.mrf.mxu0
      %v1902 = vadd.f32 0.0, %v1901
      %1903 = vdwg.mxu0
      %1904 = vmatpush.bf16.msra.mxu0 %v1854
      %1905 = vmatpush.bf16.msra.mxu0 %v1852
      %1906 = vmatpush.bf16.msra.mxu0 %v1850
      %1907 = vmatpush.bf16.msra.mxu0 %v1848
      %1908 = vmatpush.bf16.msra.mxu0 %v1846
      %1909 = vmatpush.bf16.msra.mxu0 %v1844
      %1910 = vmatpush.bf16.msra.mxu0 %v1842
      %1911 = vmatpush.bf16.msra.mxu0 %v1840
      %1912 = vmatmul.bf16.gmra.mxu0 %v926
      %v1913 = vpop.f32.mrf.mxu0
      %v1914 = vadd.f32 0.0, %v1913
      %v1915 = vpop.f32.mrf.mxu0
      %v1916 = vadd.f32 0.0, %v1915
      %1917 = vmatmul.bf16.gmra.mxu0 %v927
      %v1918 = vpop.f32.mrf.mxu0
      %v1919 = vadd.f32 0.0, %v1918
      %v1920 = vpop.f32.mrf.mxu0
      %v1921 = vadd.f32 0.0, %v1920
      %1922 = vmatmul.bf16.gmra.mxu0 %v928
      %v1923 = vpop.f32.mrf.mxu0
      %v1924 = vadd.f32 0.0, %v1923
      %v1925 = vpop.f32.mrf.mxu0
      %v1926 = vadd.f32 0.0, %v1925
      %1927 = vmatmul.bf16.gmra.mxu0 %v929
      %v1928 = vpop.f32.mrf.mxu0
      %v1929 = vadd.f32 0.0, %v1928
      %v1930 = vpop.f32.mrf.mxu0
      %v1931 = vadd.f32 0.0, %v1930
      %1932 = vmatmul.bf16.gmra.mxu0 %v930
      %v1933 = vpop.f32.mrf.mxu0
      %v1934 = vadd.f32 0.0, %v1933
      %v1935 = vpop.f32.mrf.mxu0
      %v1936 = vadd.f32 0.0, %v1935
      %1937 = vmatmul.bf16.gmra.mxu0 %v931
      %v1938 = vpop.f32.mrf.mxu0
      %v1939 = vadd.f32 0.0, %v1938
      %v1940 = vpop.f32.mrf.mxu0
      %v1941 = vadd.f32 0.0, %v1940
      %1942 = vmatmul.bf16.gmra.mxu0 %v932
      %v1943 = vpop.f32.mrf.mxu0
      %v1944 = vadd.f32 0.0, %v1943
      %v1945 = vpop.f32.mrf.mxu0
      %v1946 = vadd.f32 0.0, %v1945
      %1947 = vmatmul.bf16.gmra.mxu0 %v933
      %v1948 = vpop.f32.mrf.mxu0
      %v1949 = vadd.f32 0.0, %v1948
      %v1950 = vpop.f32.mrf.mxu0
      %v1951 = vadd.f32 0.0, %v1950
      %1952 = vdwg.mxu0
      %v1953 = vadd.f32 %v1807, %v1865
      %v1954 = vadd.f32 %v1808, %v1914
      %v1955 = vadd.f32 %v1809, %v1867
      %v1956 = vadd.f32 %v1810, %v1916
      %v1957 = vadd.f32 %v1811, %v1870
      %v1958 = vadd.f32 %v1812, %v1919
      %v1959 = vadd.f32 %v1813, %v1872
      %v1960 = vadd.f32 %v1814, %v1921
      %v1961 = vadd.f32 %v1815, %v1875
      %v1962 = vadd.f32 %v1816, %v1924
      %v1963 = vadd.f32 %v1817, %v1877
      %v1964 = vadd.f32 %v1818, %v1926
      %v1965 = vadd.f32 %v1819, %v1880
      %v1966 = vadd.f32 %v1820, %v1929
      %v1967 = vadd.f32 %v1821, %v1882
      %v1968 = vadd.f32 %v1822, %v1931
      %v1969 = vadd.f32 %v1823, %v1885
      %v1970 = vadd.f32 %v1824, %v1934
      %v1971 = vadd.f32 %v1825, %v1887
      %v1972 = vadd.f32 %v1826, %v1936
      %v1973 = vadd.f32 %v1827, %v1890
      %v1974 = vadd.f32 %v1828, %v1939
      %v1975 = vadd.f32 %v1829, %v1892
      %v1976 = vadd.f32 %v1830, %v1941
      %v1977 = vadd.f32 %v1831, %v1895
      %v1978 = vadd.f32 %v1832, %v1944
      %v1979 = vadd.f32 %v1833, %v1897
      %v1980 = vadd.f32 %v1834, %v1946
      %v1981 = vadd.f32 %v1835, %v1900
      %v1982 = vadd.f32 %v1836, %v1949
      %v1983 = vadd.f32 %v1837, %v1902
      %v1984 = vadd.f32 %v1838, %v1951
      %1985 = vst [vmem:[#allocation3] sm:$0xff] %v1953
      %1986 = vst [vmem:[#allocation3 + $0x8] sm:$0xff] %v1954
      %1987 = vst [vmem:[#allocation3 + $0x10] sm:$0xff] %v1955
      %1988 = vst [vmem:[#allocation3 + $0x18] sm:$0xff] %v1956
      %1989 = vst [vmem:[#allocation3 + $0x20] sm:$0xff] %v1957
      %1990 = vst [vmem:[#allocation3 + $0x28] sm:$0xff] %v1958
      %1991 = vst [vmem:[#allocation3 + $0x30] sm:$0xff] %v1959
      %1992 = vst [vmem:[#allocation3 + $0x38] sm:$0xff] %v1960
      %1993 = vst [vmem:[#allocation3 + $0x40] sm:$0xff] %v1961
      %1994 = vst [vmem:[#allocation3 + $0x48] sm:$0xff] %v1962
      %1995 = vst [vmem:[#allocation3 + $0x50] sm:$0xff] %v1963
      %1996 = vst [vmem:[#allocation3 + $0x58] sm:$0xff] %v1964
      %1997 = vst [vmem:[#allocation3 + $0x60] sm:$0xff] %v1965
      %1998 = vst [vmem:[#allocation3 + $0x68] sm:$0xff] %v1966
      %1999 = vst [vmem:[#allocation3 + $0x70] sm:$0xff] %v1967
      %2000 = vst [vmem:[#allocation3 + $0x78] sm:$0xff] %v1968
      %2001 = vst [vmem:[#allocation3 + $0x80] sm:$0xff] %v1969
      %2002 = vst [vmem:[#allocation3 + $0x88] sm:$0xff] %v1970
      %2003 = vst [vmem:[#allocation3 + $0x90] sm:$0xff] %v1971
      %2004 = vst [vmem:[#allocation3 + $0x98] sm:$0xff] %v1972
      %2005 = vst [vmem:[#allocation3 + $0xa0] sm:$0xff] %v1973
      %2006 = vst [vmem:[#allocation3 + $0xa8] sm:$0xff] %v1974
      %2007 = vst [vmem:[#allocation3 + $0xb0] sm:$0xff] %v1975
      %2008 = vst [vmem:[#allocation3 + $0xb8] sm:$0xff] %v1976
      %2009 = vst [vmem:[#allocation3 + $0xc0] sm:$0xff] %v1977
      %2010 = vst [vmem:[#allocation3 + $0xc8] sm:$0xff] %v1978
      %2011 = vst [vmem:[#allocation3 + $0xd0] sm:$0xff] %v1979
      %2012 = vst [vmem:[#allocation3 + $0xd8] sm:$0xff] %v1980
      %2013 = vst [vmem:[#allocation3 + $0xe0] sm:$0xff] %v1981
      %2014 = vst [vmem:[#allocation3 + $0xe8] sm:$0xff] %v1982
      %2015 = vst [vmem:[#allocation3 + $0xf0] sm:$0xff] %v1983
      %2016 = vst [vmem:[#allocation3 + $0xf8] sm:$0xff] %v1984
      %p2017 = scmp.eq.s32.totalorder %s22, 3
      // Predicated region
      $region69: #{grit_layer.3} parent=63 // pred_check
        %p2018 = pneg %p2017
      $region70: #{grit_layer.3} parent=63 // pred_check_branch
        %2020 = sbr.rel (%p2018) target = $region72
      $region71: #{grit_layer.3} parent=63 // pred_region
        %v2021 = vld [vmem:[#allocation3] sm:$0xff]
        %v2022 = vld [vmem:[#allocation3 + $0x8] sm:$0xff]
        %v2023 = vld [vmem:[#allocation3 + $0x10] sm:$0xff]
        %v2024 = vld [vmem:[#allocation3 + $0x18] sm:$0xff]
        %v2025 = vld [vmem:[#allocation3 + $0x20] sm:$0xff]
        %v2026 = vld [vmem:[#allocation3 + $0x28] sm:$0xff]
        %v2027 = vld [vmem:[#allocation3 + $0x30] sm:$0xff]
        %v2028 = vld [vmem:[#allocation3 + $0x38] sm:$0xff]
        %v2029 = vld [vmem:[#allocation3 + $0x40] sm:$0xff]
        %v2030 = vld [vmem:[#allocation3 + $0x48] sm:$0xff]
        %v2031 = vld [vmem:[#allocation3 + $0x50] sm:$0xff]
        %v2032 = vld [vmem:[#allocation3 + $0x58] sm:$0xff]
        %v2033 = vld [vmem:[#allocation3 + $0x60] sm:$0xff]
        %v2034 = vld [vmem:[#allocation3 + $0x68] sm:$0xff]
        %v2035 = vld [vmem:[#allocation3 + $0x70] sm:$0xff]
        %v2036 = vld [vmem:[#allocation3 + $0x78] sm:$0xff]
        %v2037 = vld [vmem:[#allocation3 + $0x80] sm:$0xff]
        %v2038 = vld [vmem:[#allocation3 + $0x88] sm:$0xff]
        %v2039 = vld [vmem:[#allocation3 + $0x90] sm:$0xff]
        %v2040 = vld [vmem:[#allocation3 + $0x98] sm:$0xff]
        %v2041 = vld [vmem:[#allocation3 + $0xa0] sm:$0xff]
        %v2042 = vld [vmem:[#allocation3 + $0xa8] sm:$0xff]
        %v2043 = vld [vmem:[#allocation3 + $0xb0] sm:$0xff]
        %v2044 = vld [vmem:[#allocation3 + $0xb8] sm:$0xff]
        %v2045 = vld [vmem:[#allocation3 + $0xc0] sm:$0xff]
        %v2046 = vld [vmem:[#allocation3 + $0xc8] sm:$0xff]
        %v2047 = vld [vmem:[#allocation3 + $0xd0] sm:$0xff]
        %v2048 = vld [vmem:[#allocation3 + $0xd8] sm:$0xff]
        %v2049 = vld [vmem:[#allocation3 + $0xe0] sm:$0xff]
        %v2050 = vld [vmem:[#allocation3 + $0xe8] sm:$0xff]
        %v2051 = vld [vmem:[#allocation3 + $0xf0] sm:$0xff]
        %v2052 = vld [vmem:[#allocation3 + $0xf8] sm:$0xff]
        %v2053 = vpack.c.bf16 %v2024, %v2022
        %v2054 = vpack.c.bf16 %v2028, %v2026
        %v2055 = vpack.c.bf16 %v2032, %v2030
        %v2056 = vpack.c.bf16 %v2036, %v2034
        %v2057 = vpack.c.bf16 %v2040, %v2038
        %v2058 = vpack.c.bf16 %v2044, %v2042
        %v2059 = vpack.c.bf16 %v2048, %v2046
        %v2060 = vpack.c.bf16 %v2052, %v2050
        %v2061 = vld [vmem:[%s10] sm:$0xf]
        %v2062 = vld [vmem:[%s10 + $0x4] sm:$0xf]
        %v2063 = vld [vmem:[%s10 + $0x8] sm:$0xf]
        %v2064 = vld [vmem:[%s10 + $0xc] sm:$0xf]
        %v2065 = vld [vmem:[%s10 + $0x10] sm:$0xf]
        %v2066 = vld [vmem:[%s10 + $0x14] sm:$0xf]
        %v2067 = vld [vmem:[%s10 + $0x18] sm:$0xf]
        %v2068 = vld [vmem:[%s10 + $0x1c] sm:$0xf]
        %v2069 = vld [vmem:[%s10 + $0x20] sm:$0xf]
        %v2070 = vld [vmem:[%s10 + $0x24] sm:$0xf]
        %v2071 = vld [vmem:[%s10 + $0x28] sm:$0xf]
        %v2072 = vld [vmem:[%s10 + $0x2c] sm:$0xf]
        %v2073 = vld [vmem:[%s10 + $0x30] sm:$0xf]
        %v2074 = vld [vmem:[%s10 + $0x34] sm:$0xf]
        %v2075 = vld [vmem:[%s10 + $0x38] sm:$0xf]
        %v2076 = vld [vmem:[%s10 + $0x3c] sm:$0xf]
        %v2093 = vunpack.c.l.b16 %v2061
        %v2094 = vunpack.c.l.b16 %v2062
        %v2095 = vunpack.c.l.b16 %v2063
        %v2096 = vunpack.c.l.b16 %v2064
        %v2097 = vunpack.c.l.b16 %v2065
        %v2098 = vunpack.c.l.b16 %v2066
        %v2099 = vunpack.c.l.b16 %v2067
        %v2100 = vunpack.c.l.b16 %v2068
        %v2101 = vunpack.c.l.b16 %v2069
        %v2102 = vunpack.c.l.b16 %v2070
        %v2103 = vunpack.c.l.b16 %v2071
        %v2104 = vunpack.c.l.b16 %v2072
        %v2105 = vunpack.c.l.b16 %v2073
        %v2106 = vunpack.c.l.b16 %v2074
        %v2107 = vunpack.c.l.b16 %v2075
        %v2108 = vunpack.c.l.b16 %v2076
        %v2109 = vpack.c.b16 %v2094, %v2093
        %v2110 = vpack.c.b16 %v2096, %v2095
        %v2111 = vpack.c.b16 %v2098, %v2097
        %v2112 = vpack.c.b16 %v2100, %v2099
        %v2113 = vpack.c.b16 %v2102, %v2101
        %v2114 = vpack.c.b16 %v2104, %v2103
        %v2115 = vpack.c.b16 %v2106, %v2105
        %v2116 = vpack.c.b16 %v2108, %v2107
        %2125 = vmatpush.bf16.msra.mxu0 %v2116
        %2126 = vmatpush.bf16.msra.mxu0 %v2115
        %2127 = vmatpush.bf16.msra.mxu0 %v2114
        %2128 = vmatpush.bf16.msra.mxu0 %v2113
        %2129 = vmatpush.bf16.msra.mxu0 %v2112
        %2130 = vmatpush.bf16.msra.mxu0 %v2111
        %2131 = vmatpush.bf16.msra.mxu0 %v2110
        %2132 = vmatpush.bf16.msra.mxu0 %v2109
        %2133 = vmatmul.bf16.gmra.mxu0 %v2053
        %v2134 = vpop.f32.mrf.mxu0
        %v2135 = vadd.f32 0.0, %v2134
        %v2136 = vpop.f32.mrf.mxu0
        %v2137 = vadd.f32 0.0, %v2136
        %2138 = vmatmul.bf16.gmra.mxu0 %v2054
        %v2139 = vpop.f32.mrf.mxu0
        %v2140 = vadd.f32 0.0, %v2139
        %v2141 = vpop.f32.mrf.mxu0
        %v2142 = vadd.f32 0.0, %v2141
        %2143 = vmatmul.bf16.gmra.mxu0 %v2055
        %v2144 = vpop.f32.mrf.mxu0
        %v2145 = vadd.f32 0.0, %v2144
        %v2146 = vpop.f32.mrf.mxu0
        %v2147 = vadd.f32 0.0, %v2146
        %2148 = vmatmul.bf16.gmra.mxu0 %v2056
        %v2149 = vpop.f32.mrf.mxu0
        %v2150 = vadd.f32 0.0, %v2149
        %v2151 = vpop.f32.mrf.mxu0
        %v2152 = vadd.f32 0.0, %v2151
        %2153 = vmatmul.bf16.gmra.mxu0 %v2057
        %v2154 = vpop.f32.mrf.mxu0
        %v2155 = vadd.f32 0.0, %v2154
        %v2156 = vpop.f32.mrf.mxu0
        %v2157 = vadd.f32 0.0, %v2156
        %2158 = vmatmul.bf16.gmra.mxu0 %v2058
        %v2159 = vpop.f32.mrf.mxu0
        %v2160 = vadd.f32 0.0, %v2159
        %v2161 = vpop.f32.mrf.mxu0
        %v2162 = vadd.f32 0.0, %v2161
        %2163 = vmatmul.bf16.gmra.mxu0 %v2059
        %v2164 = vpop.f32.mrf.mxu0
        %v2165 = vadd.f32 0.0, %v2164
        %v2166 = vpop.f32.mrf.mxu0
        %v2167 = vadd.f32 0.0, %v2166
        %2168 = vmatmul.bf16.gmra.mxu0 %v2060
        %v2169 = vpop.f32.mrf.mxu0
        %v2170 = vadd.f32 0.0, %v2169
        %v2171 = vpop.f32.mrf.mxu0
        %v2172 = vadd.f32 0.0, %v2171
        %2173 = vdwg.mxu0
        %v2174 = vadd.f32 %v2021, %v2135
        %v2175 = vadd.f32 %v2023, %v2137
        %v2176 = vadd.f32 %v2025, %v2140
        %v2177 = vadd.f32 %v2027, %v2142
        %v2178 = vadd.f32 %v2029, %v2145
        %v2179 = vadd.f32 %v2031, %v2147
        %v2180 = vadd.f32 %v2033, %v2150
        %v2181 = vadd.f32 %v2035, %v2152
        %v2182 = vadd.f32 %v2037, %v2155
        %v2183 = vadd.f32 %v2039, %v2157
        %v2184 = vadd.f32 %v2041, %v2160
        %v2185 = vadd.f32 %v2043, %v2162
        %v2186 = vadd.f32 %v2045, %v2165
        %v2187 = vadd.f32 %v2047, %v2167
        %v2188 = vadd.f32 %v2049, %v2170
        %v2189 = vadd.f32 %v2051, %v2172
        %2190 = vst [vmem:[%s11] sm:$0xff] %v2174
        %2191 = vst [vmem:[%s11 + $0x8] sm:$0xff] %v2175
        %2192 = vst [vmem:[%s11 + $0x10] sm:$0xff] %v2176
        %2193 = vst [vmem:[%s11 + $0x18] sm:$0xff] %v2177
        %2194 = vst [vmem:[%s11 + $0x20] sm:$0xff] %v2178
        %2195 = vst [vmem:[%s11 + $0x28] sm:$0xff] %v2179
        %2196 = vst [vmem:[%s11 + $0x30] sm:$0xff] %v2180
        %2197 = vst [vmem:[%s11 + $0x38] sm:$0xff] %v2181
        %2198 = vst [vmem:[%s11 + $0x40] sm:$0xff] %v2182
        %2199 = vst [vmem:[%s11 + $0x48] sm:$0xff] %v2183
        %2200 = vst [vmem:[%s11 + $0x50] sm:$0xff] %v2184
        %2201 = vst [vmem:[%s11 + $0x58] sm:$0xff] %v2185
        %2202 = vst [vmem:[%s11 + $0x60] sm:$0xff] %v2186
        %2203 = vst [vmem:[%s11 + $0x68] sm:$0xff] %v2187
        %2204 = vst [vmem:[%s11 + $0x70] sm:$0xff] %v2188
        %2205 = vst [vmem:[%s11 + $0x78] sm:$0xff] %v2189
      $region72: #{grit_layer.3} parent=63 // pred_fallthru
        _
      // Predicated region
      $region73: #{grit_layer.3} parent=63 // pred_check
        %p2206 = pneg %p291
      $region74: #{grit_layer.3} parent=63 // pred_check_branch
        %2208 = sbr.rel (%p2206) target = $region76
      $region75: #{grit_layer.3} parent=63 // pred_region
        _
      $region76: #{grit_layer.3} parent=63 // pred_fallthru
        _
      // Predicated region
      $region77: #{grit_layer.3} parent=63 // pred_check
        %p2209 = pneg %p291
      $region78: #{grit_layer.3} parent=63 // pred_check_branch
        %2211 = sbr.rel (%p2209) target = $region80
      $region79: #{grit_layer.3} parent=63 // pred_region
        _
      $region80: #{grit_layer.3} parent=63 // pred_fallthru
        _
    $region64: #{grit_layer.3} parent=5 // pred_fallthru
      _
    %p2212 = scmp.le.s32.totalorder 2, %s17
    // Predicated region
    $region81: #{grit_layer.3} parent=5 // pred_check
      %p2213 = pneg %p2212
    $region82: #{grit_layer.3} parent=5 // pred_check_branch
      %2215 = sbr.rel (%p2213) target = $region84
    $region83: #{grit_layer.3} parent=5 // pred_region
      %s2216 = ssub.s32 %s17, 2
    $region84: #{grit_layer.3} parent=5 // pred_fallthru
      _
  $region6: #{grit_layer.3} parent=0 // loop_footer
    %s21 = sadd.s32 1, %s17
  $region7: #{grit_layer.3} parent=0 // loop_footer_branch
    %16 = sbr.rel target = $region3
  $region8: #{grit_layer.3} parent=0 // loop_exit
    _

</llo_original>
